<compile_context>
chip_gen: v7x
topology: tpu7x:2x2x1
jax: 0.10.0
libtpu: 0.0.40
codegen_flags: <defaults>
</compile_context>

<pallas_src>
import functools

import jax
import jax.numpy as jnp
from jax.experimental import pallas as pl
from jax.experimental.pallas import tpu as pltpu


# ----------------------------------------------------------------------------
# Fused Pallas kernel: one grid step == one conv layer on one batch element.
# ----------------------------------------------------------------------------
def _dncnn_fused_kernel(x_ref, w_ref, b_ref, o_ref, buf_ref, *, H, W, C):
    """Grid (N, nb): axis 0 = batch ("parallel"), axis 1 = layer ("arbitrary").

    x_ref  : (1, H, W, C)   f32  channel-padded network input (VMEM-resident
                                 across the layer axis; block idx depends on n only).
    w_ref  : (1, 9*C, C)    cdt  folded conv weights of layer l, rows ordered
                                 (dy, dx, cin) to match HWIO.reshape(9*C, C).
    b_ref  : (1, 1, C)      f32  folded bias (+ BN shift) of layer l.
    o_ref  : (1, H, W, C)   f32  output block; written only at the last layer.
    buf_ref: (H+2, W+2, C)  cdt  zero-padded activation, persists across layers.
    """
    l = pl.program_id(1)
    n_layers = pl.num_programs(1)

    # Layer 0: (re)build the zero-padded activation buffer from the input.
    # Whole-buffer zero is cheap and keeps the halo correct on every core.
    @pl.when(l == 0)
    def _init():
        buf_ref[...] = jnp.zeros_like(buf_ref)
        buf_ref[pl.ds(1, H), pl.ds(1, W), :] = x_ref[0].astype(buf_ref.dtype)

    w = w_ref[0]                                        # (9*C, C)

    # 3x3 conv as 9 accumulated (H*W, C) x (C, C) MXU matmuls, f32 accumulate.
    # All tap reads happen before the interior store below (program order).
    acc = jnp.zeros((H * W, C), jnp.float32)
    for dy in range(3):
        for dx in range(3):
            t = dy * 3 + dx
            tap = buf_ref[pl.ds(dy, H), pl.ds(dx, W), :].reshape(H * W, C)
            acc = acc + jnp.dot(tap, w[t * C:(t + 1) * C, :],
                                preferred_element_type=jnp.float32)
    acc = acc + b_ref[0]                                # bias (+ folded BN), f32

    # head / body layers: ReLU, keep activation in VMEM for the next layer.
    @pl.when(l < n_layers - 1)
    def _hidden():
        y = jnp.maximum(acc, 0.0).reshape(H, W, C)
        buf_ref[pl.ds(1, H), pl.ds(1, W), :] = y.astype(buf_ref.dtype)

    # tail layer: no activation; fuse residual  out = x - n  and store once.
    @pl.when(l == n_layers - 1)
    def _tail():
        n_img = acc.reshape(H, W, C)
        o_ref[0] = (x_ref[0].astype(jnp.float32) - n_img).astype(o_ref.dtype)


def _fused_forward_nhwc(x_nhwc_padded, w_stack, b_stack):
    """x_nhwc_padded: (N,H,W,C) f32; w_stack: (nb,9*C,C); b_stack: (nb,1,C) f32."""
    N, H, W, C = x_nhwc_padded.shape
    nb = w_stack.shape[0]
    kern = functools.partial(_dncnn_fused_kernel, H=H, W=W, C=C)
    return pl.pallas_call(
        kern,
        out_shape=jax.ShapeDtypeStruct((N, H, W, C), jnp.float32),
        grid_spec=pltpu.PrefetchScalarGridSpec(
            num_scalar_prefetch=0,
            grid=(N, nb),
            in_specs=[
                pl.BlockSpec((1, H, W, C), lambda n, l: (n, 0, 0, 0)),   # input
                pl.BlockSpec((1, 9 * C, C), lambda n, l: (l, 0, 0)),     # weights
                pl.BlockSpec((1, 1, C), lambda n, l: (l, 0, 0)),         # bias
            ],
            out_specs=pl.BlockSpec((1, H, W, C), lambda n, l: (n, 0, 0, 0)),
            scratch_shapes=[pltpu.VMEM((H + 2, W + 2, C), w_stack.dtype)],
        ),
        compiler_params=pltpu.CompilerParams(
            dimension_semantics=("parallel", "arbitrary")),
    )(x_nhwc_padded, w_stack, b_stack)


# ----------------------------------------------------------------------------
# Parameter construction (deterministic, synthetic) + BN/bias folding.
# ----------------------------------------------------------------------------
def init_dncnn_params(key, *, in_nc, out_nc, nc, nb, eps=1e-5):
    """Raw params in PyTorch semantics; conv weights stored HWIO, BN eval-mode."""
    params = {"head": None, "body": [], "tail": None}
    keys = jax.random.split(key, nb)

    def make_conv(k, cin, cout):
        kw, kb = jax.random.split(k)
        w_oihw = jax.random.normal(kw, (cout, cin, 3, 3), jnp.float32) * 0.05
        b = jax.random.normal(kb, (cout,), jnp.float32) * 0.01
        return jnp.transpose(w_oihw, (2, 3, 1, 0)), b        # -> (3,3,Cin,Cout)

    # head: Conv + ReLU (no BN)
    w, b = make_conv(keys[0], in_nc, nc)
    params["head"] = (w, b, jnp.ones((nc,), jnp.float32), jnp.zeros((nc,), jnp.float32))

    # body: Conv + BN(eval) + ReLU  (BN folded to per-channel scale/shift)
    for i in range(nb - 2):
        kc, kg, kB, km, kv = jax.random.split(keys[1 + i], 5)
        w, b = make_conv(kc, nc, nc)
        gamma = 1.0 + 0.05 * jax.random.normal(kg, (nc,), jnp.float32)
        beta = 0.05 * jax.random.normal(kB, (nc,), jnp.float32)
        r_mean = 0.05 * jax.random.normal(km, (nc,), jnp.float32)
        r_var = 1.0 + 0.1 * jax.nn.softplus(jax.random.normal(kv, (nc,), jnp.float32))
        scale = gamma / jnp.sqrt(r_var + eps)
        shift = beta - r_mean * scale
        params["body"].append((w, b, scale, shift))

    # tail: plain Conv
    params["tail"] = make_conv(keys[-1], nc, out_nc)
    return params


def fold_and_stack_params(params):
    """Fold BN into conv weights/bias, pad channels to C=nc, stack per layer:
       w_stack (nb, 9*C, C), b_stack (nb, 1, C)."""
    w_h, b_h, s_h, t_h = params["head"]
    C = w_h.shape[-1]                       # = nc
    in_nc = w_h.shape[2]
    w_t, b_t = params["tail"]
    out_nc = w_t.shape[-1]
    assert in_nc <= C and out_nc <= C

    def fold(w, b, scale, shift):           # y = conv(x,w)+b, then *scale+shift
        return w * scale[None, None, None, :], b * scale + shift

    layers_w, layers_b = [], []
    # head: pad Cin (in_nc -> C) with zeros (matches zero-padded input channels)
    wf, bf = fold(w_h, b_h, s_h, t_h)
    layers_w.append(jnp.pad(wf, ((0, 0), (0, 0), (0, C - in_nc), (0, 0))))
    layers_b.append(bf)
    # body: BN folded
    for (w, b, s, t) in params["body"]:
        wf, bf = fold(w, b, s, t)
        layers_w.append(wf)
        layers_b.append(bf)
    # tail: pad Cout (out_nc -> C) with zeros; extra channels stay exactly 0
    layers_w.append(jnp.pad(w_t, ((0, 0), (0, 0), (0, 0), (0, C - out_nc))))
    layers_b.append(jnp.pad(b_t, ((0, C - out_nc),)))

    nb = len(layers_w)
    w_stack = jnp.stack([w.reshape(9 * C, C) for w in layers_w], axis=0)
    b_stack = jnp.stack(layers_b, axis=0).reshape(nb, 1, C)
    return {"w": w_stack, "b": b_stack, "in_nc": in_nc, "out_nc": out_nc}


# ----------------------------------------------------------------------------
# Full forward (PyTorch NCHW in / NCHW out)
# ----------------------------------------------------------------------------
def dncnn_forward(x_nchw, stacked, *, compute_dtype=jnp.float32):
    w_stack, b_stack = stacked["w"], stacked["b"]
    in_nc, out_nc = stacked["in_nc"], stacked["out_nc"]
    C = w_stack.shape[-1]
    x_nhwc = jnp.transpose(x_nchw, (0, 2, 3, 1)).astype(jnp.float32)
    # One-time channel pad of the network input (no per-layer spatial pads).
    x_pad = jnp.pad(x_nhwc, ((0, 0), (0, 0), (0, 0), (0, C - in_nc)))
    out_full = _fused_forward_nhwc(x_pad, w_stack.astype(compute_dtype), b_stack)
    return jnp.transpose(out_full[..., :out_nc], (0, 3, 1, 2))


# ----------------------------------------------------------------------------
# Plain-JAX reference (uses raw, un-folded parameters)
# ----------------------------------------------------------------------------
def _ref_forward(x_nchw, params):
    dn = ("NHWC", "HWIO", "NHWC")

    def conv(x, w, b):
        y = jax.lax.conv_general_dilated(x, w, (1, 1), "SAME", dimension_numbers=dn)
        return y + b[None, None, None, :]

    x0 = jnp.transpose(x_nchw, (0, 2, 3, 1)).astype(jnp.float32)
    w, b, s, t = params["head"]
    h = jnp.maximum(conv(x0, w, b), 0.0)
    for (w, b, s, t) in params["body"]:
        h = jnp.maximum(conv(h, w, b) * s[None, None, None, :]
                        + t[None, None, None, :], 0.0)
    w, b = params["tail"]
    out = x0 - conv(h, w, b)
    return jnp.transpose(out, (0, 3, 1, 2))


if __name__ == "__main__":
    # Small DnCNN-consistent shapes: in_nc == out_nc (residual mode).
    # W is a multiple of 8 so the in-kernel (H,W,C)->(H*W,C) reshape is trivial.
    N, in_nc, H, W = 2, 3, 16, 16
    nc, nb = 16, 5            # nb conv layers total (head + (nb-2) body + tail)

    key = jax.random.PRNGKey(0)
    k_x, k_p = jax.random.split(key)
    x = jax.random.normal(k_x, (N, in_nc, H, W), jnp.float32)
    raw_params = init_dncnn_params(k_p, in_nc=in_nc, out_nc=in_nc, nc=nc, nb=nb)
    stacked = fold_and_stack_params(raw_params)

    # Run the fused Pallas kernel (f32 compute path) and validate vs reference.
    out = dncnn_forward(x, stacked, compute_dtype=jnp.float32)
    jax.block_until_ready(out)
    assert out.shape == x.shape and out.dtype == jnp.float32

    ref = _ref_forward(x, raw_params)
    assert jnp.allclose(out, ref, rtol=1e-4, atol=1e-4), "mismatch vs reference"

    print("KERNEL_OK")
</pallas_src>

<mosaic_0001>
module attributes {stable_mosaic.version = 11 : i64} {
  func.func @_dncnn_fused_kernel(%arg0: i32, %arg1: i32, %arg2: memref<1x16x16x16xf32, #tpu.memory_space<vmem>>, %arg3: memref<1x144x16xf32, #tpu.memory_space<vmem>>, %arg4: memref<1x1x16xf32, #tpu.memory_space<vmem>>, %arg5: memref<1x16x16x16xf32, #tpu.memory_space<vmem>>, %arg6: memref<18x18x16xf32, #tpu.memory_space<vmem>>) attributes {dimension_semantics = [#tpu.dimension_semantics<parallel>, #tpu.dimension_semantics<arbitrary>], iteration_bounds = array<i64: 2, 5>, scalar_prefetch = 0 : i64, scratch_operands = 1 : i64, tpu.core_type = #tpu.core_type<tc>, window_params = [{transform_indices = @transform_0, window_bounds = array<i64: 1, 16, 16, 16>}, {transform_indices = @transform_1, window_bounds = array<i64: 1, 144, 16>}, {transform_indices = @transform_2, window_bounds = array<i64: 1, 1, 16>}, {transform_indices = @transform_3, window_bounds = array<i64: 1, 16, 16, 16>}]} {
    %c0_i32 = arith.constant 0 : i32
    %0 = arith.cmpi eq, %arg1, %c0_i32 : i32
    %1 = arith.extui %0 : i1 to i32
    %c0_i32_0 = arith.constant 0 : i32
    %2 = arith.cmpi ne, %1, %c0_i32_0 : i32
    scf.if %2 {
      %cst_43 = arith.constant 0.000000e+00 : f32
      %61 = vector.broadcast %cst_43 : f32 to vector<18x18x16xf32>
      %c0_44 = arith.constant 0 : index
      %c0_45 = arith.constant 0 : index
      %c0_46 = arith.constant 0 : index
      %62 = vector.load %arg6[%c0_44, %c0_45, %c0_46] : memref<18x18x16xf32, #tpu.memory_space<vmem>>, vector<18x18x16xf32>
      tpu.vector_store %arg6[%c0_44, %c0_45, %c0_46], %61 {strides = array<i32>} : memref<18x18x16xf32, #tpu.memory_space<vmem>>, vector<18x18x16xf32>,
      %c0_47 = arith.constant 0 : index
      %c0_48 = arith.constant 0 : index
      %c0_49 = arith.constant 0 : index
      %c0_50 = arith.constant 0 : index
      %63 = vector.load %arg2[%c0_47, %c0_48, %c0_49, %c0_50] : memref<1x16x16x16xf32, #tpu.memory_space<vmem>>, vector<1x16x16x16xf32>
      %64 = vector.shape_cast %63 : vector<1x16x16x16xf32> to vector<16x16x16xf32>
      %c1_51 = arith.constant 1 : index
      %c1_52 = arith.constant 1 : index
      %c0_53 = arith.constant 0 : index
      %65 = vector.load %arg6[%c1_51, %c1_52, %c0_53] : memref<18x18x16xf32, #tpu.memory_space<vmem>>, vector<16x16x16xf32>
      tpu.vector_store %arg6[%c1_51, %c1_52, %c0_53], %64 {strides = array<i32>} : memref<18x18x16xf32, #tpu.memory_space<vmem>>, vector<16x16x16xf32>,
    } else {
    }
    %c0 = arith.constant 0 : index
    %c0_1 = arith.constant 0 : index
    %c0_2 = arith.constant 0 : index
    %3 = vector.load %arg3[%c0, %c0_1, %c0_2] : memref<1x144x16xf32, #tpu.memory_space<vmem>>, vector<1x144x16xf32>
    %4 = vector.shape_cast %3 : vector<1x144x16xf32> to vector<144x16xf32>
    %cst = arith.constant 0.000000e+00 : f32
    %5 = vector.broadcast %cst : f32 to vector<256x16xf32>
    %c0_3 = arith.constant 0 : index
    %c0_4 = arith.constant 0 : index
    %c0_5 = arith.constant 0 : index
    %6 = vector.load %arg6[%c0_3, %c0_4, %c0_5] : memref<18x18x16xf32, #tpu.memory_space<vmem>>, vector<16x16x16xf32>
    %7 = vector.shape_cast %6 : vector<16x16x16xf32> to vector<256x16xf32>
    %8 = vector.extract_strided_slice %4 {offsets = [0, 0], sizes = [16, 16], strides = [1, 1]} : vector<144x16xf32> to vector<16x16xf32>
    %cst_6 = arith.constant dense<0.000000e+00> : vector<256x16xf32>
    %9 = tpu.matmul %7, %8, %cst_6 {dimension_numbers = #tpu.dot_dimension_numbers<[1], [0], [0], [1], [0, 0, 1, 1], [], []>} : vector<256x16xf32>, vector<16x16xf32>, vector<256x16xf32> -> vector<256x16xf32>
    %10 = arith.addf %5, %9 : vector<256x16xf32>
    %c0_7 = arith.constant 0 : index
    %c1 = arith.constant 1 : index
    %c0_8 = arith.constant 0 : index
    %11 = vector.load %arg6[%c0_7, %c1, %c0_8] : memref<18x18x16xf32, #tpu.memory_space<vmem>>, vector<16x16x16xf32>
    %12 = vector.shape_cast %11 : vector<16x16x16xf32> to vector<256x16xf32>
    %13 = vector.extract_strided_slice %4 {offsets = [16, 0], sizes = [16, 16], strides = [1, 1]} : vector<144x16xf32> to vector<16x16xf32>
    %cst_9 = arith.constant dense<0.000000e+00> : vector<256x16xf32>
    %14 = tpu.matmul %12, %13, %cst_9 {dimension_numbers = #tpu.dot_dimension_numbers<[1], [0], [0], [1], [0, 0, 1, 1], [], []>} : vector<256x16xf32>, vector<16x16xf32>, vector<256x16xf32> -> vector<256x16xf32>
    %15 = arith.addf %10, %14 : vector<256x16xf32>
    %c0_10 = arith.constant 0 : index
    %c2 = arith.constant 2 : index
    %c0_11 = arith.constant 0 : index
    %16 = vector.load %arg6[%c0_10, %c2, %c0_11] : memref<18x18x16xf32, #tpu.memory_space<vmem>>, vector<16x16x16xf32>
    %17 = vector.shape_cast %16 : vector<16x16x16xf32> to vector<256x16xf32>
    %18 = vector.extract_strided_slice %4 {offsets = [32, 0], sizes = [16, 16], strides = [1, 1]} : vector<144x16xf32> to vector<16x16xf32>
    %cst_12 = arith.constant dense<0.000000e+00> : vector<256x16xf32>
    %19 = tpu.matmul %17, %18, %cst_12 {dimension_numbers = #tpu.dot_dimension_numbers<[1], [0], [0], [1], [0, 0, 1, 1], [], []>} : vector<256x16xf32>, vector<16x16xf32>, vector<256x16xf32> -> vector<256x16xf32>
    %20 = arith.addf %15, %19 : vector<256x16xf32>
    %c1_13 = arith.constant 1 : index
    %c0_14 = arith.constant 0 : index
    %c0_15 = arith.constant 0 : index
    %21 = vector.load %arg6[%c1_13, %c0_14, %c0_15] : memref<18x18x16xf32, #tpu.memory_space<vmem>>, vector<16x16x16xf32>
    %22 = vector.shape_cast %21 : vector<16x16x16xf32> to vector<256x16xf32>
    %23 = vector.extract_strided_slice %4 {offsets = [48, 0], sizes = [16, 16], strides = [1, 1]} : vector<144x16xf32> to vector<16x16xf32>
    %cst_16 = arith.constant dense<0.000000e+00> : vector<256x16xf32>
    %24 = tpu.matmul %22, %23, %cst_16 {dimension_numbers = #tpu.dot_dimension_numbers<[1], [0], [0], [1], [0, 0, 1, 1], [], []>} : vector<256x16xf32>, vector<16x16xf32>, vector<256x16xf32> -> vector<256x16xf32>
    %25 = arith.addf %20, %24 : vector<256x16xf32>
    %c1_17 = arith.constant 1 : index
    %c1_18 = arith.constant 1 : index
    %c0_19 = arith.constant 0 : index
    %26 = vector.load %arg6[%c1_17, %c1_18, %c0_19] : memref<18x18x16xf32, #tpu.memory_space<vmem>>, vector<16x16x16xf32>
    %27 = vector.shape_cast %26 : vector<16x16x16xf32> to vector<256x16xf32>
    %28 = vector.extract_strided_slice %4 {offsets = [64, 0], sizes = [16, 16], strides = [1, 1]} : vector<144x16xf32> to vector<16x16xf32>
    %cst_20 = arith.constant dense<0.000000e+00> : vector<256x16xf32>
    %29 = tpu.matmul %27, %28, %cst_20 {dimension_numbers = #tpu.dot_dimension_numbers<[1], [0], [0], [1], [0, 0, 1, 1], [], []>} : vector<256x16xf32>, vector<16x16xf32>, vector<256x16xf32> -> vector<256x16xf32>
    %30 = arith.addf %25, %29 : vector<256x16xf32>
    %c1_21 = arith.constant 1 : index
    %c2_22 = arith.constant 2 : index
    %c0_23 = arith.constant 0 : index
    %31 = vector.load %arg6[%c1_21, %c2_22, %c0_23] : memref<18x18x16xf32, #tpu.memory_space<vmem>>, vector<16x16x16xf32>
    %32 = vector.shape_cast %31 : vector<16x16x16xf32> to vector<256x16xf32>
    %33 = vector.extract_strided_slice %4 {offsets = [80, 0], sizes = [16, 16], strides = [1, 1]} : vector<144x16xf32> to vector<16x16xf32>
    %cst_24 = arith.constant dense<0.000000e+00> : vector<256x16xf32>
    %34 = tpu.matmul %32, %33, %cst_24 {dimension_numbers = #tpu.dot_dimension_numbers<[1], [0], [0], [1], [0, 0, 1, 1], [], []>} : vector<256x16xf32>, vector<16x16xf32>, vector<256x16xf32> -> vector<256x16xf32>
    %35 = arith.addf %30, %34 : vector<256x16xf32>
    %c2_25 = arith.constant 2 : index
    %c0_26 = arith.constant 0 : index
    %c0_27 = arith.constant 0 : index
    %36 = vector.load %arg6[%c2_25, %c0_26, %c0_27] : memref<18x18x16xf32, #tpu.memory_space<vmem>>, vector<16x16x16xf32>
    %37 = vector.shape_cast %36 : vector<16x16x16xf32> to vector<256x16xf32>
    %38 = vector.extract_strided_slice %4 {offsets = [96, 0], sizes = [16, 16], strides = [1, 1]} : vector<144x16xf32> to vector<16x16xf32>
    %cst_28 = arith.constant dense<0.000000e+00> : vector<256x16xf32>
    %39 = tpu.matmul %37, %38, %cst_28 {dimension_numbers = #tpu.dot_dimension_numbers<[1], [0], [0], [1], [0, 0, 1, 1], [], []>} : vector<256x16xf32>, vector<16x16xf32>, vector<256x16xf32> -> vector<256x16xf32>
    %40 = arith.addf %35, %39 : vector<256x16xf32>
    %c2_29 = arith.constant 2 : index
    %c1_30 = arith.constant 1 : index
    %c0_31 = arith.constant 0 : index
    %41 = vector.load %arg6[%c2_29, %c1_30, %c0_31] : memref<18x18x16xf32, #tpu.memory_space<vmem>>, vector<16x16x16xf32>
    %42 = vector.shape_cast %41 : vector<16x16x16xf32> to vector<256x16xf32>
    %43 = vector.extract_strided_slice %4 {offsets = [112, 0], sizes = [16, 16], strides = [1, 1]} : vector<144x16xf32> to vector<16x16xf32>
    %cst_32 = arith.constant dense<0.000000e+00> : vector<256x16xf32>
    %44 = tpu.matmul %42, %43, %cst_32 {dimension_numbers = #tpu.dot_dimension_numbers<[1], [0], [0], [1], [0, 0, 1, 1], [], []>} : vector<256x16xf32>, vector<16x16xf32>, vector<256x16xf32> -> vector<256x16xf32>
    %45 = arith.addf %40, %44 : vector<256x16xf32>
    %c2_33 = arith.constant 2 : index
    %c2_34 = arith.constant 2 : index
    %c0_35 = arith.constant 0 : index
    %46 = vector.load %arg6[%c2_33, %c2_34, %c0_35] : memref<18x18x16xf32, #tpu.memory_space<vmem>>, vector<16x16x16xf32>
    %47 = vector.shape_cast %46 : vector<16x16x16xf32> to vector<256x16xf32>
    %48 = vector.extract_strided_slice %4 {offsets = [128, 0], sizes = [16, 16], strides = [1, 1]} : vector<144x16xf32> to vector<16x16xf32>
    %cst_36 = arith.constant dense<0.000000e+00> : vector<256x16xf32>
    %49 = tpu.matmul %47, %48, %cst_36 {dimension_numbers = #tpu.dot_dimension_numbers<[1], [0], [0], [1], [0, 0, 1, 1], [], []>} : vector<256x16xf32>, vector<16x16xf32>, vector<256x16xf32> -> vector<256x16xf32>
    %50 = arith.addf %45, %49 : vector<256x16xf32>
    %c0_37 = arith.constant 0 : index
    %c0_38 = arith.constant 0 : index
    %c0_39 = arith.constant 0 : index
    %51 = vector.load %arg4[%c0_37, %c0_38, %c0_39] : memref<1x1x16xf32, #tpu.memory_space<vmem>>, vector<1x1x16xf32>
    %52 = vector.shape_cast %51 : vector<1x1x16xf32> to vector<1x16xf32>
    %53 = vector.broadcast %52 : vector<1x16xf32> to vector<256x16xf32>
    %54 = arith.addf %50, %53 : vector<256x16xf32>
    %c4_i32 = arith.constant 4 : i32
    %55 = arith.cmpi slt, %arg1, %c4_i32 : i32
    %56 = arith.extui %55 : i1 to i32
    %c0_i32_40 = arith.constant 0 : i32
    %57 = arith.cmpi ne, %56, %c0_i32_40 : i32
    scf.if %57 {
      %cst_43 = arith.constant 0.000000e+00 : f32
      %61 = vector.broadcast %cst_43 : f32 to vector<256x16xf32>
      %62 = arith.maximumf %54, %61 : vector<256x16xf32>
      %63 = vector.shape_cast %62 : vector<256x16xf32> to vector<16x16x16xf32>
      %c1_44 = arith.constant 1 : index
      %c1_45 = arith.constant 1 : index
      %c0_46 = arith.constant 0 : index
      %64 = vector.load %arg6[%c1_44, %c1_45, %c0_46] : memref<18x18x16xf32, #tpu.memory_space<vmem>>, vector<16x16x16xf32>
      tpu.vector_store %arg6[%c1_44, %c1_45, %c0_46], %63 {strides = array<i32>} : memref<18x18x16xf32, #tpu.memory_space<vmem>>, vector<16x16x16xf32>,
    } else {
    }
    %c4_i32_41 = arith.constant 4 : i32
    %58 = arith.cmpi eq, %arg1, %c4_i32_41 : i32
    %59 = arith.extui %58 : i1 to i32
    %c0_i32_42 = arith.constant 0 : i32
    %60 = arith.cmpi ne, %59, %c0_i32_42 : i32
    scf.if %60 {
      %61 = vector.shape_cast %54 : vector<256x16xf32> to vector<16x16x16xf32>
      %c0_43 = arith.constant 0 : index
      %c0_44 = arith.constant 0 : index
      %c0_45 = arith.constant 0 : index
      %c0_46 = arith.constant 0 : index
      %62 = vector.load %arg2[%c0_43, %c0_44, %c0_45, %c0_46] : memref<1x16x16x16xf32, #tpu.memory_space<vmem>>, vector<1x16x16x16xf32>
      %63 = vector.shape_cast %62 : vector<1x16x16x16xf32> to vector<16x16x16xf32>
      %64 = arith.subf %63, %61 : vector<16x16x16xf32>
      %c0_47 = arith.constant 0 : index
      %c0_48 = arith.constant 0 : index
      %c0_49 = arith.constant 0 : index
      %c0_50 = arith.constant 0 : index
      %65 = vector.load %arg5[%c0_47, %c0_48, %c0_49, %c0_50] : memref<1x16x16x16xf32, #tpu.memory_space<vmem>>, vector<1x16x16x16xf32>
      %66 = vector.shape_cast %65 : vector<1x16x16x16xf32> to vector<16x16x16xf32>
      %67 = vector.shape_cast %64 : vector<16x16x16xf32> to vector<1x16x16x16xf32>
      tpu.vector_store %arg5[%c0_47, %c0_48, %c0_49, %c0_50], %67 {strides = array<i32>} : memref<1x16x16x16xf32, #tpu.memory_space<vmem>>, vector<1x16x16x16xf32>,
    } else {
    }
    return
  }
  func.func @transform_0(%arg0: i32, %arg1: i32) -> (i32, i32, i32, i32) {
    %c0_i32 = arith.constant 0 : i32
    %c0_i32_0 = arith.constant 0 : i32
    %c0_i32_1 = arith.constant 0 : i32
    %c0_i32_2 = arith.constant 0 : i32
    return %arg0, %c0_i32, %c0_i32_0, %c0_i32_1 : i32, i32, i32, i32
  }
  func.func @transform_1(%arg0: i32, %arg1: i32) -> (i32, i32, i32) {
    %c0_i32 = arith.constant 0 : i32
    %c0_i32_0 = arith.constant 0 : i32
    %c0_i32_1 = arith.constant 0 : i32
    return %arg1, %c0_i32, %c0_i32_0 : i32, i32, i32
  }
  func.func @transform_2(%arg0: i32, %arg1: i32) -> (i32, i32, i32) {
    %c0_i32 = arith.constant 0 : i32
    %c0_i32_0 = arith.constant 0 : i32
    %c0_i32_1 = arith.constant 0 : i32
    return %arg1, %c0_i32, %c0_i32_0 : i32, i32, i32
  }
  func.func @transform_3(%arg0: i32, %arg1: i32) -> (i32, i32, i32, i32) {
    %c0_i32 = arith.constant 0 : i32
    %c0_i32_0 = arith.constant 0 : i32
    %c0_i32_1 = arith.constant 0 : i32
    %c0_i32_2 = arith.constant 0 : i32
    return %arg0, %c0_i32, %c0_i32_0, %c0_i32_1 : i32, i32, i32, i32
  }
}

</mosaic_0001>

<llo_original>
// kernel: tpu_custom_call.1
$region0: #{tpu_custom_call.1}
  #allocation0 [shape = 'u32[]', space=smem, size = 0x4, offset = 0x4, fixed_abs, tag = 'smem constant byte address 0x4 - core index']
  #allocation1 [shape = 'u32[144,128]{1,0:T(1,128)}', space=vmem, size = 0x12000, scoped, tag = 'internal scratch']
  #allocation2 [shape = 'f32[18,18,16]{2,1,0:T(8,128)}', space=vmem, size = 0x36000, scoped, tag = 'scratch operand']
  %s0 = inlined_call_operand.vmem [shape: f32[2,16,16,16], index: 0, kind: input, shape index: {}]
  %s1 = inlined_call_operand.vmem [shape: f32[5,144,16], index: 1, kind: input, shape index: {}]
  %s2 = inlined_call_operand.vmem [shape: f32[5,1,16], index: 2, kind: input, shape index: {}]
  %s3 = inlined_call_operand.hbm [shape: f32[2,16,16,16], index: 3, kind: output, shape index: {}]
  %s4 = sld [smem:[#allocation0]]
  $region57: #{tpu_custom_call.1} parent=0
    _
  %s6 = ssub.s32 1, %s4
  %s7 = scalar_select 0, %s6, %s4
  $region1: #{tpu_custom_call.1} parent=0
    #allocation3 [shape = 'u8[262144]{0}', space=vmem, size = 0x40000, scoped, tag = 'output window, operand 0']
    #allocation4 [shape = 's32[2]{0}', space=sflag, size = 0x8, scoped, tag = 'scoped memory for tpu_custom_call.1']
    %8 = vsyncpa [#allocation4], 0
    %s9 = scalar_lea.sflag [#allocation4], 1
    %10 = vsyncpa %s9, 0
    loop: start=0, step=1, limit=12
    $region2: #{tpu_custom_call.1} parent=1 // loop_pre_header
      _
    $region3: #{tpu_custom_call.1} parent=1 // loop_header
      %s12 = sphi 0, %s16
      %p13 = scmp.ge.s32.totalorder %s12, 12
      %s19 = sphi 0, %s31
      %s20 = sphi 0, %s27
      %s21 = sphi 0, %s19
      %s22 = sphi 0, %s20
      %s23 = sphi 0, %s21
      %s24 = sphi 0, %s22
      %s34 = sphi 0, %s36
      %s37 = sphi 0, %s34
      %s38 = sphi 0, %s37
      %s54 = sphi 0, %s38
      %s60 = sphi 0, %s62
      %s63 = sphi 0, %s60
      %s64 = sphi 0, %s63
      %s80 = sphi 0, %s64
      %s86 = sphi 0, %s88
      %s89 = sphi 0, %s86
      %s90 = sphi 0, %s89
      %s106 = sphi 0, %s90
      %s112 = sphi 0, %s114
      %s115 = sphi 0, %s112
      %s116 = sphi 0, %s115
      %s132 = sphi 0, %s116
    $region4: #{tpu_custom_call.1} parent=1 // loop_header_branch
      %15 = sbr.rel (%p13) target = $region8
    $region5: #{tpu_custom_call.1} parent=1 // loop_body
      %s17 = ssub.s32 %s12, 1
      %s18 = ssub.s32 %s12, 2
      %s25 = sadd.s32 1, %s20
      %p26 = scmp.ge.s32.totalorder %s25, 5
      %s27 = scalar_select %p26, 0, %s25
      %s28 = sadd.s32 1, %s19
      %s29 = scalar_select %p26, %s28, %s19
      %p30 = scmp.ge.s32.totalorder %s29, 2
      %s31 = scalar_select %p30, 0, %s29
      %s32 = ssub.s32 %s19, %s31
      %p33 = scmp.eq.s32.totalorder %s32, 0
      %s35 = sadd.s32 %s34, 1
      %s36 = scalar_select %p33, %s34, %s35
      %p39 = pneg %p33
      %p40 = scmp.eq.s32.totalorder %s12, 9
      %p41 = por %p39, %p40
      %p42 = scmp.ne.s32.totalorder %s34, %s37
      %p43 = scmp.eq.s32.totalorder %s12, 0
      %p44 = por %p42, %p43
      %p45 = scmp.ne.s32.totalorder %s34, %s37
      %p46 = scmp.eq.s32.totalorder %s17, 9
      %p47 = por %p45, %p46
      %p48 = scmp.ne.s32.totalorder %s37, %s38
      %p49 = scmp.eq.s32.totalorder %s17, 0
      %p50 = por %p48, %p49
      %p51 = scmp.ne.s32.totalorder %s37, %s38
      %p52 = scmp.eq.s32.totalorder %s18, 9
      %p53 = por %p51, %p52
      %p55 = scmp.ne.s32.totalorder %s38, %s54
      %p56 = scmp.eq.s32.totalorder %s18, 0
      %p57 = por %p55, %p56
      %s58 = ssub.s32 %s20, %s27
      %p59 = scmp.eq.s32.totalorder %s58, 0
      %s61 = sadd.s32 %s60, 1
      %s62 = scalar_select %p59, %s60, %s61
      %p65 = pneg %p59
      %p66 = scmp.eq.s32.totalorder %s12, 9
      %p67 = por %p65, %p66
      %p68 = scmp.ne.s32.totalorder %s60, %s63
      %p69 = scmp.eq.s32.totalorder %s12, 0
      %p70 = por %p68, %p69
      %p71 = scmp.ne.s32.totalorder %s60, %s63
      %p72 = scmp.eq.s32.totalorder %s17, 9
      %p73 = por %p71, %p72
      %p74 = scmp.ne.s32.totalorder %s63, %s64
      %p75 = scmp.eq.s32.totalorder %s17, 0
      %p76 = por %p74, %p75
      %p77 = scmp.ne.s32.totalorder %s63, %s64
      %p78 = scmp.eq.s32.totalorder %s18, 9
      %p79 = por %p77, %p78
      %p81 = scmp.ne.s32.totalorder %s64, %s80
      %p82 = scmp.eq.s32.totalorder %s18, 0
      %p83 = por %p81, %p82
      %s84 = ssub.s32 %s20, %s27
      %p85 = scmp.eq.s32.totalorder %s84, 0
      %s87 = sadd.s32 %s86, 1
      %s88 = scalar_select %p85, %s86, %s87
      %p91 = pneg %p85
      %p92 = scmp.eq.s32.totalorder %s12, 9
      %p93 = por %p91, %p92
      %p94 = scmp.ne.s32.totalorder %s86, %s89
      %p95 = scmp.eq.s32.totalorder %s12, 0
      %p96 = por %p94, %p95
      %p97 = scmp.ne.s32.totalorder %s86, %s89
      %p98 = scmp.eq.s32.totalorder %s17, 9
      %p99 = por %p97, %p98
      %p100 = scmp.ne.s32.totalorder %s89, %s90
      %p101 = scmp.eq.s32.totalorder %s17, 0
      %p102 = por %p100, %p101
      %p103 = scmp.ne.s32.totalorder %s89, %s90
      %p104 = scmp.eq.s32.totalorder %s18, 9
      %p105 = por %p103, %p104
      %p107 = scmp.ne.s32.totalorder %s90, %s106
      %p108 = scmp.eq.s32.totalorder %s18, 0
      %p109 = por %p107, %p108
      %s110 = ssub.s32 %s19, %s31
      %p111 = scmp.eq.s32.totalorder %s110, 0
      %s113 = sadd.s32 %s112, 1
      %s114 = scalar_select %p111, %s112, %s113
      %p117 = pneg %p111
      %p118 = scmp.eq.s32.totalorder %s12, 9
      %p119 = por %p117, %p118
      %p120 = scmp.ne.s32.totalorder %s112, %s115
      %p121 = scmp.eq.s32.totalorder %s12, 0
      %p122 = por %p120, %p121
      %p123 = scmp.ne.s32.totalorder %s112, %s115
      %p124 = scmp.eq.s32.totalorder %s17, 9
      %p125 = por %p123, %p124
      %p126 = scmp.ne.s32.totalorder %s115, %s116
      %p127 = scmp.eq.s32.totalorder %s17, 0
      %p128 = por %p126, %p127
      %p129 = scmp.ne.s32.totalorder %s115, %s116
      %p130 = scmp.eq.s32.totalorder %s18, 9
      %p131 = por %p129, %p130
      %p133 = scmp.ne.s32.totalorder %s116, %s132
      %p134 = scmp.eq.s32.totalorder %s18, 0
      %p135 = por %p133, %p134
      %p136 = scmp.le.s32.totalorder 1, %s12
      %p137 = scmp.lt.s32.totalorder %s12, 11
      %p138 = pnand %p136, %p137
      %p139 = pneg %p138
      // Predicated region
      $region9: #{tpu_custom_call.1} parent=5 // pred_check
        _
      $region10: #{tpu_custom_call.1} parent=5 // pred_check_branch
        %141 = sbr.rel (%p138) target = $region12
      $region11: #{tpu_custom_call.1} parent=5 // pred_region
        %s142 = ssub.s32 %s12, 1
      $region12: #{tpu_custom_call.1} parent=5 // pred_fallthru
        _
      %p143 = scmp.lt.s32.totalorder %s12, 10
      // Predicated region
      $region13: #{tpu_custom_call.1} parent=5 // pred_check
        %p144 = pneg %p143
      $region14: #{tpu_custom_call.1} parent=5 // pred_check_branch
        %146 = sbr.rel (%p144) target = $region16
      $region15: #{tpu_custom_call.1} parent=5 // pred_region
        // Predicated region
        $region17: #{tpu_custom_call.1} parent=15 // pred_check
          %p147 = pneg %p44
        $region18: #{tpu_custom_call.1} parent=15 // pred_check_branch
          %149 = sbr.rel (%p147) target = $region20
        $region19: #{tpu_custom_call.1} parent=15 // pred_region
          %p150 = scmp.lt.s32.totalorder %s19, 1
          %s151 = scalar_select %p150, %s19, 1
          %s152 = smul.addr %s151, 32
          %s153 = smul.addr %s152, 8
          %s154 = scalar_lea.vmem %s0, %s153
        $region20: #{tpu_custom_call.1} parent=15 // pred_fallthru
          _
        // Predicated region
        $region21: #{tpu_custom_call.1} parent=15 // pred_check
          %p155 = pneg %p70
        $region22: #{tpu_custom_call.1} parent=15 // pred_check_branch
          %157 = sbr.rel (%p155) target = $region24
        $region23: #{tpu_custom_call.1} parent=15 // pred_region
          %p158 = scmp.lt.s32.totalorder %s20, 4
          %s159 = scalar_select %p158, %s20, 4
          %s160 = smul.addr %s159, 18
          %s161 = smul.addr %s160, 8
          %s162 = scalar_lea.vmem %s1, %s161
        $region24: #{tpu_custom_call.1} parent=15 // pred_fallthru
          _
        // Predicated region
        $region25: #{tpu_custom_call.1} parent=15 // pred_check
          %p163 = pneg %p96
        $region26: #{tpu_custom_call.1} parent=15 // pred_check_branch
          %165 = sbr.rel (%p163) target = $region28
        $region27: #{tpu_custom_call.1} parent=15 // pred_region
          %p166 = scmp.lt.s32.totalorder %s20, 4
          %s167 = scalar_select %p166, %s20, 4
          %s168 = scalar_lea.vmem %s2, %s167
        $region28: #{tpu_custom_call.1} parent=15 // pred_fallthru
          _
      $region16: #{tpu_custom_call.1} parent=5 // pred_fallthru
        _
      %p169 = scmp.le.s32.totalorder 1, %s12
      %p170 = scmp.lt.s32.totalorder %s12, 11
      %p171 = pnand %p169, %p170
      %p172 = pneg %p171
      // Predicated region
      $region29: #{tpu_custom_call.1} parent=5 // pred_check
        _
      $region30: #{tpu_custom_call.1} parent=5 // pred_check_branch
        %174 = sbr.rel (%p171) target = $region32
      $region31: #{tpu_custom_call.1} parent=5 // pred_region
        %s175 = ssub.s32 %s12, 1
        %p176 = scmp.lt.s32.totalorder %s21, 1
        %s177 = scalar_select %p176, %s21, 1
        %s178 = smul.addr %s177, 32
        %s179 = smul.addr %s178, 8
        %s180 = scalar_lea.vmem %s0, %s179
        %p181 = pneg %p50
        %p182 = pneg %p47
        %p183 = scmp.lt.s32.totalorder %s22, 4
        %s184 = scalar_select %p183, %s22, 4
        %s185 = smul.addr %s184, 18
        %s186 = smul.addr %s185, 8
        %s187 = scalar_lea.vmem %s1, %s186
        %p188 = pneg %p76
        %p189 = pneg %p73
        %p190 = scmp.lt.s32.totalorder %s22, 4
        %s191 = scalar_select %p190, %s22, 4
        %s192 = scalar_lea.vmem %s2, %s191
        %p193 = pneg %p102
        %p194 = pneg %p99
        %p195 = pneg %p128
        %p196 = pneg %p125
        %s197 = sand.u32 %s115, 1
        %s198 = scalar_lea.sflag [#allocation4], %s197
        %s199 = sand.u32 %s115, 1
        %s200 = smul.addr %s199, 256
        %s201 = scalar_lea.vmem [#allocation3], %s200
        %p202 = scmp.lt.s32.totalorder %s21, 1
        %s203 = scalar_select %p202, %s21, 1
        %s204 = smul.addr %s203, 32
        %s205 = smul.addr %s204, 8
        %s206 = scalar_lea.vmem %s0, %s205
        %p207 = scmp.lt.s32.totalorder %s22, 4
        %s208 = scalar_select %p207, %s22, 4
        %s209 = smul.addr %s208, 18
        %s210 = smul.addr %s209, 8
        %s211 = scalar_lea.vmem %s1, %s210
        %p212 = scmp.lt.s32.totalorder %s22, 4
        %s213 = scalar_select %p212, %s22, 4
        %s214 = scalar_lea.vmem %s2, %s213
        %p215 = scmp.eq.s32.totalorder %s22, 0
        // Predicated region
        $region33: #{tpu_custom_call.1} parent=31 // pred_check
          %p216 = pneg %p215
        $region34: #{tpu_custom_call.1} parent=31 // pred_check_branch
          %218 = sbr.rel (%p216) target = $region36
        $region35: #{tpu_custom_call.1} parent=31 // pred_region
          %vm219 = vcmask 130048
          %220 = vst.msk [vmem:[#allocation2] sm:$0xff] %vm219, 0.0
          %221 = vst.msk [vmem:[#allocation2 + $0x8] sm:$0xff] %vm219, 0.0
          %vm222 = vcmask 123904
          %223 = vst.msk [vmem:[#allocation2 + $0x10] sm:$0x3] %vm222, 0.0
          %224 = vst.msk [vmem:[#allocation2 + $0x18] sm:$0xff] %vm219, 0.0
          %225 = vst.msk [vmem:[#allocation2 + $0x20] sm:$0xff] %vm219, 0.0
          %226 = vst.msk [vmem:[#allocation2 + $0x28] sm:$0x3] %vm222, 0.0
          %227 = vst.msk [vmem:[#allocation2 + $0x30] sm:$0xff] %vm219, 0.0
          %228 = vst.msk [vmem:[#allocation2 + $0x38] sm:$0xff] %vm219, 0.0
          %229 = vst.msk [vmem:[#allocation2 + $0x40] sm:$0x3] %vm222, 0.0
          %230 = vst.msk [vmem:[#allocation2 + $0x48] sm:$0xff] %vm219, 0.0
          %231 = vst.msk [vmem:[#allocation2 + $0x50] sm:$0xff] %vm219, 0.0
          %232 = vst.msk [vmem:[#allocation2 + $0x58] sm:$0x3] %vm222, 0.0
          %233 = vst.msk [vmem:[#allocation2 + $0x60] sm:$0xff] %vm219, 0.0
          %234 = vst.msk [vmem:[#allocation2 + $0x68] sm:$0xff] %vm219, 0.0
          %235 = vst.msk [vmem:[#allocation2 + $0x70] sm:$0x3] %vm222, 0.0
          %236 = vst.msk [vmem:[#allocation2 + $0x78] sm:$0xff] %vm219, 0.0
          %237 = vst.msk [vmem:[#allocation2 + $0x80] sm:$0xff] %vm219, 0.0
          %238 = vst.msk [vmem:[#allocation2 + $0x88] sm:$0x3] %vm222, 0.0
          %239 = vst.msk [vmem:[#allocation2 + $0x90] sm:$0xff] %vm219, 0.0
          %240 = vst.msk [vmem:[#allocation2 + $0x98] sm:$0xff] %vm219, 0.0
          %241 = vst.msk [vmem:[#allocation2 + $0xa0] sm:$0x3] %vm222, 0.0
          %242 = vst.msk [vmem:[#allocation2 + $0xa8] sm:$0xff] %vm219, 0.0
          %243 = vst.msk [vmem:[#allocation2 + $0xb0] sm:$0xff] %vm219, 0.0
          %244 = vst.msk [vmem:[#allocation2 + $0xb8] sm:$0x3] %vm222, 0.0
          %245 = vst.msk [vmem:[#allocation2 + $0xc0] sm:$0xff] %vm219, 0.0
          %246 = vst.msk [vmem:[#allocation2 + $0xc8] sm:$0xff] %vm219, 0.0
          %247 = vst.msk [vmem:[#allocation2 + $0xd0] sm:$0x3] %vm222, 0.0
          %248 = vst.msk [vmem:[#allocation2 + $0xd8] sm:$0xff] %vm219, 0.0
          %249 = vst.msk [vmem:[#allocation2 + $0xe0] sm:$0xff] %vm219, 0.0
          %250 = vst.msk [vmem:[#allocation2 + $0xe8] sm:$0x3] %vm222, 0.0
          %251 = vst.msk [vmem:[#allocation2 + $0xf0] sm:$0xff] %vm219, 0.0
          %252 = vst.msk [vmem:[#allocation2 + $0xf8] sm:$0xff] %vm219, 0.0
          %253 = vst.msk [vmem:[#allocation2 + $0x100] sm:$0x3] %vm222, 0.0
          %254 = vst.msk [vmem:[#allocation2 + $0x108] sm:$0xff] %vm219, 0.0
          %255 = vst.msk [vmem:[#allocation2 + $0x110] sm:$0xff] %vm219, 0.0
          %256 = vst.msk [vmem:[#allocation2 + $0x118] sm:$0x3] %vm222, 0.0
          %257 = vst.msk [vmem:[#allocation2 + $0x120] sm:$0xff] %vm219, 0.0
          %258 = vst.msk [vmem:[#allocation2 + $0x128] sm:$0xff] %vm219, 0.0
          %259 = vst.msk [vmem:[#allocation2 + $0x130] sm:$0x3] %vm222, 0.0
          %260 = vst.msk [vmem:[#allocation2 + $0x138] sm:$0xff] %vm219, 0.0
          %261 = vst.msk [vmem:[#allocation2 + $0x140] sm:$0xff] %vm219, 0.0
          %262 = vst.msk [vmem:[#allocation2 + $0x148] sm:$0x3] %vm222, 0.0
          %263 = vst.msk [vmem:[#allocation2 + $0x150] sm:$0xff] %vm219, 0.0
          %264 = vst.msk [vmem:[#allocation2 + $0x158] sm:$0xff] %vm219, 0.0
          %265 = vst.msk [vmem:[#allocation2 + $0x160] sm:$0x3] %vm222, 0.0
          %266 = vst.msk [vmem:[#allocation2 + $0x168] sm:$0xff] %vm219, 0.0
          %267 = vst.msk [vmem:[#allocation2 + $0x170] sm:$0xff] %vm219, 0.0
          %268 = vst.msk [vmem:[#allocation2 + $0x178] sm:$0x3] %vm222, 0.0
          %269 = vst.msk [vmem:[#allocation2 + $0x180] sm:$0xff] %vm219, 0.0
          %270 = vst.msk [vmem:[#allocation2 + $0x188] sm:$0xff] %vm219, 0.0
          %271 = vst.msk [vmem:[#allocation2 + $0x190] sm:$0x3] %vm222, 0.0
          %272 = vst.msk [vmem:[#allocation2 + $0x198] sm:$0xff] %vm219, 0.0
          %273 = vst.msk [vmem:[#allocation2 + $0x1a0] sm:$0xff] %vm219, 0.0
          %274 = vst.msk [vmem:[#allocation2 + $0x1a8] sm:$0x3] %vm222, 0.0
          %v275 = vld [vmem:[%s206] sm:$0xff]
          %v276 = vld [vmem:[%s206 + $0x8] sm:$0xff]
          %v277 = vld [vmem:[%s206 + $0x10] sm:$0xff]
          %v278 = vld [vmem:[%s206 + $0x18] sm:$0xff]
          %v279 = vld [vmem:[%s206 + $0x20] sm:$0xff]
          %v280 = vld [vmem:[%s206 + $0x28] sm:$0xff]
          %v281 = vld [vmem:[%s206 + $0x30] sm:$0xff]
          %v282 = vld [vmem:[%s206 + $0x38] sm:$0xff]
          %v283 = vld [vmem:[%s206 + $0x40] sm:$0xff]
          %v284 = vld [vmem:[%s206 + $0x48] sm:$0xff]
          %v285 = vld [vmem:[%s206 + $0x50] sm:$0xff]
          %v286 = vld [vmem:[%s206 + $0x58] sm:$0xff]
          %v287 = vld [vmem:[%s206 + $0x60] sm:$0xff]
          %v288 = vld [vmem:[%s206 + $0x68] sm:$0xff]
          %v289 = vld [vmem:[%s206 + $0x70] sm:$0xff]
          %v290 = vld [vmem:[%s206 + $0x78] sm:$0xff]
          %v291 = vld [vmem:[%s206 + $0x80] sm:$0xff]
          %v292 = vld [vmem:[%s206 + $0x88] sm:$0xff]
          %v293 = vld [vmem:[%s206 + $0x90] sm:$0xff]
          %v294 = vld [vmem:[%s206 + $0x98] sm:$0xff]
          %v295 = vld [vmem:[%s206 + $0xa0] sm:$0xff]
          %v296 = vld [vmem:[%s206 + $0xa8] sm:$0xff]
          %v297 = vld [vmem:[%s206 + $0xb0] sm:$0xff]
          %v298 = vld [vmem:[%s206 + $0xb8] sm:$0xff]
          %v299 = vld [vmem:[%s206 + $0xc0] sm:$0xff]
          %v300 = vld [vmem:[%s206 + $0xc8] sm:$0xff]
          %v301 = vld [vmem:[%s206 + $0xd0] sm:$0xff]
          %v302 = vld [vmem:[%s206 + $0xd8] sm:$0xff]
          %v303 = vld [vmem:[%s206 + $0xe0] sm:$0xff]
          %v304 = vld [vmem:[%s206 + $0xe8] sm:$0xff]
          %v305 = vld [vmem:[%s206 + $0xf0] sm:$0xff]
          %v306 = vld [vmem:[%s206 + $0xf8] sm:$0xff]
          %s307 = scalar_lea.vmem [#allocation2], 24
          %308 = vst.msk [vmem:[%s307 + $0x1] sm:$0xff] %vm219, %v275
          %309 = vst.msk [vmem:[%s307 + $0x9] sm:$0xff] %vm219, %v276
          %310 = vst.msk [vmem:[%s307 + $0x19] sm:$0xff] %vm219, %v277
          %311 = vst.msk [vmem:[%s307 + $0x21] sm:$0xff] %vm219, %v278
          %312 = vst.msk [vmem:[%s307 + $0x31] sm:$0xff] %vm219, %v279
          %313 = vst.msk [vmem:[%s307 + $0x39] sm:$0xff] %vm219, %v280
          %314 = vst.msk [vmem:[%s307 + $0x49] sm:$0xff] %vm219, %v281
          %315 = vst.msk [vmem:[%s307 + $0x51] sm:$0xff] %vm219, %v282
          %316 = vst.msk [vmem:[%s307 + $0x61] sm:$0xff] %vm219, %v283
          %317 = vst.msk [vmem:[%s307 + $0x69] sm:$0xff] %vm219, %v284
          %318 = vst.msk [vmem:[%s307 + $0x79] sm:$0xff] %vm219, %v285
          %319 = vst.msk [vmem:[%s307 + $0x81] sm:$0xff] %vm219, %v286
          %320 = vst.msk [vmem:[%s307 + $0x91] sm:$0xff] %vm219, %v287
          %321 = vst.msk [vmem:[%s307 + $0x99] sm:$0xff] %vm219, %v288
          %322 = vst.msk [vmem:[%s307 + $0xa9] sm:$0xff] %vm219, %v289
          %323 = vst.msk [vmem:[%s307 + $0xb1] sm:$0xff] %vm219, %v290
          %324 = vst.msk [vmem:[%s307 + $0xc1] sm:$0xff] %vm219, %v291
          %325 = vst.msk [vmem:[%s307 + $0xc9] sm:$0xff] %vm219, %v292
          %326 = vst.msk [vmem:[%s307 + $0xd9] sm:$0xff] %vm219, %v293
          %327 = vst.msk [vmem:[%s307 + $0xe1] sm:$0xff] %vm219, %v294
          %328 = vst.msk [vmem:[%s307 + $0xf1] sm:$0xff] %vm219, %v295
          %329 = vst.msk [vmem:[%s307 + $0xf9] sm:$0xff] %vm219, %v296
          %330 = vst.msk [vmem:[%s307 + $0x109] sm:$0xff] %vm219, %v297
          %331 = vst.msk [vmem:[%s307 + $0x111] sm:$0xff] %vm219, %v298
          %332 = vst.msk [vmem:[%s307 + $0x121] sm:$0xff] %vm219, %v299
          %333 = vst.msk [vmem:[%s307 + $0x129] sm:$0xff] %vm219, %v300
          %334 = vst.msk [vmem:[%s307 + $0x139] sm:$0xff] %vm219, %v301
          %335 = vst.msk [vmem:[%s307 + $0x141] sm:$0xff] %vm219, %v302
          %336 = vst.msk [vmem:[%s307 + $0x151] sm:$0xff] %vm219, %v303
          %337 = vst.msk [vmem:[%s307 + $0x159] sm:$0xff] %vm219, %v304
          %338 = vst.msk [vmem:[%s307 + $0x169] sm:$0xff] %vm219, %v305
          %339 = vst.msk [vmem:[%s307 + $0x171] sm:$0xff] %vm219, %v306
        $region36: #{tpu_custom_call.1} parent=31 // pred_fallthru
          _
        %v340 = vld [vmem:[%s211] sm:$0xff]
        %v341 = vld [vmem:[%s211 + $0x8] sm:$0xff]
        %v342 = vld [vmem:[%s211 + $0x10] sm:$0xff]
        %v343 = vld [vmem:[%s211 + $0x18] sm:$0xff]
        %v344 = vld [vmem:[%s211 + $0x20] sm:$0xff]
        %v345 = vld [vmem:[%s211 + $0x28] sm:$0xff]
        %v346 = vld [vmem:[%s211 + $0x30] sm:$0xff]
        %v347 = vld [vmem:[%s211 + $0x38] sm:$0xff]
        %v348 = vld [vmem:[%s211 + $0x40] sm:$0xff]
        %v349 = vld [vmem:[%s211 + $0x48] sm:$0xff]
        %v350 = vld [vmem:[%s211 + $0x50] sm:$0xff]
        %v351 = vld [vmem:[%s211 + $0x58] sm:$0xff]
        %v352 = vld [vmem:[%s211 + $0x60] sm:$0xff]
        %v353 = vld [vmem:[%s211 + $0x68] sm:$0xff]
        %v354 = vld [vmem:[%s211 + $0x70] sm:$0xff]
        %v355 = vld [vmem:[%s211 + $0x78] sm:$0xff]
        %v356 = vld [vmem:[%s211 + $0x80] sm:$0xff]
        %v357 = vld [vmem:[%s211 + $0x88] sm:$0xff]
        %v358 = vld [vmem:[#allocation2] sm:$0xff]
        %v359 = vld [vmem:[#allocation2 + $0x8] sm:$0xff]
        %v360 = vld [vmem:[#allocation2 + $0x18] sm:$0xff]
        %v361 = vld [vmem:[#allocation2 + $0x20] sm:$0xff]
        %v362 = vld [vmem:[#allocation2 + $0x30] sm:$0xff]
        %v363 = vld [vmem:[#allocation2 + $0x38] sm:$0xff]
        %v364 = vld [vmem:[#allocation2 + $0x48] sm:$0xff]
        %v365 = vld [vmem:[#allocation2 + $0x50] sm:$0xff]
        %v366 = vld [vmem:[#allocation2 + $0x60] sm:$0xff]
        %v367 = vld [vmem:[#allocation2 + $0x68] sm:$0xff]
        %v368 = vld [vmem:[#allocation2 + $0x78] sm:$0xff]
        %v369 = vld [vmem:[#allocation2 + $0x80] sm:$0xff]
        %v370 = vld [vmem:[#allocation2 + $0x90] sm:$0xff]
        %v371 = vld [vmem:[#allocation2 + $0x98] sm:$0xff]
        %v372 = vld [vmem:[#allocation2 + $0xa8] sm:$0xff]
        %v373 = vld [vmem:[#allocation2 + $0xb0] sm:$0xff]
        %v374 = vld [vmem:[#allocation2 + $0xc0] sm:$0xff]
        %v375 = vld [vmem:[#allocation2 + $0xc8] sm:$0xff]
        %v376 = vld [vmem:[#allocation2 + $0xd8] sm:$0xff]
        %v377 = vld [vmem:[#allocation2 + $0xe0] sm:$0xff]
        %v378 = vld [vmem:[#allocation2 + $0xf0] sm:$0xff]
        %v379 = vld [vmem:[#allocation2 + $0xf8] sm:$0xff]
        %v380 = vld [vmem:[#allocation2 + $0x108] sm:$0xff]
        %v381 = vld [vmem:[#allocation2 + $0x110] sm:$0xff]
        %v382 = vld [vmem:[#allocation2 + $0x120] sm:$0xff]
        %v383 = vld [vmem:[#allocation2 + $0x128] sm:$0xff]
        %v384 = vld [vmem:[#allocation2 + $0x138] sm:$0xff]
        %v385 = vld [vmem:[#allocation2 + $0x140] sm:$0xff]
        %v386 = vld [vmem:[#allocation2 + $0x150] sm:$0xff]
        %v387 = vld [vmem:[#allocation2 + $0x158] sm:$0xff]
        %v388 = vld [vmem:[#allocation2 + $0x168] sm:$0xff]
        %v389 = vld [vmem:[#allocation2 + $0x170] sm:$0xff]
        %v390 = vld [vmem:[#allocation2 + $0x1] sm:$0xff]
        %v391 = vld [vmem:[#allocation2 + $0x9] sm:$0xff]
        %v392 = vld [vmem:[#allocation2 + $0x19] sm:$0xff]
        %v393 = vld [vmem:[#allocation2 + $0x21] sm:$0xff]
        %v394 = vld [vmem:[#allocation2 + $0x31] sm:$0xff]
        %v395 = vld [vmem:[#allocation2 + $0x39] sm:$0xff]
        %v396 = vld [vmem:[#allocation2 + $0x49] sm:$0xff]
        %v397 = vld [vmem:[#allocation2 + $0x51] sm:$0xff]
        %v398 = vld [vmem:[#allocation2 + $0x61] sm:$0xff]
        %v399 = vld [vmem:[#allocation2 + $0x69] sm:$0xff]
        %v400 = vld [vmem:[#allocation2 + $0x79] sm:$0xff]
        %v401 = vld [vmem:[#allocation2 + $0x81] sm:$0xff]
        %v402 = vld [vmem:[#allocation2 + $0x91] sm:$0xff]
        %v403 = vld [vmem:[#allocation2 + $0x99] sm:$0xff]
        %v404 = vld [vmem:[#allocation2 + $0xa9] sm:$0xff]
        %v405 = vld [vmem:[#allocation2 + $0xb1] sm:$0xff]
        %v406 = vld [vmem:[#allocation2 + $0xc1] sm:$0xff]
        %v407 = vld [vmem:[#allocation2 + $0xc9] sm:$0xff]
        %v408 = vld [vmem:[#allocation2 + $0xd9] sm:$0xff]
        %v409 = vld [vmem:[#allocation2 + $0xe1] sm:$0xff]
        %v410 = vld [vmem:[#allocation2 + $0xf1] sm:$0xff]
        %v411 = vld [vmem:[#allocation2 + $0xf9] sm:$0xff]
        %v412 = vld [vmem:[#allocation2 + $0x109] sm:$0xff]
        %v413 = vld [vmem:[#allocation2 + $0x111] sm:$0xff]
        %v414 = vld [vmem:[#allocation2 + $0x121] sm:$0xff]
        %v415 = vld [vmem:[#allocation2 + $0x129] sm:$0xff]
        %v416 = vld [vmem:[#allocation2 + $0x139] sm:$0xff]
        %v417 = vld [vmem:[#allocation2 + $0x141] sm:$0xff]
        %v418 = vld [vmem:[#allocation2 + $0x151] sm:$0xff]
        %v419 = vld [vmem:[#allocation2 + $0x159] sm:$0xff]
        %v420 = vld [vmem:[#allocation2 + $0x169] sm:$0xff]
        %v421 = vld [vmem:[#allocation2 + $0x171] sm:$0xff]
        %vm422 = vcmask 130048
        %v424 = vsel %vm422, %v390, 0
        %v427 = vsel %vm422, %v391, 0
        %v430 = vsel %vm422, %v392, 0
        %v433 = vsel %vm422, %v393, 0
        %v436 = vsel %vm422, %v394, 0
        %v439 = vsel %vm422, %v395, 0
        %v442 = vsel %vm422, %v396, 0
        %v445 = vsel %vm422, %v397, 0
        %v448 = vsel %vm422, %v398, 0
        %v451 = vsel %vm422, %v399, 0
        %v454 = vsel %vm422, %v400, 0
        %v457 = vsel %vm422, %v401, 0
        %v460 = vsel %vm422, %v402, 0
        %v463 = vsel %vm422, %v403, 0
        %v466 = vsel %vm422, %v404, 0
        %v469 = vsel %vm422, %v405, 0
        %v472 = vsel %vm422, %v406, 0
        %v475 = vsel %vm422, %v407, 0
        %v478 = vsel %vm422, %v408, 0
        %v481 = vsel %vm422, %v409, 0
        %v484 = vsel %vm422, %v410, 0
        %v487 = vsel %vm422, %v411, 0
        %v490 = vsel %vm422, %v412, 0
        %v493 = vsel %vm422, %v413, 0
        %v496 = vsel %vm422, %v414, 0
        %v499 = vsel %vm422, %v415, 0
        %v502 = vsel %vm422, %v416, 0
        %v505 = vsel %vm422, %v417, 0
        %v508 = vsel %vm422, %v418, 0
        %v511 = vsel %vm422, %v419, 0
        %v514 = vsel %vm422, %v420, 0
        %v517 = vsel %vm422, %v421, 0
        %519 = vmatprep.subr.mxu0 0.0
        %520 = vmatpush1.msra.mxu0 %v342
        %521 = vmatprep.subr.mxu0 0.0
        %522 = vmatpush1.msra.mxu0 %v343
        %523 = vmatprep.subr.mxu0 0.0
        %524 = vmatpush1.msra.mxu0 0.0
        %525 = vmatprep.subr.mxu0 0.0
        %526 = vmatpush1.msra.mxu0 0.0
        %527 = vmatprep.subr.mxu0 0.0
        %528 = vmatpush1.msra.mxu0 0.0
        %529 = vmatprep.subr.mxu0 0.0
        %530 = vmatpush1.msra.mxu0 0.0
        %531 = vmatprep.subr.mxu0 0.0
        %532 = vmatpush1.msra.mxu0 0.0
        %533 = vmatprep.subr.mxu0 0.0
        %534 = vmatpush1.msra.mxu0 0.0
        %535 = vmatprep.subr.mxu0 0.0
        %536 = vmatpush1.msra.mxu0 0.0
        %537 = vmatprep.subr.mxu0 0.0
        %538 = vmatpush1.msra.mxu0 0.0
        %539 = vmatprep.subr.mxu0 0.0
        %540 = vmatpush1.msra.mxu0 0.0
        %541 = vmatprep.subr.mxu0 0.0
        %542 = vmatpush1.msra.mxu0 0.0
        %543 = vmatprep.subr.mxu0 0.0
        %544 = vmatpush1.msra.mxu0 0.0
        %545 = vmatprep.subr.mxu0 0.0
        %546 = vmatpush1.msra.mxu0 0.0
        %547 = vmatprep.subr.mxu0 0.0
        %548 = vmatpush1.msra.mxu0 0.0
        %549 = vmatprep.subr.mxu0 0.0
        %550 = vmatpush1.msra.mxu0 0.0
        %551 = vmatprep.subr.mxu0 0.0
        %552 = vmatpush1.msra.mxu0 0.0
        %553 = vmatprep.subr.mxu0 0.0
        %554 = vmatpush1.msra.mxu0 0.0
        %555 = vmatprep.subr.mxu0 0.0
        %556 = vmatpush1.msra.mxu0 0.0
        %557 = vmatprep.subr.mxu0 0.0
        %558 = vmatpush1.msra.mxu0 0.0
        %559 = vmatprep.subr.mxu0 0.0
        %560 = vmatpush1.msra.mxu0 0.0
        %561 = vmatprep.subr.mxu0 0.0
        %562 = vmatpush1.msra.mxu0 0.0
        %563 = vmatprep.subr.mxu0 0.0
        %564 = vmatpush1.msra.mxu0 0.0
        %565 = vmatprep.subr.mxu0 0.0
        %566 = vmatpush1.msra.mxu0 0.0
        %567 = vmatprep.subr.mxu0 0.0
        %568 = vmatpush1.msra.mxu0 0.0
        %569 = vmatprep.subr.mxu0 0.0
        %570 = vmatpush1.msra.mxu0 0.0
        %571 = vmatprep.subr.mxu0 0.0
        %572 = vmatpush1.msra.mxu0 0.0
        %573 = vmatprep.subr.mxu0 0.0
        %574 = vmatpush1.msra.mxu0 0.0
        %575 = vmatprep.subr.mxu0 0.0
        %576 = vmatpush1.msra.mxu0 0.0
        %577 = vmatprep.subr.mxu0 0.0
        %578 = vmatpush1.msra.mxu0 0.0
        %579 = vmatprep.subr.mxu0 0.0
        %580 = vmatpush1.msra.mxu0 0.0
        %581 = vmatprep.subr.mxu0 0.0
        %582 = vmatpush1.msra.mxu0 0.0
        %583 = vmatprep.mubr.f32.mxu0 0.0
        %584 = vmatmul.mubr.f32.gmra.mrb[0].mxu0 %v424
        %v585 = vpop.f32.mrb[0].mxu0
        %v586 = vadd.f32 0.0, %v585
        %v587 = vpop.f32.mrb[0].mxu0
        %588 = vmatprep.mubr.f32.mxu0 0.0
        %589 = vmatmul.mubr.f32.gmra.mrb[0].mxu0 %v427
        %v590 = vpop.f32.mrb[0].mxu0
        %v591 = vadd.f32 0.0, %v590
        %v592 = vpop.f32.mrb[0].mxu0
        %593 = vmatprep.mubr.f32.mxu0 0.0
        %594 = vmatmul.mubr.f32.gmra.mrb[0].mxu0 %v430
        %v595 = vpop.f32.mrb[0].mxu0
        %v596 = vadd.f32 0.0, %v595
        %v597 = vpop.f32.mrb[0].mxu0
        %598 = vmatprep.mubr.f32.mxu0 0.0
        %599 = vmatmul.mubr.f32.gmra.mrb[0].mxu0 %v433
        %v600 = vpop.f32.mrb[0].mxu0
        %v601 = vadd.f32 0.0, %v600
        %v602 = vpop.f32.mrb[0].mxu0
        %603 = vmatprep.mubr.f32.mxu0 0.0
        %604 = vmatmul.mubr.f32.gmra.mrb[0].mxu0 %v436
        %v605 = vpop.f32.mrb[0].mxu0
        %v606 = vadd.f32 0.0, %v605
        %v607 = vpop.f32.mrb[0].mxu0
        %608 = vmatprep.mubr.f32.mxu0 0.0
        %609 = vmatmul.mubr.f32.gmra.mrb[0].mxu0 %v439
        %v610 = vpop.f32.mrb[0].mxu0
        %v611 = vadd.f32 0.0, %v610
        %v612 = vpop.f32.mrb[0].mxu0
        %613 = vmatprep.mubr.f32.mxu0 0.0
        %614 = vmatmul.mubr.f32.gmra.mrb[0].mxu0 %v442
        %v615 = vpop.f32.mrb[0].mxu0
        %v616 = vadd.f32 0.0, %v615
        %v617 = vpop.f32.mrb[0].mxu0
        %618 = vmatprep.mubr.f32.mxu0 0.0
        %619 = vmatmul.mubr.f32.gmra.mrb[0].mxu0 %v445
        %v620 = vpop.f32.mrb[0].mxu0
        %v621 = vadd.f32 0.0, %v620
        %v622 = vpop.f32.mrb[0].mxu0
        %623 = vmatprep.mubr.f32.mxu0 0.0
        %624 = vmatmul.mubr.f32.gmra.mrb[0].mxu0 %v448
        %v625 = vpop.f32.mrb[0].mxu0
        %v626 = vadd.f32 0.0, %v625
        %v627 = vpop.f32.mrb[0].mxu0
        %628 = vmatprep.mubr.f32.mxu0 0.0
        %629 = vmatmul.mubr.f32.gmra.mrb[0].mxu0 %v451
        %v630 = vpop.f32.mrb[0].mxu0
        %v631 = vadd.f32 0.0, %v630
        %v632 = vpop.f32.mrb[0].mxu0
        %633 = vmatprep.mubr.f32.mxu0 0.0
        %634 = vmatmul.mubr.f32.gmra.mrb[0].mxu0 %v454
        %v635 = vpop.f32.mrb[0].mxu0
        %v636 = vadd.f32 0.0, %v635
        %v637 = vpop.f32.mrb[0].mxu0
        %638 = vmatprep.mubr.f32.mxu0 0.0
        %639 = vmatmul.mubr.f32.gmra.mrb[0].mxu0 %v457
        %v640 = vpop.f32.mrb[0].mxu0
        %v641 = vadd.f32 0.0, %v640
        %v642 = vpop.f32.mrb[0].mxu0
        %643 = vmatprep.mubr.f32.mxu0 0.0
        %644 = vmatmul.mubr.f32.gmra.mrb[0].mxu0 %v460
        %v645 = vpop.f32.mrb[0].mxu0
        %v646 = vadd.f32 0.0, %v645
        %v647 = vpop.f32.mrb[0].mxu0
        %648 = vmatprep.mubr.f32.mxu0 0.0
        %649 = vmatmul.mubr.f32.gmra.mrb[0].mxu0 %v463
        %v650 = vpop.f32.mrb[0].mxu0
        %v651 = vadd.f32 0.0, %v650
        %v652 = vpop.f32.mrb[0].mxu0
        %653 = vmatprep.mubr.f32.mxu0 0.0
        %654 = vmatmul.mubr.f32.gmra.mrb[0].mxu0 %v466
        %v655 = vpop.f32.mrb[0].mxu0
        %v656 = vadd.f32 0.0, %v655
        %v657 = vpop.f32.mrb[0].mxu0
        %658 = vmatprep.mubr.f32.mxu0 0.0
        %659 = vmatmul.mubr.f32.gmra.mrb[0].mxu0 %v469
        %v660 = vpop.f32.mrb[0].mxu0
        %v661 = vadd.f32 0.0, %v660
        %v662 = vpop.f32.mrb[0].mxu0
        %663 = vmatprep.mubr.f32.mxu0 0.0
        %664 = vmatmul.mubr.f32.gmra.mrb[0].mxu0 %v472
        %v665 = vpop.f32.mrb[0].mxu0
        %v666 = vadd.f32 0.0, %v665
        %v667 = vpop.f32.mrb[0].mxu0
        %668 = vmatprep.mubr.f32.mxu0 0.0
        %669 = vmatmul.mubr.f32.gmra.mrb[0].mxu0 %v475
        %v670 = vpop.f32.mrb[0].mxu0
        %v671 = vadd.f32 0.0, %v670
        %v672 = vpop.f32.mrb[0].mxu0
        %673 = vmatprep.mubr.f32.mxu0 0.0
        %674 = vmatmul.mubr.f32.gmra.mrb[0].mxu0 %v478
        %v675 = vpop.f32.mrb[0].mxu0
        %v676 = vadd.f32 0.0, %v675
        %v677 = vpop.f32.mrb[0].mxu0
        %678 = vmatprep.mubr.f32.mxu0 0.0
        %679 = vmatmul.mubr.f32.gmra.mrb[0].mxu0 %v481
        %v680 = vpop.f32.mrb[0].mxu0
        %v681 = vadd.f32 0.0, %v680
        %v682 = vpop.f32.mrb[0].mxu0
        %683 = vmatprep.mubr.f32.mxu0 0.0
        %684 = vmatmul.mubr.f32.gmra.mrb[0].mxu0 %v484
        %v685 = vpop.f32.mrb[0].mxu0
        %v686 = vadd.f32 0.0, %v685
        %v687 = vpop.f32.mrb[0].mxu0
        %688 = vmatprep.mubr.f32.mxu0 0.0
        %689 = vmatmul.mubr.f32.gmra.mrb[0].mxu0 %v487
        %v690 = vpop.f32.mrb[0].mxu0
        %v691 = vadd.f32 0.0, %v690
        %v692 = vpop.f32.mrb[0].mxu0
        %693 = vmatprep.mubr.f32.mxu0 0.0
        %694 = vmatmul.mubr.f32.gmra.mrb[0].mxu0 %v490
        %v695 = vpop.f32.mrb[0].mxu0
        %v696 = vadd.f32 0.0, %v695
        %v697 = vpop.f32.mrb[0].mxu0
        %698 = vmatprep.mubr.f32.mxu0 0.0
        %699 = vmatmul.mubr.f32.gmra.mrb[0].mxu0 %v493
        %v700 = vpop.f32.mrb[0].mxu0
        %v701 = vadd.f32 0.0, %v700
        %v702 = vpop.f32.mrb[0].mxu0
        %703 = vmatprep.mubr.f32.mxu0 0.0
        %704 = vmatmul.mubr.f32.gmra.mrb[0].mxu0 %v496
        %v705 = vpop.f32.mrb[0].mxu0
        %v706 = vadd.f32 0.0, %v705
        %v707 = vpop.f32.mrb[0].mxu0
        %708 = vmatprep.mubr.f32.mxu0 0.0
        %709 = vmatmul.mubr.f32.gmra.mrb[0].mxu0 %v499
        %v710 = vpop.f32.mrb[0].mxu0
        %v711 = vadd.f32 0.0, %v710
        %v712 = vpop.f32.mrb[0].mxu0
        %713 = vmatprep.mubr.f32.mxu0 0.0
        %714 = vmatmul.mubr.f32.gmra.mrb[0].mxu0 %v502
        %v715 = vpop.f32.mrb[0].mxu0
        %v716 = vadd.f32 0.0, %v715
        %v717 = vpop.f32.mrb[0].mxu0
        %718 = vmatprep.mubr.f32.mxu0 0.0
        %719 = vmatmul.mubr.f32.gmra.mrb[0].mxu0 %v505
        %v720 = vpop.f32.mrb[0].mxu0
        %v721 = vadd.f32 0.0, %v720
        %v722 = vpop.f32.mrb[0].mxu0
        %723 = vmatprep.mubr.f32.mxu0 0.0
        %724 = vmatmul.mubr.f32.gmra.mrb[0].mxu0 %v508
        %v725 = vpop.f32.mrb[0].mxu0
        %v726 = vadd.f32 0.0, %v725
        %v727 = vpop.f32.mrb[0].mxu0
        %728 = vmatprep.mubr.f32.mxu0 0.0
        %729 = vmatmul.mubr.f32.gmra.mrb[0].mxu0 %v511
        %v730 = vpop.f32.mrb[0].mxu0
        %v731 = vadd.f32 0.0, %v730
        %v732 = vpop.f32.mrb[0].mxu0
        %733 = vmatprep.mubr.f32.mxu0 0.0
        %734 = vmatmul.mubr.f32.gmra.mrb[0].mxu0 %v514
        %v735 = vpop.f32.mrb[0].mxu0
        %v736 = vadd.f32 0.0, %v735
        %v737 = vpop.f32.mrb[0].mxu0
        %738 = vmatprep.mubr.f32.mxu0 0.0
        %739 = vmatmul.mubr.f32.gmra.mrb[0].mxu0 %v517
        %v740 = vpop.f32.mrb[0].mxu0
        %v741 = vadd.f32 0.0, %v740
        %v742 = vpop.f32.mrb[0].mxu0
        %743 = vdwg.mxu0
        %v745 = vsel %vm422, %v358, 0
        %v748 = vsel %vm422, %v359, 0
        %v751 = vsel %vm422, %v360, 0
        %v754 = vsel %vm422, %v361, 0
        %v757 = vsel %vm422, %v362, 0
        %v760 = vsel %vm422, %v363, 0
        %v763 = vsel %vm422, %v364, 0
        %v766 = vsel %vm422, %v365, 0
        %v769 = vsel %vm422, %v366, 0
        %v772 = vsel %vm422, %v367, 0
        %v775 = vsel %vm422, %v368, 0
        %v778 = vsel %vm422, %v369, 0
        %v781 = vsel %vm422, %v370, 0
        %v784 = vsel %vm422, %v371, 0
        %v787 = vsel %vm422, %v372, 0
        %v790 = vsel %vm422, %v373, 0
        %v793 = vsel %vm422, %v374, 0
        %v796 = vsel %vm422, %v375, 0
        %v799 = vsel %vm422, %v376, 0
        %v802 = vsel %vm422, %v377, 0
        %v805 = vsel %vm422, %v378, 0
        %v808 = vsel %vm422, %v379, 0
        %v811 = vsel %vm422, %v380, 0
        %v814 = vsel %vm422, %v381, 0
        %v817 = vsel %vm422, %v382, 0
        %v820 = vsel %vm422, %v383, 0
        %v823 = vsel %vm422, %v384, 0
        %v826 = vsel %vm422, %v385, 0
        %v829 = vsel %vm422, %v386, 0
        %v832 = vsel %vm422, %v387, 0
        %v835 = vsel %vm422, %v388, 0
        %v838 = vsel %vm422, %v389, 0
        %840 = vmatprep.subr.mxu0 0.0
        %841 = vmatpush1.msra.mxu0 %v340
        %842 = vmatprep.subr.mxu0 0.0
        %843 = vmatpush1.msra.mxu0 %v341
        %844 = vmatprep.subr.mxu0 0.0
        %845 = vmatpush1.msra.mxu0 0.0
        %846 = vmatprep.subr.mxu0 0.0
        %847 = vmatpush1.msra.mxu0 0.0
        %848 = vmatprep.subr.mxu0 0.0
        %849 = vmatpush1.msra.mxu0 0.0
        %850 = vmatprep.subr.mxu0 0.0
        %851 = vmatpush1.msra.mxu0 0.0
        %852 = vmatprep.subr.mxu0 0.0
        %853 = vmatpush1.msra.mxu0 0.0
        %854 = vmatprep.subr.mxu0 0.0
        %855 = vmatpush1.msra.mxu0 0.0
        %856 = vmatprep.subr.mxu0 0.0
        %857 = vmatpush1.msra.mxu0 0.0
        %858 = vmatprep.subr.mxu0 0.0
        %859 = vmatpush1.msra.mxu0 0.0
        %860 = vmatprep.subr.mxu0 0.0
        %861 = vmatpush1.msra.mxu0 0.0
        %862 = vmatprep.subr.mxu0 0.0
        %863 = vmatpush1.msra.mxu0 0.0
        %864 = vmatprep.subr.mxu0 0.0
        %865 = vmatpush1.msra.mxu0 0.0
        %866 = vmatprep.subr.mxu0 0.0
        %867 = vmatpush1.msra.mxu0 0.0
        %868 = vmatprep.subr.mxu0 0.0
        %869 = vmatpush1.msra.mxu0 0.0
        %870 = vmatprep.subr.mxu0 0.0
        %871 = vmatpush1.msra.mxu0 0.0
        %872 = vmatprep.subr.mxu0 0.0
        %873 = vmatpush1.msra.mxu0 0.0
        %874 = vmatprep.subr.mxu0 0.0
        %875 = vmatpush1.msra.mxu0 0.0
        %876 = vmatprep.subr.mxu0 0.0
        %877 = vmatpush1.msra.mxu0 0.0
        %878 = vmatprep.subr.mxu0 0.0
        %879 = vmatpush1.msra.mxu0 0.0
        %880 = vmatprep.subr.mxu0 0.0
        %881 = vmatpush1.msra.mxu0 0.0
        %882 = vmatprep.subr.mxu0 0.0
        %883 = vmatpush1.msra.mxu0 0.0
        %884 = vmatprep.subr.mxu0 0.0
        %885 = vmatpush1.msra.mxu0 0.0
        %886 = vmatprep.subr.mxu0 0.0
        %887 = vmatpush1.msra.mxu0 0.0
        %888 = vmatprep.subr.mxu0 0.0
        %889 = vmatpush1.msra.mxu0 0.0
        %890 = vmatprep.subr.mxu0 0.0
        %891 = vmatpush1.msra.mxu0 0.0
        %892 = vmatprep.subr.mxu0 0.0
        %893 = vmatpush1.msra.mxu0 0.0
        %894 = vmatprep.subr.mxu0 0.0
        %895 = vmatpush1.msra.mxu0 0.0
        %896 = vmatprep.subr.mxu0 0.0
        %897 = vmatpush1.msra.mxu0 0.0
        %898 = vmatprep.subr.mxu0 0.0
        %899 = vmatpush1.msra.mxu0 0.0
        %900 = vmatprep.subr.mxu0 0.0
        %901 = vmatpush1.msra.mxu0 0.0
        %902 = vmatprep.subr.mxu0 0.0
        %903 = vmatpush1.msra.mxu0 0.0
        %904 = vmatprep.mubr.f32.mxu0 0.0
        %905 = vmatmul.mubr.f32.gmra.mrb[0].mxu0 %v745
        %v906 = vpop.f32.mrb[0].mxu0
        %v907 = vadd.f32 %v586, %v906
        %v908 = vpop.f32.mrb[0].mxu0
        %909 = vmatprep.mubr.f32.mxu0 0.0
        %910 = vmatmul.mubr.f32.gmra.mrb[0].mxu0 %v748
        %v911 = vpop.f32.mrb[0].mxu0
        %v912 = vadd.f32 %v591, %v911
        %v913 = vpop.f32.mrb[0].mxu0
        %914 = vmatprep.mubr.f32.mxu0 0.0
        %915 = vmatmul.mubr.f32.gmra.mrb[0].mxu0 %v751
        %v916 = vpop.f32.mrb[0].mxu0
        %v917 = vadd.f32 %v596, %v916
        %v918 = vpop.f32.mrb[0].mxu0
        %919 = vmatprep.mubr.f32.mxu0 0.0
        %920 = vmatmul.mubr.f32.gmra.mrb[0].mxu0 %v754
        %v921 = vpop.f32.mrb[0].mxu0
        %v922 = vadd.f32 %v601, %v921
        %v923 = vpop.f32.mrb[0].mxu0
        %924 = vmatprep.mubr.f32.mxu0 0.0
        %925 = vmatmul.mubr.f32.gmra.mrb[0].mxu0 %v757
        %v926 = vpop.f32.mrb[0].mxu0
        %v927 = vadd.f32 %v606, %v926
        %v928 = vpop.f32.mrb[0].mxu0
        %929 = vmatprep.mubr.f32.mxu0 0.0
        %930 = vmatmul.mubr.f32.gmra.mrb[0].mxu0 %v760
        %v931 = vpop.f32.mrb[0].mxu0
        %v932 = vadd.f32 %v611, %v931
        %v933 = vpop.f32.mrb[0].mxu0
        %934 = vmatprep.mubr.f32.mxu0 0.0
        %935 = vmatmul.mubr.f32.gmra.mrb[0].mxu0 %v763
        %v936 = vpop.f32.mrb[0].mxu0
        %v937 = vadd.f32 %v616, %v936
        %v938 = vpop.f32.mrb[0].mxu0
        %939 = vmatprep.mubr.f32.mxu0 0.0
        %940 = vmatmul.mubr.f32.gmra.mrb[0].mxu0 %v766
        %v941 = vpop.f32.mrb[0].mxu0
        %v942 = vadd.f32 %v621, %v941
        %v943 = vpop.f32.mrb[0].mxu0
        %944 = vmatprep.mubr.f32.mxu0 0.0
        %945 = vmatmul.mubr.f32.gmra.mrb[0].mxu0 %v769
        %v946 = vpop.f32.mrb[0].mxu0
        %v947 = vadd.f32 %v626, %v946
        %v948 = vpop.f32.mrb[0].mxu0
        %949 = vmatprep.mubr.f32.mxu0 0.0
        %950 = vmatmul.mubr.f32.gmra.mrb[0].mxu0 %v772
        %v951 = vpop.f32.mrb[0].mxu0
        %v952 = vadd.f32 %v631, %v951
        %v953 = vpop.f32.mrb[0].mxu0
        %954 = vmatprep.mubr.f32.mxu0 0.0
        %955 = vmatmul.mubr.f32.gmra.mrb[0].mxu0 %v775
        %v956 = vpop.f32.mrb[0].mxu0
        %v957 = vadd.f32 %v636, %v956
        %v958 = vpop.f32.mrb[0].mxu0
        %959 = vmatprep.mubr.f32.mxu0 0.0
        %960 = vmatmul.mubr.f32.gmra.mrb[0].mxu0 %v778
        %v961 = vpop.f32.mrb[0].mxu0
        %v962 = vadd.f32 %v641, %v961
        %v963 = vpop.f32.mrb[0].mxu0
        %964 = vmatprep.mubr.f32.mxu0 0.0
        %965 = vmatmul.mubr.f32.gmra.mrb[0].mxu0 %v781
        %v966 = vpop.f32.mrb[0].mxu0
        %v967 = vadd.f32 %v646, %v966
        %v968 = vpop.f32.mrb[0].mxu0
        %969 = vmatprep.mubr.f32.mxu0 0.0
        %970 = vmatmul.mubr.f32.gmra.mrb[0].mxu0 %v784
        %v971 = vpop.f32.mrb[0].mxu0
        %v972 = vadd.f32 %v651, %v971
        %v973 = vpop.f32.mrb[0].mxu0
        %974 = vmatprep.mubr.f32.mxu0 0.0
        %975 = vmatmul.mubr.f32.gmra.mrb[0].mxu0 %v787
        %v976 = vpop.f32.mrb[0].mxu0
        %v977 = vadd.f32 %v656, %v976
        %v978 = vpop.f32.mrb[0].mxu0
        %979 = vmatprep.mubr.f32.mxu0 0.0
        %980 = vmatmul.mubr.f32.gmra.mrb[0].mxu0 %v790
        %v981 = vpop.f32.mrb[0].mxu0
        %v982 = vadd.f32 %v661, %v981
        %v983 = vpop.f32.mrb[0].mxu0
        %984 = vmatprep.mubr.f32.mxu0 0.0
        %985 = vmatmul.mubr.f32.gmra.mrb[0].mxu0 %v793
        %v986 = vpop.f32.mrb[0].mxu0
        %v987 = vadd.f32 %v666, %v986
        %v988 = vpop.f32.mrb[0].mxu0
        %989 = vmatprep.mubr.f32.mxu0 0.0
        %990 = vmatmul.mubr.f32.gmra.mrb[0].mxu0 %v796
        %v991 = vpop.f32.mrb[0].mxu0
        %v992 = vadd.f32 %v671, %v991
        %v993 = vpop.f32.mrb[0].mxu0
        %994 = vmatprep.mubr.f32.mxu0 0.0
        %995 = vmatmul.mubr.f32.gmra.mrb[0].mxu0 %v799
        %v996 = vpop.f32.mrb[0].mxu0
        %v997 = vadd.f32 %v676, %v996
        %v998 = vpop.f32.mrb[0].mxu0
        %999 = vmatprep.mubr.f32.mxu0 0.0
        %1000 = vmatmul.mubr.f32.gmra.mrb[0].mxu0 %v802
        %v1001 = vpop.f32.mrb[0].mxu0
        %v1002 = vadd.f32 %v681, %v1001
        %v1003 = vpop.f32.mrb[0].mxu0
        %1004 = vmatprep.mubr.f32.mxu0 0.0
        %1005 = vmatmul.mubr.f32.gmra.mrb[0].mxu0 %v805
        %v1006 = vpop.f32.mrb[0].mxu0
        %v1007 = vadd.f32 %v686, %v1006
        %v1008 = vpop.f32.mrb[0].mxu0
        %1009 = vmatprep.mubr.f32.mxu0 0.0
        %1010 = vmatmul.mubr.f32.gmra.mrb[0].mxu0 %v808
        %v1011 = vpop.f32.mrb[0].mxu0
        %v1012 = vadd.f32 %v691, %v1011
        %v1013 = vpop.f32.mrb[0].mxu0
        %1014 = vmatprep.mubr.f32.mxu0 0.0
        %1015 = vmatmul.mubr.f32.gmra.mrb[0].mxu0 %v811
        %v1016 = vpop.f32.mrb[0].mxu0
        %v1017 = vadd.f32 %v696, %v1016
        %v1018 = vpop.f32.mrb[0].mxu0
        %1019 = vmatprep.mubr.f32.mxu0 0.0
        %1020 = vmatmul.mubr.f32.gmra.mrb[0].mxu0 %v814
        %v1021 = vpop.f32.mrb[0].mxu0
        %v1022 = vadd.f32 %v701, %v1021
        %v1023 = vpop.f32.mrb[0].mxu0
        %1024 = vmatprep.mubr.f32.mxu0 0.0
        %1025 = vmatmul.mubr.f32.gmra.mrb[0].mxu0 %v817
        %v1026 = vpop.f32.mrb[0].mxu0
        %v1027 = vadd.f32 %v706, %v1026
        %v1028 = vpop.f32.mrb[0].mxu0
        %1029 = vmatprep.mubr.f32.mxu0 0.0
        %1030 = vmatmul.mubr.f32.gmra.mrb[0].mxu0 %v820
        %v1031 = vpop.f32.mrb[0].mxu0
        %v1032 = vadd.f32 %v711, %v1031
        %v1033 = vpop.f32.mrb[0].mxu0
        %1034 = vmatprep.mubr.f32.mxu0 0.0
        %1035 = vmatmul.mubr.f32.gmra.mrb[0].mxu0 %v823
        %v1036 = vpop.f32.mrb[0].mxu0
        %v1037 = vadd.f32 %v716, %v1036
        %v1038 = vpop.f32.mrb[0].mxu0
        %1039 = vmatprep.mubr.f32.mxu0 0.0
        %1040 = vmatmul.mubr.f32.gmra.mrb[0].mxu0 %v826
        %v1041 = vpop.f32.mrb[0].mxu0
        %v1042 = vadd.f32 %v721, %v1041
        %v1043 = vpop.f32.mrb[0].mxu0
        %1044 = vmatprep.mubr.f32.mxu0 0.0
        %1045 = vmatmul.mubr.f32.gmra.mrb[0].mxu0 %v829
        %v1046 = vpop.f32.mrb[0].mxu0
        %v1047 = vadd.f32 %v726, %v1046
        %v1048 = vpop.f32.mrb[0].mxu0
        %1049 = vmatprep.mubr.f32.mxu0 0.0
        %1050 = vmatmul.mubr.f32.gmra.mrb[0].mxu0 %v832
        %v1051 = vpop.f32.mrb[0].mxu0
        %v1052 = vadd.f32 %v731, %v1051
        %v1053 = vpop.f32.mrb[0].mxu0
        %1054 = vmatprep.mubr.f32.mxu0 0.0
        %1055 = vmatmul.mubr.f32.gmra.mrb[0].mxu0 %v835
        %v1056 = vpop.f32.mrb[0].mxu0
        %v1057 = vadd.f32 %v736, %v1056
        %v1058 = vpop.f32.mrb[0].mxu0
        %1059 = vmatprep.mubr.f32.mxu0 0.0
        %1060 = vmatmul.mubr.f32.gmra.mrb[0].mxu0 %v838
        %v1061 = vpop.f32.mrb[0].mxu0
        %v1062 = vadd.f32 %v741, %v1061
        %v1063 = vpop.f32.mrb[0].mxu0
        %1064 = vdwg.mxu0
        %v1065 = vld [vmem:[#allocation2 + $0x2] sm:$0xff]
        %v1066 = vld [vmem:[#allocation2 + $0xa] sm:$0xff]
        %v1067 = vld [vmem:[#allocation2 + $0x1a] sm:$0xff]
        %v1068 = vld [vmem:[#allocation2 + $0x22] sm:$0xff]
        %v1069 = vld [vmem:[#allocation2 + $0x32] sm:$0xff]
        %v1070 = vld [vmem:[#allocation2 + $0x3a] sm:$0xff]
        %v1071 = vld [vmem:[#allocation2 + $0x4a] sm:$0xff]
        %v1072 = vld [vmem:[#allocation2 + $0x52] sm:$0xff]
        %v1073 = vld [vmem:[#allocation2 + $0x62] sm:$0xff]
        %v1074 = vld [vmem:[#allocation2 + $0x6a] sm:$0xff]
        %v1075 = vld [vmem:[#allocation2 + $0x7a] sm:$0xff]
        %v1076 = vld [vmem:[#allocation2 + $0x82] sm:$0xff]
        %v1077 = vld [vmem:[#allocation2 + $0x92] sm:$0xff]
        %v1078 = vld [vmem:[#allocation2 + $0x9a] sm:$0xff]
        %v1079 = vld [vmem:[#allocation2 + $0xaa] sm:$0xff]
        %v1080 = vld [vmem:[#allocation2 + $0xb2] sm:$0xff]
        %v1081 = vld [vmem:[#allocation2 + $0xc2] sm:$0xff]
        %v1082 = vld [vmem:[#allocation2 + $0xca] sm:$0xff]
        %v1083 = vld [vmem:[#allocation2 + $0xda] sm:$0xff]
        %v1084 = vld [vmem:[#allocation2 + $0xe2] sm:$0xff]
        %v1085 = vld [vmem:[#allocation2 + $0xf2] sm:$0xff]
        %v1086 = vld [vmem:[#allocation2 + $0xfa] sm:$0xff]
        %v1087 = vld [vmem:[#allocation2 + $0x10a] sm:$0xff]
        %v1088 = vld [vmem:[#allocation2 + $0x112] sm:$0xff]
        %v1089 = vld [vmem:[#allocation2 + $0x122] sm:$0xff]
        %v1090 = vld [vmem:[#allocation2 + $0x12a] sm:$0xff]
        %v1091 = vld [vmem:[#allocation2 + $0x13a] sm:$0xff]
        %v1092 = vld [vmem:[#allocation2 + $0x142] sm:$0xff]
        %v1093 = vld [vmem:[#allocation2 + $0x152] sm:$0xff]
        %v1094 = vld [vmem:[#allocation2 + $0x15a] sm:$0xff]
        %v1095 = vld [vmem:[#allocation2 + $0x16a] sm:$0xff]
        %v1096 = vld [vmem:[#allocation2 + $0x172] sm:$0xff]
        %v1098 = vsel %vm422, %v1065, 0
        %v1101 = vsel %vm422, %v1066, 0
        %v1104 = vsel %vm422, %v1067, 0
        %v1107 = vsel %vm422, %v1068, 0
        %v1110 = vsel %vm422, %v1069, 0
        %v1113 = vsel %vm422, %v1070, 0
        %v1116 = vsel %vm422, %v1071, 0
        %v1119 = vsel %vm422, %v1072, 0
        %v1122 = vsel %vm422, %v1073, 0
        %v1125 = vsel %vm422, %v1074, 0
        %v1128 = vsel %vm422, %v1075, 0
        %v1131 = vsel %vm422, %v1076, 0
        %v1134 = vsel %vm422, %v1077, 0
        %v1137 = vsel %vm422, %v1078, 0
        %v1140 = vsel %vm422, %v1079, 0
        %v1143 = vsel %vm422, %v1080, 0
        %v1146 = vsel %vm422, %v1081, 0
        %v1149 = vsel %vm422, %v1082, 0
        %v1152 = vsel %vm422, %v1083, 0
        %v1155 = vsel %vm422, %v1084, 0
        %v1158 = vsel %vm422, %v1085, 0
        %v1161 = vsel %vm422, %v1086, 0
        %v1164 = vsel %vm422, %v1087, 0
        %v1167 = vsel %vm422, %v1088, 0
        %v1170 = vsel %vm422, %v1089, 0
        %v1173 = vsel %vm422, %v1090, 0
        %v1176 = vsel %vm422, %v1091, 0
        %v1179 = vsel %vm422, %v1092, 0
        %v1182 = vsel %vm422, %v1093, 0
        %v1185 = vsel %vm422, %v1094, 0
        %v1188 = vsel %vm422, %v1095, 0
        %v1191 = vsel %vm422, %v1096, 0
        %1193 = vmatprep.subr.mxu0 0.0
        %1194 = vmatpush1.msra.mxu0 %v344
        %1195 = vmatprep.subr.mxu0 0.0
        %1196 = vmatpush1.msra.mxu0 %v345
        %1197 = vmatprep.subr.mxu0 0.0
        %1198 = vmatpush1.msra.mxu0 0.0
        %1199 = vmatprep.subr.mxu0 0.0
        %1200 = vmatpush1.msra.mxu0 0.0
        %1201 = vmatprep.subr.mxu0 0.0
        %1202 = vmatpush1.msra.mxu0 0.0
        %1203 = vmatprep.subr.mxu0 0.0
        %1204 = vmatpush1.msra.mxu0 0.0
        %1205 = vmatprep.subr.mxu0 0.0
        %1206 = vmatpush1.msra.mxu0 0.0
        %1207 = vmatprep.subr.mxu0 0.0
        %1208 = vmatpush1.msra.mxu0 0.0
        %1209 = vmatprep.subr.mxu0 0.0
        %1210 = vmatpush1.msra.mxu0 0.0
        %1211 = vmatprep.subr.mxu0 0.0
        %1212 = vmatpush1.msra.mxu0 0.0
        %1213 = vmatprep.subr.mxu0 0.0
        %1214 = vmatpush1.msra.mxu0 0.0
        %1215 = vmatprep.subr.mxu0 0.0
        %1216 = vmatpush1.msra.mxu0 0.0
        %1217 = vmatprep.subr.mxu0 0.0
        %1218 = vmatpush1.msra.mxu0 0.0
        %1219 = vmatprep.subr.mxu0 0.0
        %1220 = vmatpush1.msra.mxu0 0.0
        %1221 = vmatprep.subr.mxu0 0.0
        %1222 = vmatpush1.msra.mxu0 0.0
        %1223 = vmatprep.subr.mxu0 0.0
        %1224 = vmatpush1.msra.mxu0 0.0
        %1225 = vmatprep.subr.mxu0 0.0
        %1226 = vmatpush1.msra.mxu0 0.0
        %1227 = vmatprep.subr.mxu0 0.0
        %1228 = vmatpush1.msra.mxu0 0.0
        %1229 = vmatprep.subr.mxu0 0.0
        %1230 = vmatpush1.msra.mxu0 0.0
        %1231 = vmatprep.subr.mxu0 0.0
        %1232 = vmatpush1.msra.mxu0 0.0
        %1233 = vmatprep.subr.mxu0 0.0
        %1234 = vmatpush1.msra.mxu0 0.0
        %1235 = vmatprep.subr.mxu0 0.0
        %1236 = vmatpush1.msra.mxu0 0.0
        %1237 = vmatprep.subr.mxu0 0.0
        %1238 = vmatpush1.msra.mxu0 0.0
        %1239 = vmatprep.subr.mxu0 0.0
        %1240 = vmatpush1.msra.mxu0 0.0
        %1241 = vmatprep.subr.mxu0 0.0
        %1242 = vmatpush1.msra.mxu0 0.0
        %1243 = vmatprep.subr.mxu0 0.0
        %1244 = vmatpush1.msra.mxu0 0.0
        %1245 = vmatprep.subr.mxu0 0.0
        %1246 = vmatpush1.msra.mxu0 0.0
        %1247 = vmatprep.subr.mxu0 0.0
        %1248 = vmatpush1.msra.mxu0 0.0
        %1249 = vmatprep.subr.mxu0 0.0
        %1250 = vmatpush1.msra.mxu0 0.0
        %1251 = vmatprep.subr.mxu0 0.0
        %1252 = vmatpush1.msra.mxu0 0.0
        %1253 = vmatprep.subr.mxu0 0.0
        %1254 = vmatpush1.msra.mxu0 0.0
        %1255 = vmatprep.subr.mxu0 0.0
        %1256 = vmatpush1.msra.mxu0 0.0
        %1257 = vmatprep.mubr.f32.mxu0 0.0
        %1258 = vmatmul.mubr.f32.gmra.mrb[0].mxu0 %v1098
        %v1259 = vpop.f32.mrb[0].mxu0
        %v1260 = vadd.f32 0.0, %v1259
        %v1261 = vpop.f32.mrb[0].mxu0
        %1262 = vmatprep.mubr.f32.mxu0 0.0
        %1263 = vmatmul.mubr.f32.gmra.mrb[0].mxu0 %v1101
        %v1264 = vpop.f32.mrb[0].mxu0
        %v1265 = vadd.f32 0.0, %v1264
        %v1266 = vpop.f32.mrb[0].mxu0
        %1267 = vmatprep.mubr.f32.mxu0 0.0
        %1268 = vmatmul.mubr.f32.gmra.mrb[0].mxu0 %v1104
        %v1269 = vpop.f32.mrb[0].mxu0
        %v1270 = vadd.f32 0.0, %v1269
        %v1271 = vpop.f32.mrb[0].mxu0
        %1272 = vmatprep.mubr.f32.mxu0 0.0
        %1273 = vmatmul.mubr.f32.gmra.mrb[0].mxu0 %v1107
        %v1274 = vpop.f32.mrb[0].mxu0
        %v1275 = vadd.f32 0.0, %v1274
        %v1276 = vpop.f32.mrb[0].mxu0
        %1277 = vmatprep.mubr.f32.mxu0 0.0
        %1278 = vmatmul.mubr.f32.gmra.mrb[0].mxu0 %v1110
        %v1279 = vpop.f32.mrb[0].mxu0
        %v1280 = vadd.f32 0.0, %v1279
        %v1281 = vpop.f32.mrb[0].mxu0
        %1282 = vmatprep.mubr.f32.mxu0 0.0
        %1283 = vmatmul.mubr.f32.gmra.mrb[0].mxu0 %v1113
        %v1284 = vpop.f32.mrb[0].mxu0
        %v1285 = vadd.f32 0.0, %v1284
        %v1286 = vpop.f32.mrb[0].mxu0
        %1287 = vmatprep.mubr.f32.mxu0 0.0
        %1288 = vmatmul.mubr.f32.gmra.mrb[0].mxu0 %v1116
        %v1289 = vpop.f32.mrb[0].mxu0
        %v1290 = vadd.f32 0.0, %v1289
        %v1291 = vpop.f32.mrb[0].mxu0
        %1292 = vmatprep.mubr.f32.mxu0 0.0
        %1293 = vmatmul.mubr.f32.gmra.mrb[0].mxu0 %v1119
        %v1294 = vpop.f32.mrb[0].mxu0
        %v1295 = vadd.f32 0.0, %v1294
        %v1296 = vpop.f32.mrb[0].mxu0
        %1297 = vmatprep.mubr.f32.mxu0 0.0
        %1298 = vmatmul.mubr.f32.gmra.mrb[0].mxu0 %v1122
        %v1299 = vpop.f32.mrb[0].mxu0
        %v1300 = vadd.f32 0.0, %v1299
        %v1301 = vpop.f32.mrb[0].mxu0
        %1302 = vmatprep.mubr.f32.mxu0 0.0
        %1303 = vmatmul.mubr.f32.gmra.mrb[0].mxu0 %v1125
        %v1304 = vpop.f32.mrb[0].mxu0
        %v1305 = vadd.f32 0.0, %v1304
        %v1306 = vpop.f32.mrb[0].mxu0
        %1307 = vmatprep.mubr.f32.mxu0 0.0
        %1308 = vmatmul.mubr.f32.gmra.mrb[0].mxu0 %v1128
        %v1309 = vpop.f32.mrb[0].mxu0
        %v1310 = vadd.f32 0.0, %v1309
        %v1311 = vpop.f32.mrb[0].mxu0
        %1312 = vmatprep.mubr.f32.mxu0 0.0
        %1313 = vmatmul.mubr.f32.gmra.mrb[0].mxu0 %v1131
        %v1314 = vpop.f32.mrb[0].mxu0
        %v1315 = vadd.f32 0.0, %v1314
        %v1316 = vpop.f32.mrb[0].mxu0
        %1317 = vmatprep.mubr.f32.mxu0 0.0
        %1318 = vmatmul.mubr.f32.gmra.mrb[0].mxu0 %v1134
        %v1319 = vpop.f32.mrb[0].mxu0
        %v1320 = vadd.f32 0.0, %v1319
        %v1321 = vpop.f32.mrb[0].mxu0
        %1322 = vmatprep.mubr.f32.mxu0 0.0
        %1323 = vmatmul.mubr.f32.gmra.mrb[0].mxu0 %v1137
        %v1324 = vpop.f32.mrb[0].mxu0
        %v1325 = vadd.f32 0.0, %v1324
        %v1326 = vpop.f32.mrb[0].mxu0
        %1327 = vmatprep.mubr.f32.mxu0 0.0
        %1328 = vmatmul.mubr.f32.gmra.mrb[0].mxu0 %v1140
        %v1329 = vpop.f32.mrb[0].mxu0
        %v1330 = vadd.f32 0.0, %v1329
        %v1331 = vpop.f32.mrb[0].mxu0
        %1332 = vmatprep.mubr.f32.mxu0 0.0
        %1333 = vmatmul.mubr.f32.gmra.mrb[0].mxu0 %v1143
        %v1334 = vpop.f32.mrb[0].mxu0
        %v1335 = vadd.f32 0.0, %v1334
        %v1336 = vpop.f32.mrb[0].mxu0
        %1337 = vmatprep.mubr.f32.mxu0 0.0
        %1338 = vmatmul.mubr.f32.gmra.mrb[0].mxu0 %v1146
        %v1339 = vpop.f32.mrb[0].mxu0
        %v1340 = vadd.f32 0.0, %v1339
        %v1341 = vpop.f32.mrb[0].mxu0
        %1342 = vmatprep.mubr.f32.mxu0 0.0
        %1343 = vmatmul.mubr.f32.gmra.mrb[0].mxu0 %v1149
        %v1344 = vpop.f32.mrb[0].mxu0
        %v1345 = vadd.f32 0.0, %v1344
        %v1346 = vpop.f32.mrb[0].mxu0
        %1347 = vmatprep.mubr.f32.mxu0 0.0
        %1348 = vmatmul.mubr.f32.gmra.mrb[0].mxu0 %v1152
        %v1349 = vpop.f32.mrb[0].mxu0
        %v1350 = vadd.f32 0.0, %v1349
        %v1351 = vpop.f32.mrb[0].mxu0
        %1352 = vmatprep.mubr.f32.mxu0 0.0
        %1353 = vmatmul.mubr.f32.gmra.mrb[0].mxu0 %v1155
        %v1354 = vpop.f32.mrb[0].mxu0
        %v1355 = vadd.f32 0.0, %v1354
        %v1356 = vpop.f32.mrb[0].mxu0
        %1357 = vmatprep.mubr.f32.mxu0 0.0
        %1358 = vmatmul.mubr.f32.gmra.mrb[0].mxu0 %v1158
        %v1359 = vpop.f32.mrb[0].mxu0
        %v1360 = vadd.f32 0.0, %v1359
        %v1361 = vpop.f32.mrb[0].mxu0
        %1362 = vmatprep.mubr.f32.mxu0 0.0
        %1363 = vmatmul.mubr.f32.gmra.mrb[0].mxu0 %v1161
        %v1364 = vpop.f32.mrb[0].mxu0
        %v1365 = vadd.f32 0.0, %v1364
        %v1366 = vpop.f32.mrb[0].mxu0
        %1367 = vmatprep.mubr.f32.mxu0 0.0
        %1368 = vmatmul.mubr.f32.gmra.mrb[0].mxu0 %v1164
        %v1369 = vpop.f32.mrb[0].mxu0
        %v1370 = vadd.f32 0.0, %v1369
        %v1371 = vpop.f32.mrb[0].mxu0
        %1372 = vmatprep.mubr.f32.mxu0 0.0
        %1373 = vmatmul.mubr.f32.gmra.mrb[0].mxu0 %v1167
        %v1374 = vpop.f32.mrb[0].mxu0
        %v1375 = vadd.f32 0.0, %v1374
        %v1376 = vpop.f32.mrb[0].mxu0
        %1377 = vmatprep.mubr.f32.mxu0 0.0
        %1378 = vmatmul.mubr.f32.gmra.mrb[0].mxu0 %v1170
        %v1379 = vpop.f32.mrb[0].mxu0
        %v1380 = vadd.f32 0.0, %v1379
        %v1381 = vpop.f32.mrb[0].mxu0
        %1382 = vmatprep.mubr.f32.mxu0 0.0
        %1383 = vmatmul.mubr.f32.gmra.mrb[0].mxu0 %v1173
        %v1384 = vpop.f32.mrb[0].mxu0
        %v1385 = vadd.f32 0.0, %v1384
        %v1386 = vpop.f32.mrb[0].mxu0
        %1387 = vmatprep.mubr.f32.mxu0 0.0
        %1388 = vmatmul.mubr.f32.gmra.mrb[0].mxu0 %v1176
        %v1389 = vpop.f32.mrb[0].mxu0
        %v1390 = vadd.f32 0.0, %v1389
        %v1391 = vpop.f32.mrb[0].mxu0
        %1392 = vmatprep.mubr.f32.mxu0 0.0
        %1393 = vmatmul.mubr.f32.gmra.mrb[0].mxu0 %v1179
        %v1394 = vpop.f32.mrb[0].mxu0
        %v1395 = vadd.f32 0.0, %v1394
        %v1396 = vpop.f32.mrb[0].mxu0
        %1397 = vmatprep.mubr.f32.mxu0 0.0
        %1398 = vmatmul.mubr.f32.gmra.mrb[0].mxu0 %v1182
        %v1399 = vpop.f32.mrb[0].mxu0
        %v1400 = vadd.f32 0.0, %v1399
        %v1401 = vpop.f32.mrb[0].mxu0
        %1402 = vmatprep.mubr.f32.mxu0 0.0
        %1403 = vmatmul.mubr.f32.gmra.mrb[0].mxu0 %v1185
        %v1404 = vpop.f32.mrb[0].mxu0
        %v1405 = vadd.f32 0.0, %v1404
        %v1406 = vpop.f32.mrb[0].mxu0
        %1407 = vmatprep.mubr.f32.mxu0 0.0
        %1408 = vmatmul.mubr.f32.gmra.mrb[0].mxu0 %v1188
        %v1409 = vpop.f32.mrb[0].mxu0
        %v1410 = vadd.f32 0.0, %v1409
        %v1411 = vpop.f32.mrb[0].mxu0
        %1412 = vmatprep.mubr.f32.mxu0 0.0
        %1413 = vmatmul.mubr.f32.gmra.mrb[0].mxu0 %v1191
        %v1414 = vpop.f32.mrb[0].mxu0
        %v1415 = vadd.f32 0.0, %v1414
        %v1416 = vpop.f32.mrb[0].mxu0
        %1417 = vdwg.mxu0
        %v1418 = vadd.f32 %v907, %v1260
        %v1419 = vadd.f32 %v912, %v1265
        %v1420 = vadd.f32 %v917, %v1270
        %v1421 = vadd.f32 %v922, %v1275
        %v1422 = vadd.f32 %v927, %v1280
        %v1423 = vadd.f32 %v932, %v1285
        %v1424 = vadd.f32 %v937, %v1290
        %v1425 = vadd.f32 %v942, %v1295
        %v1426 = vadd.f32 %v947, %v1300
        %v1427 = vadd.f32 %v952, %v1305
        %v1428 = vadd.f32 %v957, %v1310
        %v1429 = vadd.f32 %v962, %v1315
        %v1430 = vadd.f32 %v967, %v1320
        %v1431 = vadd.f32 %v972, %v1325
        %v1432 = vadd.f32 %v977, %v1330
        %v1433 = vadd.f32 %v982, %v1335
        %v1434 = vadd.f32 %v987, %v1340
        %v1435 = vadd.f32 %v992, %v1345
        %v1436 = vadd.f32 %v997, %v1350
        %v1437 = vadd.f32 %v1002, %v1355
        %v1438 = vadd.f32 %v1007, %v1360
        %v1439 = vadd.f32 %v1012, %v1365
        %v1440 = vadd.f32 %v1017, %v1370
        %v1441 = vadd.f32 %v1022, %v1375
        %v1442 = vadd.f32 %v1027, %v1380
        %v1443 = vadd.f32 %v1032, %v1385
        %v1444 = vadd.f32 %v1037, %v1390
        %v1445 = vadd.f32 %v1042, %v1395
        %v1446 = vadd.f32 %v1047, %v1400
        %v1447 = vadd.f32 %v1052, %v1405
        %v1448 = vadd.f32 %v1057, %v1410
        %v1449 = vadd.f32 %v1062, %v1415
        %s1450 = scalar_lea.vmem [#allocation2], 24
        %v1451 = vld [vmem:[%s1450] sm:$0xff]
        %v1452 = vld [vmem:[%s1450 + $0x8] sm:$0xff]
        %v1453 = vld [vmem:[%s1450 + $0x18] sm:$0xff]
        %v1454 = vld [vmem:[%s1450 + $0x20] sm:$0xff]
        %v1455 = vld [vmem:[%s1450 + $0x30] sm:$0xff]
        %v1456 = vld [vmem:[%s1450 + $0x38] sm:$0xff]
        %v1457 = vld [vmem:[%s1450 + $0x48] sm:$0xff]
        %v1458 = vld [vmem:[%s1450 + $0x50] sm:$0xff]
        %v1459 = vld [vmem:[%s1450 + $0x60] sm:$0xff]
        %v1460 = vld [vmem:[%s1450 + $0x68] sm:$0xff]
        %v1461 = vld [vmem:[%s1450 + $0x78] sm:$0xff]
        %v1462 = vld [vmem:[%s1450 + $0x80] sm:$0xff]
        %v1463 = vld [vmem:[%s1450 + $0x90] sm:$0xff]
        %v1464 = vld [vmem:[%s1450 + $0x98] sm:$0xff]
        %v1465 = vld [vmem:[%s1450 + $0xa8] sm:$0xff]
        %v1466 = vld [vmem:[%s1450 + $0xb0] sm:$0xff]
        %v1467 = vld [vmem:[%s1450 + $0xc0] sm:$0xff]
        %v1468 = vld [vmem:[%s1450 + $0xc8] sm:$0xff]
        %v1469 = vld [vmem:[%s1450 + $0xd8] sm:$0xff]
        %v1470 = vld [vmem:[%s1450 + $0xe0] sm:$0xff]
        %v1471 = vld [vmem:[%s1450 + $0xf0] sm:$0xff]
        %v1472 = vld [vmem:[%s1450 + $0xf8] sm:$0xff]
        %v1473 = vld [vmem:[%s1450 + $0x108] sm:$0xff]
        %v1474 = vld [vmem:[%s1450 + $0x110] sm:$0xff]
        %v1475 = vld [vmem:[%s1450 + $0x120] sm:$0xff]
        %v1476 = vld [vmem:[%s1450 + $0x128] sm:$0xff]
        %v1477 = vld [vmem:[%s1450 + $0x138] sm:$0xff]
        %v1478 = vld [vmem:[%s1450 + $0x140] sm:$0xff]
        %v1479 = vld [vmem:[%s1450 + $0x150] sm:$0xff]
        %v1480 = vld [vmem:[%s1450 + $0x158] sm:$0xff]
        %v1481 = vld [vmem:[%s1450 + $0x168] sm:$0xff]
        %v1482 = vld [vmem:[%s1450 + $0x170] sm:$0xff]
        %v1484 = vsel %vm422, %v1451, 0
        %v1487 = vsel %vm422, %v1452, 0
        %v1490 = vsel %vm422, %v1453, 0
        %v1493 = vsel %vm422, %v1454, 0
        %v1496 = vsel %vm422, %v1455, 0
        %v1499 = vsel %vm422, %v1456, 0
        %v1502 = vsel %vm422, %v1457, 0
        %v1505 = vsel %vm422, %v1458, 0
        %v1508 = vsel %vm422, %v1459, 0
        %v1511 = vsel %vm422, %v1460, 0
        %v1514 = vsel %vm422, %v1461, 0
        %v1517 = vsel %vm422, %v1462, 0
        %v1520 = vsel %vm422, %v1463, 0
        %v1523 = vsel %vm422, %v1464, 0
        %v1526 = vsel %vm422, %v1465, 0
        %v1529 = vsel %vm422, %v1466, 0
        %v1532 = vsel %vm422, %v1467, 0
        %v1535 = vsel %vm422, %v1468, 0
        %v1538 = vsel %vm422, %v1469, 0
        %v1541 = vsel %vm422, %v1470, 0
        %v1544 = vsel %vm422, %v1471, 0
        %v1547 = vsel %vm422, %v1472, 0
        %v1550 = vsel %vm422, %v1473, 0
        %v1553 = vsel %vm422, %v1474, 0
        %v1556 = vsel %vm422, %v1475, 0
        %v1559 = vsel %vm422, %v1476, 0
        %v1562 = vsel %vm422, %v1477, 0
        %v1565 = vsel %vm422, %v1478, 0
        %v1568 = vsel %vm422, %v1479, 0
        %v1571 = vsel %vm422, %v1480, 0
        %v1574 = vsel %vm422, %v1481, 0
        %v1577 = vsel %vm422, %v1482, 0
        %1579 = vmatprep.subr.mxu0 0.0
        %1580 = vmatpush1.msra.mxu0 %v346
        %1581 = vmatprep.subr.mxu0 0.0
        %1582 = vmatpush1.msra.mxu0 %v347
        %1583 = vmatprep.subr.mxu0 0.0
        %1584 = vmatpush1.msra.mxu0 0.0
        %1585 = vmatprep.subr.mxu0 0.0
        %1586 = vmatpush1.msra.mxu0 0.0
        %1587 = vmatprep.subr.mxu0 0.0
        %1588 = vmatpush1.msra.mxu0 0.0
        %1589 = vmatprep.subr.mxu0 0.0
        %1590 = vmatpush1.msra.mxu0 0.0
        %1591 = vmatprep.subr.mxu0 0.0
        %1592 = vmatpush1.msra.mxu0 0.0
        %1593 = vmatprep.subr.mxu0 0.0
        %1594 = vmatpush1.msra.mxu0 0.0
        %1595 = vmatprep.subr.mxu0 0.0
        %1596 = vmatpush1.msra.mxu0 0.0
        %1597 = vmatprep.subr.mxu0 0.0
        %1598 = vmatpush1.msra.mxu0 0.0
        %1599 = vmatprep.subr.mxu0 0.0
        %1600 = vmatpush1.msra.mxu0 0.0
        %1601 = vmatprep.subr.mxu0 0.0
        %1602 = vmatpush1.msra.mxu0 0.0
        %1603 = vmatprep.subr.mxu0 0.0
        %1604 = vmatpush1.msra.mxu0 0.0
        %1605 = vmatprep.subr.mxu0 0.0
        %1606 = vmatpush1.msra.mxu0 0.0
        %1607 = vmatprep.subr.mxu0 0.0
        %1608 = vmatpush1.msra.mxu0 0.0
        %1609 = vmatprep.subr.mxu0 0.0
        %1610 = vmatpush1.msra.mxu0 0.0
        %1611 = vmatprep.subr.mxu0 0.0
        %1612 = vmatpush1.msra.mxu0 0.0
        %1613 = vmatprep.subr.mxu0 0.0
        %1614 = vmatpush1.msra.mxu0 0.0
        %1615 = vmatprep.subr.mxu0 0.0
        %1616 = vmatpush1.msra.mxu0 0.0
        %1617 = vmatprep.subr.mxu0 0.0
        %1618 = vmatpush1.msra.mxu0 0.0
        %1619 = vmatprep.subr.mxu0 0.0
        %1620 = vmatpush1.msra.mxu0 0.0
        %1621 = vmatprep.subr.mxu0 0.0
        %1622 = vmatpush1.msra.mxu0 0.0
        %1623 = vmatprep.subr.mxu0 0.0
        %1624 = vmatpush1.msra.mxu0 0.0
        %1625 = vmatprep.subr.mxu0 0.0
        %1626 = vmatpush1.msra.mxu0 0.0
        %1627 = vmatprep.subr.mxu0 0.0
        %1628 = vmatpush1.msra.mxu0 0.0
        %1629 = vmatprep.subr.mxu0 0.0
        %1630 = vmatpush1.msra.mxu0 0.0
        %1631 = vmatprep.subr.mxu0 0.0
        %1632 = vmatpush1.msra.mxu0 0.0
        %1633 = vmatprep.subr.mxu0 0.0
        %1634 = vmatpush1.msra.mxu0 0.0
        %1635 = vmatprep.subr.mxu0 0.0
        %1636 = vmatpush1.msra.mxu0 0.0
        %1637 = vmatprep.subr.mxu0 0.0
        %1638 = vmatpush1.msra.mxu0 0.0
        %1639 = vmatprep.subr.mxu0 0.0
        %1640 = vmatpush1.msra.mxu0 0.0
        %1641 = vmatprep.subr.mxu0 0.0
        %1642 = vmatpush1.msra.mxu0 0.0
        %1643 = vmatprep.mubr.f32.mxu0 0.0
        %1644 = vmatmul.mubr.f32.gmra.mrb[0].mxu0 %v1484
        %v1645 = vpop.f32.mrb[0].mxu0
        %v1646 = vadd.f32 0.0, %v1645
        %v1647 = vpop.f32.mrb[0].mxu0
        %1648 = vmatprep.mubr.f32.mxu0 0.0
        %1649 = vmatmul.mubr.f32.gmra.mrb[0].mxu0 %v1487
        %v1650 = vpop.f32.mrb[0].mxu0
        %v1651 = vadd.f32 0.0, %v1650
        %v1652 = vpop.f32.mrb[0].mxu0
        %1653 = vmatprep.mubr.f32.mxu0 0.0
        %1654 = vmatmul.mubr.f32.gmra.mrb[0].mxu0 %v1490
        %v1655 = vpop.f32.mrb[0].mxu0
        %v1656 = vadd.f32 0.0, %v1655
        %v1657 = vpop.f32.mrb[0].mxu0
        %1658 = vmatprep.mubr.f32.mxu0 0.0
        %1659 = vmatmul.mubr.f32.gmra.mrb[0].mxu0 %v1493
        %v1660 = vpop.f32.mrb[0].mxu0
        %v1661 = vadd.f32 0.0, %v1660
        %v1662 = vpop.f32.mrb[0].mxu0
        %1663 = vmatprep.mubr.f32.mxu0 0.0
        %1664 = vmatmul.mubr.f32.gmra.mrb[0].mxu0 %v1496
        %v1665 = vpop.f32.mrb[0].mxu0
        %v1666 = vadd.f32 0.0, %v1665
        %v1667 = vpop.f32.mrb[0].mxu0
        %1668 = vmatprep.mubr.f32.mxu0 0.0
        %1669 = vmatmul.mubr.f32.gmra.mrb[0].mxu0 %v1499
        %v1670 = vpop.f32.mrb[0].mxu0
        %v1671 = vadd.f32 0.0, %v1670
        %v1672 = vpop.f32.mrb[0].mxu0
        %1673 = vmatprep.mubr.f32.mxu0 0.0
        %1674 = vmatmul.mubr.f32.gmra.mrb[0].mxu0 %v1502
        %v1675 = vpop.f32.mrb[0].mxu0
        %v1676 = vadd.f32 0.0, %v1675
        %v1677 = vpop.f32.mrb[0].mxu0
        %1678 = vmatprep.mubr.f32.mxu0 0.0
        %1679 = vmatmul.mubr.f32.gmra.mrb[0].mxu0 %v1505
        %v1680 = vpop.f32.mrb[0].mxu0
        %v1681 = vadd.f32 0.0, %v1680
        %v1682 = vpop.f32.mrb[0].mxu0
        %1683 = vmatprep.mubr.f32.mxu0 0.0
        %1684 = vmatmul.mubr.f32.gmra.mrb[0].mxu0 %v1508
        %v1685 = vpop.f32.mrb[0].mxu0
        %v1686 = vadd.f32 0.0, %v1685
        %v1687 = vpop.f32.mrb[0].mxu0
        %1688 = vmatprep.mubr.f32.mxu0 0.0
        %1689 = vmatmul.mubr.f32.gmra.mrb[0].mxu0 %v1511
        %v1690 = vpop.f32.mrb[0].mxu0
        %v1691 = vadd.f32 0.0, %v1690
        %v1692 = vpop.f32.mrb[0].mxu0
        %1693 = vmatprep.mubr.f32.mxu0 0.0
        %1694 = vmatmul.mubr.f32.gmra.mrb[0].mxu0 %v1514
        %v1695 = vpop.f32.mrb[0].mxu0
        %v1696 = vadd.f32 0.0, %v1695
        %v1697 = vpop.f32.mrb[0].mxu0
        %1698 = vmatprep.mubr.f32.mxu0 0.0
        %1699 = vmatmul.mubr.f32.gmra.mrb[0].mxu0 %v1517
        %v1700 = vpop.f32.mrb[0].mxu0
        %v1701 = vadd.f32 0.0, %v1700
        %v1702 = vpop.f32.mrb[0].mxu0
        %1703 = vmatprep.mubr.f32.mxu0 0.0
        %1704 = vmatmul.mubr.f32.gmra.mrb[0].mxu0 %v1520
        %v1705 = vpop.f32.mrb[0].mxu0
        %v1706 = vadd.f32 0.0, %v1705
        %v1707 = vpop.f32.mrb[0].mxu0
        %1708 = vmatprep.mubr.f32.mxu0 0.0
        %1709 = vmatmul.mubr.f32.gmra.mrb[0].mxu0 %v1523
        %v1710 = vpop.f32.mrb[0].mxu0
        %v1711 = vadd.f32 0.0, %v1710
        %v1712 = vpop.f32.mrb[0].mxu0
        %1713 = vmatprep.mubr.f32.mxu0 0.0
        %1714 = vmatmul.mubr.f32.gmra.mrb[0].mxu0 %v1526
        %v1715 = vpop.f32.mrb[0].mxu0
        %v1716 = vadd.f32 0.0, %v1715
        %v1717 = vpop.f32.mrb[0].mxu0
        %1718 = vmatprep.mubr.f32.mxu0 0.0
        %1719 = vmatmul.mubr.f32.gmra.mrb[0].mxu0 %v1529
        %v1720 = vpop.f32.mrb[0].mxu0
        %v1721 = vadd.f32 0.0, %v1720
        %v1722 = vpop.f32.mrb[0].mxu0
        %1723 = vmatprep.mubr.f32.mxu0 0.0
        %1724 = vmatmul.mubr.f32.gmra.mrb[0].mxu0 %v1532
        %v1725 = vpop.f32.mrb[0].mxu0
        %v1726 = vadd.f32 0.0, %v1725
        %v1727 = vpop.f32.mrb[0].mxu0
        %1728 = vmatprep.mubr.f32.mxu0 0.0
        %1729 = vmatmul.mubr.f32.gmra.mrb[0].mxu0 %v1535
        %v1730 = vpop.f32.mrb[0].mxu0
        %v1731 = vadd.f32 0.0, %v1730
        %v1732 = vpop.f32.mrb[0].mxu0
        %1733 = vmatprep.mubr.f32.mxu0 0.0
        %1734 = vmatmul.mubr.f32.gmra.mrb[0].mxu0 %v1538
        %v1735 = vpop.f32.mrb[0].mxu0
        %v1736 = vadd.f32 0.0, %v1735
        %v1737 = vpop.f32.mrb[0].mxu0
        %1738 = vmatprep.mubr.f32.mxu0 0.0
        %1739 = vmatmul.mubr.f32.gmra.mrb[0].mxu0 %v1541
        %v1740 = vpop.f32.mrb[0].mxu0
        %v1741 = vadd.f32 0.0, %v1740
        %v1742 = vpop.f32.mrb[0].mxu0
        %1743 = vmatprep.mubr.f32.mxu0 0.0
        %1744 = vmatmul.mubr.f32.gmra.mrb[0].mxu0 %v1544
        %v1745 = vpop.f32.mrb[0].mxu0
        %v1746 = vadd.f32 0.0, %v1745
        %v1747 = vpop.f32.mrb[0].mxu0
        %1748 = vmatprep.mubr.f32.mxu0 0.0
        %1749 = vmatmul.mubr.f32.gmra.mrb[0].mxu0 %v1547
        %v1750 = vpop.f32.mrb[0].mxu0
        %v1751 = vadd.f32 0.0, %v1750
        %v1752 = vpop.f32.mrb[0].mxu0
        %1753 = vmatprep.mubr.f32.mxu0 0.0
        %1754 = vmatmul.mubr.f32.gmra.mrb[0].mxu0 %v1550
        %v1755 = vpop.f32.mrb[0].mxu0
        %v1756 = vadd.f32 0.0, %v1755
        %v1757 = vpop.f32.mrb[0].mxu0
        %1758 = vmatprep.mubr.f32.mxu0 0.0
        %1759 = vmatmul.mubr.f32.gmra.mrb[0].mxu0 %v1553
        %v1760 = vpop.f32.mrb[0].mxu0
        %v1761 = vadd.f32 0.0, %v1760
        %v1762 = vpop.f32.mrb[0].mxu0
        %1763 = vmatprep.mubr.f32.mxu0 0.0
        %1764 = vmatmul.mubr.f32.gmra.mrb[0].mxu0 %v1556
        %v1765 = vpop.f32.mrb[0].mxu0
        %v1766 = vadd.f32 0.0, %v1765
        %v1767 = vpop.f32.mrb[0].mxu0
        %1768 = vmatprep.mubr.f32.mxu0 0.0
        %1769 = vmatmul.mubr.f32.gmra.mrb[0].mxu0 %v1559
        %v1770 = vpop.f32.mrb[0].mxu0
        %v1771 = vadd.f32 0.0, %v1770
        %v1772 = vpop.f32.mrb[0].mxu0
        %1773 = vmatprep.mubr.f32.mxu0 0.0
        %1774 = vmatmul.mubr.f32.gmra.mrb[0].mxu0 %v1562
        %v1775 = vpop.f32.mrb[0].mxu0
        %v1776 = vadd.f32 0.0, %v1775
        %v1777 = vpop.f32.mrb[0].mxu0
        %1778 = vmatprep.mubr.f32.mxu0 0.0
        %1779 = vmatmul.mubr.f32.gmra.mrb[0].mxu0 %v1565
        %v1780 = vpop.f32.mrb[0].mxu0
        %v1781 = vadd.f32 0.0, %v1780
        %v1782 = vpop.f32.mrb[0].mxu0
        %1783 = vmatprep.mubr.f32.mxu0 0.0
        %1784 = vmatmul.mubr.f32.gmra.mrb[0].mxu0 %v1568
        %v1785 = vpop.f32.mrb[0].mxu0
        %v1786 = vadd.f32 0.0, %v1785
        %v1787 = vpop.f32.mrb[0].mxu0
        %1788 = vmatprep.mubr.f32.mxu0 0.0
        %1789 = vmatmul.mubr.f32.gmra.mrb[0].mxu0 %v1571
        %v1790 = vpop.f32.mrb[0].mxu0
        %v1791 = vadd.f32 0.0, %v1790
        %v1792 = vpop.f32.mrb[0].mxu0
        %1793 = vmatprep.mubr.f32.mxu0 0.0
        %1794 = vmatmul.mubr.f32.gmra.mrb[0].mxu0 %v1574
        %v1795 = vpop.f32.mrb[0].mxu0
        %v1796 = vadd.f32 0.0, %v1795
        %v1797 = vpop.f32.mrb[0].mxu0
        %1798 = vmatprep.mubr.f32.mxu0 0.0
        %1799 = vmatmul.mubr.f32.gmra.mrb[0].mxu0 %v1577
        %v1800 = vpop.f32.mrb[0].mxu0
        %v1801 = vadd.f32 0.0, %v1800
        %v1802 = vpop.f32.mrb[0].mxu0
        %1803 = vdwg.mxu0
        %v1804 = vadd.f32 %v1418, %v1646
        %v1805 = vadd.f32 %v1419, %v1651
        %v1806 = vadd.f32 %v1420, %v1656
        %v1807 = vadd.f32 %v1421, %v1661
        %v1808 = vadd.f32 %v1422, %v1666
        %v1809 = vadd.f32 %v1423, %v1671
        %v1810 = vadd.f32 %v1424, %v1676
        %v1811 = vadd.f32 %v1425, %v1681
        %v1812 = vadd.f32 %v1426, %v1686
        %v1813 = vadd.f32 %v1427, %v1691
        %v1814 = vadd.f32 %v1428, %v1696
        %v1815 = vadd.f32 %v1429, %v1701
        %v1816 = vadd.f32 %v1430, %v1706
        %v1817 = vadd.f32 %v1431, %v1711
        %v1818 = vadd.f32 %v1432, %v1716
        %v1819 = vadd.f32 %v1433, %v1721
        %v1820 = vadd.f32 %v1434, %v1726
        %v1821 = vadd.f32 %v1435, %v1731
        %v1822 = vadd.f32 %v1436, %v1736
        %v1823 = vadd.f32 %v1437, %v1741
        %v1824 = vadd.f32 %v1438, %v1746
        %v1825 = vadd.f32 %v1439, %v1751
        %v1826 = vadd.f32 %v1440, %v1756
        %v1827 = vadd.f32 %v1441, %v1761
        %v1828 = vadd.f32 %v1442, %v1766
        %v1829 = vadd.f32 %v1443, %v1771
        %v1830 = vadd.f32 %v1444, %v1776
        %v1831 = vadd.f32 %v1445, %v1781
        %v1832 = vadd.f32 %v1446, %v1786
        %v1833 = vadd.f32 %v1447, %v1791
        %v1834 = vadd.f32 %v1448, %v1796
        %v1835 = vadd.f32 %v1449, %v1801
        %v1836 = vld [vmem:[%s1450 + $0x1] sm:$0xff]
        %v1837 = vld [vmem:[%s1450 + $0x9] sm:$0xff]
        %v1838 = vld [vmem:[%s1450 + $0x19] sm:$0xff]
        %v1839 = vld [vmem:[%s1450 + $0x21] sm:$0xff]
        %v1840 = vld [vmem:[%s1450 + $0x31] sm:$0xff]
        %v1841 = vld [vmem:[%s1450 + $0x39] sm:$0xff]
        %v1842 = vld [vmem:[%s1450 + $0x49] sm:$0xff]
        %v1843 = vld [vmem:[%s1450 + $0x51] sm:$0xff]
        %v1844 = vld [vmem:[%s1450 + $0x61] sm:$0xff]
        %v1845 = vld [vmem:[%s1450 + $0x69] sm:$0xff]
        %v1846 = vld [vmem:[%s1450 + $0x79] sm:$0xff]
        %v1847 = vld [vmem:[%s1450 + $0x81] sm:$0xff]
        %v1848 = vld [vmem:[%s1450 + $0x91] sm:$0xff]
        %v1849 = vld [vmem:[%s1450 + $0x99] sm:$0xff]
        %v1850 = vld [vmem:[%s1450 + $0xa9] sm:$0xff]
        %v1851 = vld [vmem:[%s1450 + $0xb1] sm:$0xff]
        %v1852 = vld [vmem:[%s1450 + $0xc1] sm:$0xff]
        %v1853 = vld [vmem:[%s1450 + $0xc9] sm:$0xff]
        %v1854 = vld [vmem:[%s1450 + $0xd9] sm:$0xff]
        %v1855 = vld [vmem:[%s1450 + $0xe1] sm:$0xff]
        %v1856 = vld [vmem:[%s1450 + $0xf1] sm:$0xff]
        %v1857 = vld [vmem:[%s1450 + $0xf9] sm:$0xff]
        %v1858 = vld [vmem:[%s1450 + $0x109] sm:$0xff]
        %v1859 = vld [vmem:[%s1450 + $0x111] sm:$0xff]
        %v1860 = vld [vmem:[%s1450 + $0x121] sm:$0xff]
        %v1861 = vld [vmem:[%s1450 + $0x129] sm:$0xff]
        %v1862 = vld [vmem:[%s1450 + $0x139] sm:$0xff]
        %v1863 = vld [vmem:[%s1450 + $0x141] sm:$0xff]
        %v1864 = vld [vmem:[%s1450 + $0x151] sm:$0xff]
        %v1865 = vld [vmem:[%s1450 + $0x159] sm:$0xff]
        %v1866 = vld [vmem:[%s1450 + $0x169] sm:$0xff]
        %v1867 = vld [vmem:[%s1450 + $0x171] sm:$0xff]
        %v1869 = vsel %vm422, %v1836, 0
        %v1872 = vsel %vm422, %v1837, 0
        %v1875 = vsel %vm422, %v1838, 0
        %v1878 = vsel %vm422, %v1839, 0
        %v1881 = vsel %vm422, %v1840, 0
        %v1884 = vsel %vm422, %v1841, 0
        %v1887 = vsel %vm422, %v1842, 0
        %v1890 = vsel %vm422, %v1843, 0
        %v1893 = vsel %vm422, %v1844, 0
        %v1896 = vsel %vm422, %v1845, 0
        %v1899 = vsel %vm422, %v1846, 0
        %v1902 = vsel %vm422, %v1847, 0
        %v1905 = vsel %vm422, %v1848, 0
        %v1908 = vsel %vm422, %v1849, 0
        %v1911 = vsel %vm422, %v1850, 0
        %v1914 = vsel %vm422, %v1851, 0
        %v1917 = vsel %vm422, %v1852, 0
        %v1920 = vsel %vm422, %v1853, 0
        %v1923 = vsel %vm422, %v1854, 0
        %v1926 = vsel %vm422, %v1855, 0
        %v1929 = vsel %vm422, %v1856, 0
        %v1932 = vsel %vm422, %v1857, 0
        %v1935 = vsel %vm422, %v1858, 0
        %v1938 = vsel %vm422, %v1859, 0
        %v1941 = vsel %vm422, %v1860, 0
        %v1944 = vsel %vm422, %v1861, 0
        %v1947 = vsel %vm422, %v1862, 0
        %v1950 = vsel %vm422, %v1863, 0
        %v1953 = vsel %vm422, %v1864, 0
        %v1956 = vsel %vm422, %v1865, 0
        %v1959 = vsel %vm422, %v1866, 0
        %v1962 = vsel %vm422, %v1867, 0
        %1964 = vmatprep.subr.mxu0 0.0
        %1965 = vmatpush1.msra.mxu0 %v348
        %1966 = vmatprep.subr.mxu0 0.0
        %1967 = vmatpush1.msra.mxu0 %v349
        %1968 = vmatprep.subr.mxu0 0.0
        %1969 = vmatpush1.msra.mxu0 0.0
        %1970 = vmatprep.subr.mxu0 0.0
        %1971 = vmatpush1.msra.mxu0 0.0
        %1972 = vmatprep.subr.mxu0 0.0
        %1973 = vmatpush1.msra.mxu0 0.0
        %1974 = vmatprep.subr.mxu0 0.0
        %1975 = vmatpush1.msra.mxu0 0.0
        %1976 = vmatprep.subr.mxu0 0.0
        %1977 = vmatpush1.msra.mxu0 0.0
        %1978 = vmatprep.subr.mxu0 0.0
        %1979 = vmatpush1.msra.mxu0 0.0
        %1980 = vmatprep.subr.mxu0 0.0
        %1981 = vmatpush1.msra.mxu0 0.0
        %1982 = vmatprep.subr.mxu0 0.0
        %1983 = vmatpush1.msra.mxu0 0.0
        %1984 = vmatprep.subr.mxu0 0.0
        %1985 = vmatpush1.msra.mxu0 0.0
        %1986 = vmatprep.subr.mxu0 0.0
        %1987 = vmatpush1.msra.mxu0 0.0
        %1988 = vmatprep.subr.mxu0 0.0
        %1989 = vmatpush1.msra.mxu0 0.0
        %1990 = vmatprep.subr.mxu0 0.0
        %1991 = vmatpush1.msra.mxu0 0.0
        %1992 = vmatprep.subr.mxu0 0.0
        %1993 = vmatpush1.msra.mxu0 0.0
        %1994 = vmatprep.subr.mxu0 0.0
        %1995 = vmatpush1.msra.mxu0 0.0
        %1996 = vmatprep.subr.mxu0 0.0
        %1997 = vmatpush1.msra.mxu0 0.0
        %1998 = vmatprep.subr.mxu0 0.0
        %1999 = vmatpush1.msra.mxu0 0.0
        %2000 = vmatprep.subr.mxu0 0.0
        %2001 = vmatpush1.msra.mxu0 0.0
        %2002 = vmatprep.subr.mxu0 0.0
        %2003 = vmatpush1.msra.mxu0 0.0
        %2004 = vmatprep.subr.mxu0 0.0
        %2005 = vmatpush1.msra.mxu0 0.0
        %2006 = vmatprep.subr.mxu0 0.0
        %2007 = vmatpush1.msra.mxu0 0.0
        %2008 = vmatprep.subr.mxu0 0.0
        %2009 = vmatpush1.msra.mxu0 0.0
        %2010 = vmatprep.subr.mxu0 0.0
        %2011 = vmatpush1.msra.mxu0 0.0
        %2012 = vmatprep.subr.mxu0 0.0
        %2013 = vmatpush1.msra.mxu0 0.0
        %2014 = vmatprep.subr.mxu0 0.0
        %2015 = vmatpush1.msra.mxu0 0.0
        %2016 = vmatprep.subr.mxu0 0.0
        %2017 = vmatpush1.msra.mxu0 0.0
        %2018 = vmatprep.subr.mxu0 0.0
        %2019 = vmatpush1.msra.mxu0 0.0
        %2020 = vmatprep.subr.mxu0 0.0
        %2021 = vmatpush1.msra.mxu0 0.0
        %2022 = vmatprep.subr.mxu0 0.0
        %2023 = vmatpush1.msra.mxu0 0.0
        %2024 = vmatprep.subr.mxu0 0.0
        %2025 = vmatpush1.msra.mxu0 0.0
        %2026 = vmatprep.subr.mxu0 0.0
        %2027 = vmatpush1.msra.mxu0 0.0
        %2028 = vmatprep.mubr.f32.mxu0 0.0
        %2029 = vmatmul.mubr.f32.gmra.mrb[0].mxu0 %v1869
        %v2030 = vpop.f32.mrb[0].mxu0
        %v2031 = vadd.f32 0.0, %v2030
        %v2032 = vpop.f32.mrb[0].mxu0
        %2033 = vmatprep.mubr.f32.mxu0 0.0
        %2034 = vmatmul.mubr.f32.gmra.mrb[0].mxu0 %v1872
        %v2035 = vpop.f32.mrb[0].mxu0
        %v2036 = vadd.f32 0.0, %v2035
        %v2037 = vpop.f32.mrb[0].mxu0
        %2038 = vmatprep.mubr.f32.mxu0 0.0
        %2039 = vmatmul.mubr.f32.gmra.mrb[0].mxu0 %v1875
        %v2040 = vpop.f32.mrb[0].mxu0
        %v2041 = vadd.f32 0.0, %v2040
        %v2042 = vpop.f32.mrb[0].mxu0
        %2043 = vmatprep.mubr.f32.mxu0 0.0
        %2044 = vmatmul.mubr.f32.gmra.mrb[0].mxu0 %v1878
        %v2045 = vpop.f32.mrb[0].mxu0
        %v2046 = vadd.f32 0.0, %v2045
        %v2047 = vpop.f32.mrb[0].mxu0
        %2048 = vmatprep.mubr.f32.mxu0 0.0
        %2049 = vmatmul.mubr.f32.gmra.mrb[0].mxu0 %v1881
        %v2050 = vpop.f32.mrb[0].mxu0
        %v2051 = vadd.f32 0.0, %v2050
        %v2052 = vpop.f32.mrb[0].mxu0
        %2053 = vmatprep.mubr.f32.mxu0 0.0
        %2054 = vmatmul.mubr.f32.gmra.mrb[0].mxu0 %v1884
        %v2055 = vpop.f32.mrb[0].mxu0
        %v2056 = vadd.f32 0.0, %v2055
        %v2057 = vpop.f32.mrb[0].mxu0
        %2058 = vmatprep.mubr.f32.mxu0 0.0
        %2059 = vmatmul.mubr.f32.gmra.mrb[0].mxu0 %v1887
        %v2060 = vpop.f32.mrb[0].mxu0
        %v2061 = vadd.f32 0.0, %v2060
        %v2062 = vpop.f32.mrb[0].mxu0
        %2063 = vmatprep.mubr.f32.mxu0 0.0
        %2064 = vmatmul.mubr.f32.gmra.mrb[0].mxu0 %v1890
        %v2065 = vpop.f32.mrb[0].mxu0
        %v2066 = vadd.f32 0.0, %v2065
        %v2067 = vpop.f32.mrb[0].mxu0
        %2068 = vmatprep.mubr.f32.mxu0 0.0
        %2069 = vmatmul.mubr.f32.gmra.mrb[0].mxu0 %v1893
        %v2070 = vpop.f32.mrb[0].mxu0
        %v2071 = vadd.f32 0.0, %v2070
        %v2072 = vpop.f32.mrb[0].mxu0
        %2073 = vmatprep.mubr.f32.mxu0 0.0
        %2074 = vmatmul.mubr.f32.gmra.mrb[0].mxu0 %v1896
        %v2075 = vpop.f32.mrb[0].mxu0
        %v2076 = vadd.f32 0.0, %v2075
        %v2077 = vpop.f32.mrb[0].mxu0
        %2078 = vmatprep.mubr.f32.mxu0 0.0
        %2079 = vmatmul.mubr.f32.gmra.mrb[0].mxu0 %v1899
        %v2080 = vpop.f32.mrb[0].mxu0
        %v2081 = vadd.f32 0.0, %v2080
        %v2082 = vpop.f32.mrb[0].mxu0
        %2083 = vmatprep.mubr.f32.mxu0 0.0
        %2084 = vmatmul.mubr.f32.gmra.mrb[0].mxu0 %v1902
        %v2085 = vpop.f32.mrb[0].mxu0
        %v2086 = vadd.f32 0.0, %v2085
        %v2087 = vpop.f32.mrb[0].mxu0
        %2088 = vmatprep.mubr.f32.mxu0 0.0
        %2089 = vmatmul.mubr.f32.gmra.mrb[0].mxu0 %v1905
        %v2090 = vpop.f32.mrb[0].mxu0
        %v2091 = vadd.f32 0.0, %v2090
        %v2092 = vpop.f32.mrb[0].mxu0
        %2093 = vmatprep.mubr.f32.mxu0 0.0
        %2094 = vmatmul.mubr.f32.gmra.mrb[0].mxu0 %v1908
        %v2095 = vpop.f32.mrb[0].mxu0
        %v2096 = vadd.f32 0.0, %v2095
        %v2097 = vpop.f32.mrb[0].mxu0
        %2098 = vmatprep.mubr.f32.mxu0 0.0
        %2099 = vmatmul.mubr.f32.gmra.mrb[0].mxu0 %v1911
        %v2100 = vpop.f32.mrb[0].mxu0
        %v2101 = vadd.f32 0.0, %v2100
        %v2102 = vpop.f32.mrb[0].mxu0
        %2103 = vmatprep.mubr.f32.mxu0 0.0
        %2104 = vmatmul.mubr.f32.gmra.mrb[0].mxu0 %v1914
        %v2105 = vpop.f32.mrb[0].mxu0
        %v2106 = vadd.f32 0.0, %v2105
        %v2107 = vpop.f32.mrb[0].mxu0
        %2108 = vmatprep.mubr.f32.mxu0 0.0
        %2109 = vmatmul.mubr.f32.gmra.mrb[0].mxu0 %v1917
        %v2110 = vpop.f32.mrb[0].mxu0
        %v2111 = vadd.f32 0.0, %v2110
        %v2112 = vpop.f32.mrb[0].mxu0
        %2113 = vmatprep.mubr.f32.mxu0 0.0
        %2114 = vmatmul.mubr.f32.gmra.mrb[0].mxu0 %v1920
        %v2115 = vpop.f32.mrb[0].mxu0
        %v2116 = vadd.f32 0.0, %v2115
        %v2117 = vpop.f32.mrb[0].mxu0
        %2118 = vmatprep.mubr.f32.mxu0 0.0
        %2119 = vmatmul.mubr.f32.gmra.mrb[0].mxu0 %v1923
        %v2120 = vpop.f32.mrb[0].mxu0
        %v2121 = vadd.f32 0.0, %v2120
        %v2122 = vpop.f32.mrb[0].mxu0
        %2123 = vmatprep.mubr.f32.mxu0 0.0
        %2124 = vmatmul.mubr.f32.gmra.mrb[0].mxu0 %v1926
        %v2125 = vpop.f32.mrb[0].mxu0
        %v2126 = vadd.f32 0.0, %v2125
        %v2127 = vpop.f32.mrb[0].mxu0
        %2128 = vmatprep.mubr.f32.mxu0 0.0
        %2129 = vmatmul.mubr.f32.gmra.mrb[0].mxu0 %v1929
        %v2130 = vpop.f32.mrb[0].mxu0
        %v2131 = vadd.f32 0.0, %v2130
        %v2132 = vpop.f32.mrb[0].mxu0
        %2133 = vmatprep.mubr.f32.mxu0 0.0
        %2134 = vmatmul.mubr.f32.gmra.mrb[0].mxu0 %v1932
        %v2135 = vpop.f32.mrb[0].mxu0
        %v2136 = vadd.f32 0.0, %v2135
        %v2137 = vpop.f32.mrb[0].mxu0
        %2138 = vmatprep.mubr.f32.mxu0 0.0
        %2139 = vmatmul.mubr.f32.gmra.mrb[0].mxu0 %v1935
        %v2140 = vpop.f32.mrb[0].mxu0
        %v2141 = vadd.f32 0.0, %v2140
        %v2142 = vpop.f32.mrb[0].mxu0
        %2143 = vmatprep.mubr.f32.mxu0 0.0
        %2144 = vmatmul.mubr.f32.gmra.mrb[0].mxu0 %v1938
        %v2145 = vpop.f32.mrb[0].mxu0
        %v2146 = vadd.f32 0.0, %v2145
        %v2147 = vpop.f32.mrb[0].mxu0
        %2148 = vmatprep.mubr.f32.mxu0 0.0
        %2149 = vmatmul.mubr.f32.gmra.mrb[0].mxu0 %v1941
        %v2150 = vpop.f32.mrb[0].mxu0
        %v2151 = vadd.f32 0.0, %v2150
        %v2152 = vpop.f32.mrb[0].mxu0
        %2153 = vmatprep.mubr.f32.mxu0 0.0
        %2154 = vmatmul.mubr.f32.gmra.mrb[0].mxu0 %v1944
        %v2155 = vpop.f32.mrb[0].mxu0
        %v2156 = vadd.f32 0.0, %v2155
        %v2157 = vpop.f32.mrb[0].mxu0
        %2158 = vmatprep.mubr.f32.mxu0 0.0
        %2159 = vmatmul.mubr.f32.gmra.mrb[0].mxu0 %v1947
        %v2160 = vpop.f32.mrb[0].mxu0
        %v2161 = vadd.f32 0.0, %v2160
        %v2162 = vpop.f32.mrb[0].mxu0
        %2163 = vmatprep.mubr.f32.mxu0 0.0
        %2164 = vmatmul.mubr.f32.gmra.mrb[0].mxu0 %v1950
        %v2165 = vpop.f32.mrb[0].mxu0
        %v2166 = vadd.f32 0.0, %v2165
        %v2167 = vpop.f32.mrb[0].mxu0
        %2168 = vmatprep.mubr.f32.mxu0 0.0
        %2169 = vmatmul.mubr.f32.gmra.mrb[0].mxu0 %v1953
        %v2170 = vpop.f32.mrb[0].mxu0
        %v2171 = vadd.f32 0.0, %v2170
        %v2172 = vpop.f32.mrb[0].mxu0
        %2173 = vmatprep.mubr.f32.mxu0 0.0
        %2174 = vmatmul.mubr.f32.gmra.mrb[0].mxu0 %v1956
        %v2175 = vpop.f32.mrb[0].mxu0
        %v2176 = vadd.f32 0.0, %v2175
        %v2177 = vpop.f32.mrb[0].mxu0
        %2178 = vmatprep.mubr.f32.mxu0 0.0
        %2179 = vmatmul.mubr.f32.gmra.mrb[0].mxu0 %v1959
        %v2180 = vpop.f32.mrb[0].mxu0
        %v2181 = vadd.f32 0.0, %v2180
        %v2182 = vpop.f32.mrb[0].mxu0
        %2183 = vmatprep.mubr.f32.mxu0 0.0
        %2184 = vmatmul.mubr.f32.gmra.mrb[0].mxu0 %v1962
        %v2185 = vpop.f32.mrb[0].mxu0
        %v2186 = vadd.f32 0.0, %v2185
        %v2187 = vpop.f32.mrb[0].mxu0
        %2188 = vdwg.mxu0
        %v2189 = vadd.f32 %v1804, %v2031
        %v2190 = vadd.f32 %v1805, %v2036
        %v2191 = vadd.f32 %v1806, %v2041
        %v2192 = vadd.f32 %v1807, %v2046
        %v2193 = vadd.f32 %v1808, %v2051
        %v2194 = vadd.f32 %v1809, %v2056
        %v2195 = vadd.f32 %v1810, %v2061
        %v2196 = vadd.f32 %v1811, %v2066
        %v2197 = vadd.f32 %v1812, %v2071
        %v2198 = vadd.f32 %v1813, %v2076
        %v2199 = vadd.f32 %v1814, %v2081
        %v2200 = vadd.f32 %v1815, %v2086
        %v2201 = vadd.f32 %v1816, %v2091
        %v2202 = vadd.f32 %v1817, %v2096
        %v2203 = vadd.f32 %v1818, %v2101
        %v2204 = vadd.f32 %v1819, %v2106
        %v2205 = vadd.f32 %v1820, %v2111
        %v2206 = vadd.f32 %v1821, %v2116
        %v2207 = vadd.f32 %v1822, %v2121
        %v2208 = vadd.f32 %v1823, %v2126
        %v2209 = vadd.f32 %v1824, %v2131
        %v2210 = vadd.f32 %v1825, %v2136
        %v2211 = vadd.f32 %v1826, %v2141
        %v2212 = vadd.f32 %v1827, %v2146
        %v2213 = vadd.f32 %v1828, %v2151
        %v2214 = vadd.f32 %v1829, %v2156
        %v2215 = vadd.f32 %v1830, %v2161
        %v2216 = vadd.f32 %v1831, %v2166
        %v2217 = vadd.f32 %v1832, %v2171
        %v2218 = vadd.f32 %v1833, %v2176
        %v2219 = vadd.f32 %v1834, %v2181
        %v2220 = vadd.f32 %v1835, %v2186
        %v2221 = vld [vmem:[%s1450 + $0x2] sm:$0xff]
        %v2222 = vld [vmem:[%s1450 + $0xa] sm:$0xff]
        %v2223 = vld [vmem:[%s1450 + $0x1a] sm:$0xff]
        %v2224 = vld [vmem:[%s1450 + $0x22] sm:$0xff]
        %v2225 = vld [vmem:[%s1450 + $0x32] sm:$0xff]
        %v2226 = vld [vmem:[%s1450 + $0x3a] sm:$0xff]
        %v2227 = vld [vmem:[%s1450 + $0x4a] sm:$0xff]
        %v2228 = vld [vmem:[%s1450 + $0x52] sm:$0xff]
        %v2229 = vld [vmem:[%s1450 + $0x62] sm:$0xff]
        %v2230 = vld [vmem:[%s1450 + $0x6a] sm:$0xff]
        %v2231 = vld [vmem:[%s1450 + $0x7a] sm:$0xff]
        %v2232 = vld [vmem:[%s1450 + $0x82] sm:$0xff]
        %v2233 = vld [vmem:[%s1450 + $0x92] sm:$0xff]
        %v2234 = vld [vmem:[%s1450 + $0x9a] sm:$0xff]
        %v2235 = vld [vmem:[%s1450 + $0xaa] sm:$0xff]
        %v2236 = vld [vmem:[%s1450 + $0xb2] sm:$0xff]
        %v2237 = vld [vmem:[%s1450 + $0xc2] sm:$0xff]
        %v2238 = vld [vmem:[%s1450 + $0xca] sm:$0xff]
        %v2239 = vld [vmem:[%s1450 + $0xda] sm:$0xff]
        %v2240 = vld [vmem:[%s1450 + $0xe2] sm:$0xff]
        %v2241 = vld [vmem:[%s1450 + $0xf2] sm:$0xff]
        %v2242 = vld [vmem:[%s1450 + $0xfa] sm:$0xff]
        %v2243 = vld [vmem:[%s1450 + $0x10a] sm:$0xff]
        %v2244 = vld [vmem:[%s1450 + $0x112] sm:$0xff]
        %v2245 = vld [vmem:[%s1450 + $0x122] sm:$0xff]
        %v2246 = vld [vmem:[%s1450 + $0x12a] sm:$0xff]
        %v2247 = vld [vmem:[%s1450 + $0x13a] sm:$0xff]
        %v2248 = vld [vmem:[%s1450 + $0x142] sm:$0xff]
        %v2249 = vld [vmem:[%s1450 + $0x152] sm:$0xff]
        %v2250 = vld [vmem:[%s1450 + $0x15a] sm:$0xff]
        %v2251 = vld [vmem:[%s1450 + $0x16a] sm:$0xff]
        %v2252 = vld [vmem:[%s1450 + $0x172] sm:$0xff]
        %v2254 = vsel %vm422, %v2221, 0
        %v2257 = vsel %vm422, %v2222, 0
        %v2260 = vsel %vm422, %v2223, 0
        %v2263 = vsel %vm422, %v2224, 0
        %v2266 = vsel %vm422, %v2225, 0
        %v2269 = vsel %vm422, %v2226, 0
        %v2272 = vsel %vm422, %v2227, 0
        %v2275 = vsel %vm422, %v2228, 0
        %v2278 = vsel %vm422, %v2229, 0
        %v2281 = vsel %vm422, %v2230, 0
        %v2284 = vsel %vm422, %v2231, 0
        %v2287 = vsel %vm422, %v2232, 0
        %v2290 = vsel %vm422, %v2233, 0
        %v2293 = vsel %vm422, %v2234, 0
        %v2296 = vsel %vm422, %v2235, 0
        %v2299 = vsel %vm422, %v2236, 0
        %v2302 = vsel %vm422, %v2237, 0
        %v2305 = vsel %vm422, %v2238, 0
        %v2308 = vsel %vm422, %v2239, 0
        %v2311 = vsel %vm422, %v2240, 0
        %v2314 = vsel %vm422, %v2241, 0
        %v2317 = vsel %vm422, %v2242, 0
        %v2320 = vsel %vm422, %v2243, 0
        %v2323 = vsel %vm422, %v2244, 0
        %v2326 = vsel %vm422, %v2245, 0
        %v2329 = vsel %vm422, %v2246, 0
        %v2332 = vsel %vm422, %v2247, 0
        %v2335 = vsel %vm422, %v2248, 0
        %v2338 = vsel %vm422, %v2249, 0
        %v2341 = vsel %vm422, %v2250, 0
        %v2344 = vsel %vm422, %v2251, 0
        %v2347 = vsel %vm422, %v2252, 0
        %2349 = vmatprep.subr.mxu0 0.0
        %2350 = vmatpush1.msra.mxu0 %v350
        %2351 = vmatprep.subr.mxu0 0.0
        %2352 = vmatpush1.msra.mxu0 %v351
        %2353 = vmatprep.subr.mxu0 0.0
        %2354 = vmatpush1.msra.mxu0 0.0
        %2355 = vmatprep.subr.mxu0 0.0
        %2356 = vmatpush1.msra.mxu0 0.0
        %2357 = vmatprep.subr.mxu0 0.0
        %2358 = vmatpush1.msra.mxu0 0.0
        %2359 = vmatprep.subr.mxu0 0.0
        %2360 = vmatpush1.msra.mxu0 0.0
        %2361 = vmatprep.subr.mxu0 0.0
        %2362 = vmatpush1.msra.mxu0 0.0
        %2363 = vmatprep.subr.mxu0 0.0
        %2364 = vmatpush1.msra.mxu0 0.0
        %2365 = vmatprep.subr.mxu0 0.0
        %2366 = vmatpush1.msra.mxu0 0.0
        %2367 = vmatprep.subr.mxu0 0.0
        %2368 = vmatpush1.msra.mxu0 0.0
        %2369 = vmatprep.subr.mxu0 0.0
        %2370 = vmatpush1.msra.mxu0 0.0
        %2371 = vmatprep.subr.mxu0 0.0
        %2372 = vmatpush1.msra.mxu0 0.0
        %2373 = vmatprep.subr.mxu0 0.0
        %2374 = vmatpush1.msra.mxu0 0.0
        %2375 = vmatprep.subr.mxu0 0.0
        %2376 = vmatpush1.msra.mxu0 0.0
        %2377 = vmatprep.subr.mxu0 0.0
        %2378 = vmatpush1.msra.mxu0 0.0
        %2379 = vmatprep.subr.mxu0 0.0
        %2380 = vmatpush1.msra.mxu0 0.0
        %2381 = vmatprep.subr.mxu0 0.0
        %2382 = vmatpush1.msra.mxu0 0.0
        %2383 = vmatprep.subr.mxu0 0.0
        %2384 = vmatpush1.msra.mxu0 0.0
        %2385 = vmatprep.subr.mxu0 0.0
        %2386 = vmatpush1.msra.mxu0 0.0
        %2387 = vmatprep.subr.mxu0 0.0
        %2388 = vmatpush1.msra.mxu0 0.0
        %2389 = vmatprep.subr.mxu0 0.0
        %2390 = vmatpush1.msra.mxu0 0.0
        %2391 = vmatprep.subr.mxu0 0.0
        %2392 = vmatpush1.msra.mxu0 0.0
        %2393 = vmatprep.subr.mxu0 0.0
        %2394 = vmatpush1.msra.mxu0 0.0
        %2395 = vmatprep.subr.mxu0 0.0
        %2396 = vmatpush1.msra.mxu0 0.0
        %2397 = vmatprep.subr.mxu0 0.0
        %2398 = vmatpush1.msra.mxu0 0.0
        %2399 = vmatprep.subr.mxu0 0.0
        %2400 = vmatpush1.msra.mxu0 0.0
        %2401 = vmatprep.subr.mxu0 0.0
        %2402 = vmatpush1.msra.mxu0 0.0
        %2403 = vmatprep.subr.mxu0 0.0
        %2404 = vmatpush1.msra.mxu0 0.0
        %2405 = vmatprep.subr.mxu0 0.0
        %2406 = vmatpush1.msra.mxu0 0.0
        %2407 = vmatprep.subr.mxu0 0.0
        %2408 = vmatpush1.msra.mxu0 0.0
        %2409 = vmatprep.subr.mxu0 0.0
        %2410 = vmatpush1.msra.mxu0 0.0
        %2411 = vmatprep.subr.mxu0 0.0
        %2412 = vmatpush1.msra.mxu0 0.0
        %2413 = vmatprep.mubr.f32.mxu0 0.0
        %2414 = vmatmul.mubr.f32.gmra.mrb[0].mxu0 %v2254
        %v2415 = vpop.f32.mrb[0].mxu0
        %v2416 = vadd.f32 0.0, %v2415
        %v2417 = vpop.f32.mrb[0].mxu0
        %2418 = vmatprep.mubr.f32.mxu0 0.0
        %2419 = vmatmul.mubr.f32.gmra.mrb[0].mxu0 %v2257
        %v2420 = vpop.f32.mrb[0].mxu0
        %v2421 = vadd.f32 0.0, %v2420
        %v2422 = vpop.f32.mrb[0].mxu0
        %2423 = vmatprep.mubr.f32.mxu0 0.0
        %2424 = vmatmul.mubr.f32.gmra.mrb[0].mxu0 %v2260
        %v2425 = vpop.f32.mrb[0].mxu0
        %v2426 = vadd.f32 0.0, %v2425
        %v2427 = vpop.f32.mrb[0].mxu0
        %2428 = vmatprep.mubr.f32.mxu0 0.0
        %2429 = vmatmul.mubr.f32.gmra.mrb[0].mxu0 %v2263
        %v2430 = vpop.f32.mrb[0].mxu0
        %v2431 = vadd.f32 0.0, %v2430
        %v2432 = vpop.f32.mrb[0].mxu0
        %2433 = vmatprep.mubr.f32.mxu0 0.0
        %2434 = vmatmul.mubr.f32.gmra.mrb[0].mxu0 %v2266
        %v2435 = vpop.f32.mrb[0].mxu0
        %v2436 = vadd.f32 0.0, %v2435
        %v2437 = vpop.f32.mrb[0].mxu0
        %2438 = vmatprep.mubr.f32.mxu0 0.0
        %2439 = vmatmul.mubr.f32.gmra.mrb[0].mxu0 %v2269
        %v2440 = vpop.f32.mrb[0].mxu0
        %v2441 = vadd.f32 0.0, %v2440
        %v2442 = vpop.f32.mrb[0].mxu0
        %2443 = vmatprep.mubr.f32.mxu0 0.0
        %2444 = vmatmul.mubr.f32.gmra.mrb[0].mxu0 %v2272
        %v2445 = vpop.f32.mrb[0].mxu0
        %v2446 = vadd.f32 0.0, %v2445
        %v2447 = vpop.f32.mrb[0].mxu0
        %2448 = vmatprep.mubr.f32.mxu0 0.0
        %2449 = vmatmul.mubr.f32.gmra.mrb[0].mxu0 %v2275
        %v2450 = vpop.f32.mrb[0].mxu0
        %v2451 = vadd.f32 0.0, %v2450
        %v2452 = vpop.f32.mrb[0].mxu0
        %2453 = vmatprep.mubr.f32.mxu0 0.0
        %2454 = vmatmul.mubr.f32.gmra.mrb[0].mxu0 %v2278
        %v2455 = vpop.f32.mrb[0].mxu0
        %v2456 = vadd.f32 0.0, %v2455
        %v2457 = vpop.f32.mrb[0].mxu0
        %2458 = vmatprep.mubr.f32.mxu0 0.0
        %2459 = vmatmul.mubr.f32.gmra.mrb[0].mxu0 %v2281
        %v2460 = vpop.f32.mrb[0].mxu0
        %v2461 = vadd.f32 0.0, %v2460
        %v2462 = vpop.f32.mrb[0].mxu0
        %2463 = vmatprep.mubr.f32.mxu0 0.0
        %2464 = vmatmul.mubr.f32.gmra.mrb[0].mxu0 %v2284
        %v2465 = vpop.f32.mrb[0].mxu0
        %v2466 = vadd.f32 0.0, %v2465
        %v2467 = vpop.f32.mrb[0].mxu0
        %2468 = vmatprep.mubr.f32.mxu0 0.0
        %2469 = vmatmul.mubr.f32.gmra.mrb[0].mxu0 %v2287
        %v2470 = vpop.f32.mrb[0].mxu0
        %v2471 = vadd.f32 0.0, %v2470
        %v2472 = vpop.f32.mrb[0].mxu0
        %2473 = vmatprep.mubr.f32.mxu0 0.0
        %2474 = vmatmul.mubr.f32.gmra.mrb[0].mxu0 %v2290
        %v2475 = vpop.f32.mrb[0].mxu0
        %v2476 = vadd.f32 0.0, %v2475
        %v2477 = vpop.f32.mrb[0].mxu0
        %2478 = vmatprep.mubr.f32.mxu0 0.0
        %2479 = vmatmul.mubr.f32.gmra.mrb[0].mxu0 %v2293
        %v2480 = vpop.f32.mrb[0].mxu0
        %v2481 = vadd.f32 0.0, %v2480
        %v2482 = vpop.f32.mrb[0].mxu0
        %2483 = vmatprep.mubr.f32.mxu0 0.0
        %2484 = vmatmul.mubr.f32.gmra.mrb[0].mxu0 %v2296
        %v2485 = vpop.f32.mrb[0].mxu0
        %v2486 = vadd.f32 0.0, %v2485
        %v2487 = vpop.f32.mrb[0].mxu0
        %2488 = vmatprep.mubr.f32.mxu0 0.0
        %2489 = vmatmul.mubr.f32.gmra.mrb[0].mxu0 %v2299
        %v2490 = vpop.f32.mrb[0].mxu0
        %v2491 = vadd.f32 0.0, %v2490
        %v2492 = vpop.f32.mrb[0].mxu0
        %2493 = vmatprep.mubr.f32.mxu0 0.0
        %2494 = vmatmul.mubr.f32.gmra.mrb[0].mxu0 %v2302
        %v2495 = vpop.f32.mrb[0].mxu0
        %v2496 = vadd.f32 0.0, %v2495
        %v2497 = vpop.f32.mrb[0].mxu0
        %2498 = vmatprep.mubr.f32.mxu0 0.0
        %2499 = vmatmul.mubr.f32.gmra.mrb[0].mxu0 %v2305
        %v2500 = vpop.f32.mrb[0].mxu0
        %v2501 = vadd.f32 0.0, %v2500
        %v2502 = vpop.f32.mrb[0].mxu0
        %2503 = vmatprep.mubr.f32.mxu0 0.0
        %2504 = vmatmul.mubr.f32.gmra.mrb[0].mxu0 %v2308
        %v2505 = vpop.f32.mrb[0].mxu0
        %v2506 = vadd.f32 0.0, %v2505
        %v2507 = vpop.f32.mrb[0].mxu0
        %2508 = vmatprep.mubr.f32.mxu0 0.0
        %2509 = vmatmul.mubr.f32.gmra.mrb[0].mxu0 %v2311
        %v2510 = vpop.f32.mrb[0].mxu0
        %v2511 = vadd.f32 0.0, %v2510
        %v2512 = vpop.f32.mrb[0].mxu0
        %2513 = vmatprep.mubr.f32.mxu0 0.0
        %2514 = vmatmul.mubr.f32.gmra.mrb[0].mxu0 %v2314
        %v2515 = vpop.f32.mrb[0].mxu0
        %v2516 = vadd.f32 0.0, %v2515
        %v2517 = vpop.f32.mrb[0].mxu0
        %2518 = vmatprep.mubr.f32.mxu0 0.0
        %2519 = vmatmul.mubr.f32.gmra.mrb[0].mxu0 %v2317
        %v2520 = vpop.f32.mrb[0].mxu0
        %v2521 = vadd.f32 0.0, %v2520
        %v2522 = vpop.f32.mrb[0].mxu0
        %2523 = vmatprep.mubr.f32.mxu0 0.0
        %2524 = vmatmul.mubr.f32.gmra.mrb[0].mxu0 %v2320
        %v2525 = vpop.f32.mrb[0].mxu0
        %v2526 = vadd.f32 0.0, %v2525
        %v2527 = vpop.f32.mrb[0].mxu0
        %2528 = vmatprep.mubr.f32.mxu0 0.0
        %2529 = vmatmul.mubr.f32.gmra.mrb[0].mxu0 %v2323
        %v2530 = vpop.f32.mrb[0].mxu0
        %v2531 = vadd.f32 0.0, %v2530
        %v2532 = vpop.f32.mrb[0].mxu0
        %2533 = vmatprep.mubr.f32.mxu0 0.0
        %2534 = vmatmul.mubr.f32.gmra.mrb[0].mxu0 %v2326
        %v2535 = vpop.f32.mrb[0].mxu0
        %v2536 = vadd.f32 0.0, %v2535
        %v2537 = vpop.f32.mrb[0].mxu0
        %2538 = vmatprep.mubr.f32.mxu0 0.0
        %2539 = vmatmul.mubr.f32.gmra.mrb[0].mxu0 %v2329
        %v2540 = vpop.f32.mrb[0].mxu0
        %v2541 = vadd.f32 0.0, %v2540
        %v2542 = vpop.f32.mrb[0].mxu0
        %2543 = vmatprep.mubr.f32.mxu0 0.0
        %2544 = vmatmul.mubr.f32.gmra.mrb[0].mxu0 %v2332
        %v2545 = vpop.f32.mrb[0].mxu0
        %v2546 = vadd.f32 0.0, %v2545
        %v2547 = vpop.f32.mrb[0].mxu0
        %2548 = vmatprep.mubr.f32.mxu0 0.0
        %2549 = vmatmul.mubr.f32.gmra.mrb[0].mxu0 %v2335
        %v2550 = vpop.f32.mrb[0].mxu0
        %v2551 = vadd.f32 0.0, %v2550
        %v2552 = vpop.f32.mrb[0].mxu0
        %2553 = vmatprep.mubr.f32.mxu0 0.0
        %2554 = vmatmul.mubr.f32.gmra.mrb[0].mxu0 %v2338
        %v2555 = vpop.f32.mrb[0].mxu0
        %v2556 = vadd.f32 0.0, %v2555
        %v2557 = vpop.f32.mrb[0].mxu0
        %2558 = vmatprep.mubr.f32.mxu0 0.0
        %2559 = vmatmul.mubr.f32.gmra.mrb[0].mxu0 %v2341
        %v2560 = vpop.f32.mrb[0].mxu0
        %v2561 = vadd.f32 0.0, %v2560
        %v2562 = vpop.f32.mrb[0].mxu0
        %2563 = vmatprep.mubr.f32.mxu0 0.0
        %2564 = vmatmul.mubr.f32.gmra.mrb[0].mxu0 %v2344
        %v2565 = vpop.f32.mrb[0].mxu0
        %v2566 = vadd.f32 0.0, %v2565
        %v2567 = vpop.f32.mrb[0].mxu0
        %2568 = vmatprep.mubr.f32.mxu0 0.0
        %2569 = vmatmul.mubr.f32.gmra.mrb[0].mxu0 %v2347
        %v2570 = vpop.f32.mrb[0].mxu0
        %v2571 = vadd.f32 0.0, %v2570
        %v2572 = vpop.f32.mrb[0].mxu0
        %2573 = vdwg.mxu0
        %v2574 = vadd.f32 %v2189, %v2416
        %v2575 = vadd.f32 %v2190, %v2421
        %v2576 = vadd.f32 %v2191, %v2426
        %v2577 = vadd.f32 %v2192, %v2431
        %v2578 = vadd.f32 %v2193, %v2436
        %v2579 = vadd.f32 %v2194, %v2441
        %v2580 = vadd.f32 %v2195, %v2446
        %v2581 = vadd.f32 %v2196, %v2451
        %v2582 = vadd.f32 %v2197, %v2456
        %v2583 = vadd.f32 %v2198, %v2461
        %v2584 = vadd.f32 %v2199, %v2466
        %v2585 = vadd.f32 %v2200, %v2471
        %v2586 = vadd.f32 %v2201, %v2476
        %v2587 = vadd.f32 %v2202, %v2481
        %v2588 = vadd.f32 %v2203, %v2486
        %v2589 = vadd.f32 %v2204, %v2491
        %v2590 = vadd.f32 %v2205, %v2496
        %v2591 = vadd.f32 %v2206, %v2501
        %v2592 = vadd.f32 %v2207, %v2506
        %v2593 = vadd.f32 %v2208, %v2511
        %v2594 = vadd.f32 %v2209, %v2516
        %v2595 = vadd.f32 %v2210, %v2521
        %v2596 = vadd.f32 %v2211, %v2526
        %v2597 = vadd.f32 %v2212, %v2531
        %v2598 = vadd.f32 %v2213, %v2536
        %v2599 = vadd.f32 %v2214, %v2541
        %v2600 = vadd.f32 %v2215, %v2546
        %v2601 = vadd.f32 %v2216, %v2551
        %v2602 = vadd.f32 %v2217, %v2556
        %v2603 = vadd.f32 %v2218, %v2561
        %v2604 = vadd.f32 %v2219, %v2566
        %v2605 = vadd.f32 %v2220, %v2571
        %s2606 = scalar_lea.vmem [#allocation2], 48
        %v2607 = vld [vmem:[%s2606] sm:$0xff]
        %v2608 = vld [vmem:[%s2606 + $0x8] sm:$0xff]
        %v2609 = vld [vmem:[%s2606 + $0x18] sm:$0xff]
        %v2610 = vld [vmem:[%s2606 + $0x20] sm:$0xff]
        %v2611 = vld [vmem:[%s2606 + $0x30] sm:$0xff]
        %v2612 = vld [vmem:[%s2606 + $0x38] sm:$0xff]
        %v2613 = vld [vmem:[%s2606 + $0x48] sm:$0xff]
        %v2614 = vld [vmem:[%s2606 + $0x50] sm:$0xff]
        %v2615 = vld [vmem:[%s2606 + $0x60] sm:$0xff]
        %v2616 = vld [vmem:[%s2606 + $0x68] sm:$0xff]
        %v2617 = vld [vmem:[%s2606 + $0x78] sm:$0xff]
        %v2618 = vld [vmem:[%s2606 + $0x80] sm:$0xff]
        %v2619 = vld [vmem:[%s2606 + $0x90] sm:$0xff]
        %v2620 = vld [vmem:[%s2606 + $0x98] sm:$0xff]
        %v2621 = vld [vmem:[%s2606 + $0xa8] sm:$0xff]
        %v2622 = vld [vmem:[%s2606 + $0xb0] sm:$0xff]
        %v2623 = vld [vmem:[%s2606 + $0xc0] sm:$0xff]
        %v2624 = vld [vmem:[%s2606 + $0xc8] sm:$0xff]
        %v2625 = vld [vmem:[%s2606 + $0xd8] sm:$0xff]
        %v2626 = vld [vmem:[%s2606 + $0xe0] sm:$0xff]
        %v2627 = vld [vmem:[%s2606 + $0xf0] sm:$0xff]
        %v2628 = vld [vmem:[%s2606 + $0xf8] sm:$0xff]
        %v2629 = vld [vmem:[%s2606 + $0x108] sm:$0xff]
        %v2630 = vld [vmem:[%s2606 + $0x110] sm:$0xff]
        %v2631 = vld [vmem:[%s2606 + $0x120] sm:$0xff]
        %v2632 = vld [vmem:[%s2606 + $0x128] sm:$0xff]
        %v2633 = vld [vmem:[%s2606 + $0x138] sm:$0xff]
        %v2634 = vld [vmem:[%s2606 + $0x140] sm:$0xff]
        %v2635 = vld [vmem:[%s2606 + $0x150] sm:$0xff]
        %v2636 = vld [vmem:[%s2606 + $0x158] sm:$0xff]
        %v2637 = vld [vmem:[%s2606 + $0x168] sm:$0xff]
        %v2638 = vld [vmem:[%s2606 + $0x170] sm:$0xff]
        %v2640 = vsel %vm422, %v2607, 0
        %v2643 = vsel %vm422, %v2608, 0
        %v2646 = vsel %vm422, %v2609, 0
        %v2649 = vsel %vm422, %v2610, 0
        %v2652 = vsel %vm422, %v2611, 0
        %v2655 = vsel %vm422, %v2612, 0
        %v2658 = vsel %vm422, %v2613, 0
        %v2661 = vsel %vm422, %v2614, 0
        %v2664 = vsel %vm422, %v2615, 0
        %v2667 = vsel %vm422, %v2616, 0
        %v2670 = vsel %vm422, %v2617, 0
        %v2673 = vsel %vm422, %v2618, 0
        %v2676 = vsel %vm422, %v2619, 0
        %v2679 = vsel %vm422, %v2620, 0
        %v2682 = vsel %vm422, %v2621, 0
        %v2685 = vsel %vm422, %v2622, 0
        %v2688 = vsel %vm422, %v2623, 0
        %v2691 = vsel %vm422, %v2624, 0
        %v2694 = vsel %vm422, %v2625, 0
        %v2697 = vsel %vm422, %v2626, 0
        %v2700 = vsel %vm422, %v2627, 0
        %v2703 = vsel %vm422, %v2628, 0
        %v2706 = vsel %vm422, %v2629, 0
        %v2709 = vsel %vm422, %v2630, 0
        %v2712 = vsel %vm422, %v2631, 0
        %v2715 = vsel %vm422, %v2632, 0
        %v2718 = vsel %vm422, %v2633, 0
        %v2721 = vsel %vm422, %v2634, 0
        %v2724 = vsel %vm422, %v2635, 0
        %v2727 = vsel %vm422, %v2636, 0
        %v2730 = vsel %vm422, %v2637, 0
        %v2733 = vsel %vm422, %v2638, 0
        %2735 = vmatprep.subr.mxu0 0.0
        %2736 = vmatpush1.msra.mxu0 %v352
        %2737 = vmatprep.subr.mxu0 0.0
        %2738 = vmatpush1.msra.mxu0 %v353
        %2739 = vmatprep.subr.mxu0 0.0
        %2740 = vmatpush1.msra.mxu0 0.0
        %2741 = vmatprep.subr.mxu0 0.0
        %2742 = vmatpush1.msra.mxu0 0.0
        %2743 = vmatprep.subr.mxu0 0.0
        %2744 = vmatpush1.msra.mxu0 0.0
        %2745 = vmatprep.subr.mxu0 0.0
        %2746 = vmatpush1.msra.mxu0 0.0
        %2747 = vmatprep.subr.mxu0 0.0
        %2748 = vmatpush1.msra.mxu0 0.0
        %2749 = vmatprep.subr.mxu0 0.0
        %2750 = vmatpush1.msra.mxu0 0.0
        %2751 = vmatprep.subr.mxu0 0.0
        %2752 = vmatpush1.msra.mxu0 0.0
        %2753 = vmatprep.subr.mxu0 0.0
        %2754 = vmatpush1.msra.mxu0 0.0
        %2755 = vmatprep.subr.mxu0 0.0
        %2756 = vmatpush1.msra.mxu0 0.0
        %2757 = vmatprep.subr.mxu0 0.0
        %2758 = vmatpush1.msra.mxu0 0.0
        %2759 = vmatprep.subr.mxu0 0.0
        %2760 = vmatpush1.msra.mxu0 0.0
        %2761 = vmatprep.subr.mxu0 0.0
        %2762 = vmatpush1.msra.mxu0 0.0
        %2763 = vmatprep.subr.mxu0 0.0
        %2764 = vmatpush1.msra.mxu0 0.0
        %2765 = vmatprep.subr.mxu0 0.0
        %2766 = vmatpush1.msra.mxu0 0.0
        %2767 = vmatprep.subr.mxu0 0.0
        %2768 = vmatpush1.msra.mxu0 0.0
        %2769 = vmatprep.subr.mxu0 0.0
        %2770 = vmatpush1.msra.mxu0 0.0
        %2771 = vmatprep.subr.mxu0 0.0
        %2772 = vmatpush1.msra.mxu0 0.0
        %2773 = vmatprep.subr.mxu0 0.0
        %2774 = vmatpush1.msra.mxu0 0.0
        %2775 = vmatprep.subr.mxu0 0.0
        %2776 = vmatpush1.msra.mxu0 0.0
        %2777 = vmatprep.subr.mxu0 0.0
        %2778 = vmatpush1.msra.mxu0 0.0
        %2779 = vmatprep.subr.mxu0 0.0
        %2780 = vmatpush1.msra.mxu0 0.0
        %2781 = vmatprep.subr.mxu0 0.0
        %2782 = vmatpush1.msra.mxu0 0.0
        %2783 = vmatprep.subr.mxu0 0.0
        %2784 = vmatpush1.msra.mxu0 0.0
        %2785 = vmatprep.subr.mxu0 0.0
        %2786 = vmatpush1.msra.mxu0 0.0
        %2787 = vmatprep.subr.mxu0 0.0
        %2788 = vmatpush1.msra.mxu0 0.0
        %2789 = vmatprep.subr.mxu0 0.0
        %2790 = vmatpush1.msra.mxu0 0.0
        %2791 = vmatprep.subr.mxu0 0.0
        %2792 = vmatpush1.msra.mxu0 0.0
        %2793 = vmatprep.subr.mxu0 0.0
        %2794 = vmatpush1.msra.mxu0 0.0
        %2795 = vmatprep.subr.mxu0 0.0
        %2796 = vmatpush1.msra.mxu0 0.0
        %2797 = vmatprep.subr.mxu0 0.0
        %2798 = vmatpush1.msra.mxu0 0.0
        %2799 = vmatprep.mubr.f32.mxu0 0.0
        %2800 = vmatmul.mubr.f32.gmra.mrb[0].mxu0 %v2640
        %v2801 = vpop.f32.mrb[0].mxu0
        %v2802 = vadd.f32 0.0, %v2801
        %v2803 = vpop.f32.mrb[0].mxu0
        %2804 = vmatprep.mubr.f32.mxu0 0.0
        %2805 = vmatmul.mubr.f32.gmra.mrb[0].mxu0 %v2643
        %v2806 = vpop.f32.mrb[0].mxu0
        %v2807 = vadd.f32 0.0, %v2806
        %v2808 = vpop.f32.mrb[0].mxu0
        %2809 = vmatprep.mubr.f32.mxu0 0.0
        %2810 = vmatmul.mubr.f32.gmra.mrb[0].mxu0 %v2646
        %v2811 = vpop.f32.mrb[0].mxu0
        %v2812 = vadd.f32 0.0, %v2811
        %v2813 = vpop.f32.mrb[0].mxu0
        %2814 = vmatprep.mubr.f32.mxu0 0.0
        %2815 = vmatmul.mubr.f32.gmra.mrb[0].mxu0 %v2649
        %v2816 = vpop.f32.mrb[0].mxu0
        %v2817 = vadd.f32 0.0, %v2816
        %v2818 = vpop.f32.mrb[0].mxu0
        %2819 = vmatprep.mubr.f32.mxu0 0.0
        %2820 = vmatmul.mubr.f32.gmra.mrb[0].mxu0 %v2652
        %v2821 = vpop.f32.mrb[0].mxu0
        %v2822 = vadd.f32 0.0, %v2821
        %v2823 = vpop.f32.mrb[0].mxu0
        %2824 = vmatprep.mubr.f32.mxu0 0.0
        %2825 = vmatmul.mubr.f32.gmra.mrb[0].mxu0 %v2655
        %v2826 = vpop.f32.mrb[0].mxu0
        %v2827 = vadd.f32 0.0, %v2826
        %v2828 = vpop.f32.mrb[0].mxu0
        %2829 = vmatprep.mubr.f32.mxu0 0.0
        %2830 = vmatmul.mubr.f32.gmra.mrb[0].mxu0 %v2658
        %v2831 = vpop.f32.mrb[0].mxu0
        %v2832 = vadd.f32 0.0, %v2831
        %v2833 = vpop.f32.mrb[0].mxu0
        %2834 = vmatprep.mubr.f32.mxu0 0.0
        %2835 = vmatmul.mubr.f32.gmra.mrb[0].mxu0 %v2661
        %v2836 = vpop.f32.mrb[0].mxu0
        %v2837 = vadd.f32 0.0, %v2836
        %v2838 = vpop.f32.mrb[0].mxu0
        %2839 = vmatprep.mubr.f32.mxu0 0.0
        %2840 = vmatmul.mubr.f32.gmra.mrb[0].mxu0 %v2664
        %v2841 = vpop.f32.mrb[0].mxu0
        %v2842 = vadd.f32 0.0, %v2841
        %v2843 = vpop.f32.mrb[0].mxu0
        %2844 = vmatprep.mubr.f32.mxu0 0.0
        %2845 = vmatmul.mubr.f32.gmra.mrb[0].mxu0 %v2667
        %v2846 = vpop.f32.mrb[0].mxu0
        %v2847 = vadd.f32 0.0, %v2846
        %v2848 = vpop.f32.mrb[0].mxu0
        %2849 = vmatprep.mubr.f32.mxu0 0.0
        %2850 = vmatmul.mubr.f32.gmra.mrb[0].mxu0 %v2670
        %v2851 = vpop.f32.mrb[0].mxu0
        %v2852 = vadd.f32 0.0, %v2851
        %v2853 = vpop.f32.mrb[0].mxu0
        %2854 = vmatprep.mubr.f32.mxu0 0.0
        %2855 = vmatmul.mubr.f32.gmra.mrb[0].mxu0 %v2673
        %v2856 = vpop.f32.mrb[0].mxu0
        %v2857 = vadd.f32 0.0, %v2856
        %v2858 = vpop.f32.mrb[0].mxu0
        %2859 = vmatprep.mubr.f32.mxu0 0.0
        %2860 = vmatmul.mubr.f32.gmra.mrb[0].mxu0 %v2676
        %v2861 = vpop.f32.mrb[0].mxu0
        %v2862 = vadd.f32 0.0, %v2861
        %v2863 = vpop.f32.mrb[0].mxu0
        %2864 = vmatprep.mubr.f32.mxu0 0.0
        %2865 = vmatmul.mubr.f32.gmra.mrb[0].mxu0 %v2679
        %v2866 = vpop.f32.mrb[0].mxu0
        %v2867 = vadd.f32 0.0, %v2866
        %v2868 = vpop.f32.mrb[0].mxu0
        %2869 = vmatprep.mubr.f32.mxu0 0.0
        %2870 = vmatmul.mubr.f32.gmra.mrb[0].mxu0 %v2682
        %v2871 = vpop.f32.mrb[0].mxu0
        %v2872 = vadd.f32 0.0, %v2871
        %v2873 = vpop.f32.mrb[0].mxu0
        %2874 = vmatprep.mubr.f32.mxu0 0.0
        %2875 = vmatmul.mubr.f32.gmra.mrb[0].mxu0 %v2685
        %v2876 = vpop.f32.mrb[0].mxu0
        %v2877 = vadd.f32 0.0, %v2876
        %v2878 = vpop.f32.mrb[0].mxu0
        %2879 = vmatprep.mubr.f32.mxu0 0.0
        %2880 = vmatmul.mubr.f32.gmra.mrb[0].mxu0 %v2688
        %v2881 = vpop.f32.mrb[0].mxu0
        %v2882 = vadd.f32 0.0, %v2881
        %v2883 = vpop.f32.mrb[0].mxu0
        %2884 = vmatprep.mubr.f32.mxu0 0.0
        %2885 = vmatmul.mubr.f32.gmra.mrb[0].mxu0 %v2691
        %v2886 = vpop.f32.mrb[0].mxu0
        %v2887 = vadd.f32 0.0, %v2886
        %v2888 = vpop.f32.mrb[0].mxu0
        %2889 = vmatprep.mubr.f32.mxu0 0.0
        %2890 = vmatmul.mubr.f32.gmra.mrb[0].mxu0 %v2694
        %v2891 = vpop.f32.mrb[0].mxu0
        %v2892 = vadd.f32 0.0, %v2891
        %v2893 = vpop.f32.mrb[0].mxu0
        %2894 = vmatprep.mubr.f32.mxu0 0.0
        %2895 = vmatmul.mubr.f32.gmra.mrb[0].mxu0 %v2697
        %v2896 = vpop.f32.mrb[0].mxu0
        %v2897 = vadd.f32 0.0, %v2896
        %v2898 = vpop.f32.mrb[0].mxu0
        %2899 = vmatprep.mubr.f32.mxu0 0.0
        %2900 = vmatmul.mubr.f32.gmra.mrb[0].mxu0 %v2700
        %v2901 = vpop.f32.mrb[0].mxu0
        %v2902 = vadd.f32 0.0, %v2901
        %v2903 = vpop.f32.mrb[0].mxu0
        %2904 = vmatprep.mubr.f32.mxu0 0.0
        %2905 = vmatmul.mubr.f32.gmra.mrb[0].mxu0 %v2703
        %v2906 = vpop.f32.mrb[0].mxu0
        %v2907 = vadd.f32 0.0, %v2906
        %v2908 = vpop.f32.mrb[0].mxu0
        %2909 = vmatprep.mubr.f32.mxu0 0.0
        %2910 = vmatmul.mubr.f32.gmra.mrb[0].mxu0 %v2706
        %v2911 = vpop.f32.mrb[0].mxu0
        %v2912 = vadd.f32 0.0, %v2911
        %v2913 = vpop.f32.mrb[0].mxu0
        %2914 = vmatprep.mubr.f32.mxu0 0.0
        %2915 = vmatmul.mubr.f32.gmra.mrb[0].mxu0 %v2709
        %v2916 = vpop.f32.mrb[0].mxu0
        %v2917 = vadd.f32 0.0, %v2916
        %v2918 = vpop.f32.mrb[0].mxu0
        %2919 = vmatprep.mubr.f32.mxu0 0.0
        %2920 = vmatmul.mubr.f32.gmra.mrb[0].mxu0 %v2712
        %v2921 = vpop.f32.mrb[0].mxu0
        %v2922 = vadd.f32 0.0, %v2921
        %v2923 = vpop.f32.mrb[0].mxu0
        %2924 = vmatprep.mubr.f32.mxu0 0.0
        %2925 = vmatmul.mubr.f32.gmra.mrb[0].mxu0 %v2715
        %v2926 = vpop.f32.mrb[0].mxu0
        %v2927 = vadd.f32 0.0, %v2926
        %v2928 = vpop.f32.mrb[0].mxu0
        %2929 = vmatprep.mubr.f32.mxu0 0.0
        %2930 = vmatmul.mubr.f32.gmra.mrb[0].mxu0 %v2718
        %v2931 = vpop.f32.mrb[0].mxu0
        %v2932 = vadd.f32 0.0, %v2931
        %v2933 = vpop.f32.mrb[0].mxu0
        %2934 = vmatprep.mubr.f32.mxu0 0.0
        %2935 = vmatmul.mubr.f32.gmra.mrb[0].mxu0 %v2721
        %v2936 = vpop.f32.mrb[0].mxu0
        %v2937 = vadd.f32 0.0, %v2936
        %v2938 = vpop.f32.mrb[0].mxu0
        %2939 = vmatprep.mubr.f32.mxu0 0.0
        %2940 = vmatmul.mubr.f32.gmra.mrb[0].mxu0 %v2724
        %v2941 = vpop.f32.mrb[0].mxu0
        %v2942 = vadd.f32 0.0, %v2941
        %v2943 = vpop.f32.mrb[0].mxu0
        %2944 = vmatprep.mubr.f32.mxu0 0.0
        %2945 = vmatmul.mubr.f32.gmra.mrb[0].mxu0 %v2727
        %v2946 = vpop.f32.mrb[0].mxu0
        %v2947 = vadd.f32 0.0, %v2946
        %v2948 = vpop.f32.mrb[0].mxu0
        %2949 = vmatprep.mubr.f32.mxu0 0.0
        %2950 = vmatmul.mubr.f32.gmra.mrb[0].mxu0 %v2730
        %v2951 = vpop.f32.mrb[0].mxu0
        %v2952 = vadd.f32 0.0, %v2951
        %v2953 = vpop.f32.mrb[0].mxu0
        %2954 = vmatprep.mubr.f32.mxu0 0.0
        %2955 = vmatmul.mubr.f32.gmra.mrb[0].mxu0 %v2733
        %v2956 = vpop.f32.mrb[0].mxu0
        %v2957 = vadd.f32 0.0, %v2956
        %v2958 = vpop.f32.mrb[0].mxu0
        %2959 = vdwg.mxu0
        %v2960 = vadd.f32 %v2574, %v2802
        %v2961 = vadd.f32 %v2575, %v2807
        %v2962 = vadd.f32 %v2576, %v2812
        %v2963 = vadd.f32 %v2577, %v2817
        %v2964 = vadd.f32 %v2578, %v2822
        %v2965 = vadd.f32 %v2579, %v2827
        %v2966 = vadd.f32 %v2580, %v2832
        %v2967 = vadd.f32 %v2581, %v2837
        %v2968 = vadd.f32 %v2582, %v2842
        %v2969 = vadd.f32 %v2583, %v2847
        %v2970 = vadd.f32 %v2584, %v2852
        %v2971 = vadd.f32 %v2585, %v2857
        %v2972 = vadd.f32 %v2586, %v2862
        %v2973 = vadd.f32 %v2587, %v2867
        %v2974 = vadd.f32 %v2588, %v2872
        %v2975 = vadd.f32 %v2589, %v2877
        %v2976 = vadd.f32 %v2590, %v2882
        %v2977 = vadd.f32 %v2591, %v2887
        %v2978 = vadd.f32 %v2592, %v2892
        %v2979 = vadd.f32 %v2593, %v2897
        %v2980 = vadd.f32 %v2594, %v2902
        %v2981 = vadd.f32 %v2595, %v2907
        %v2982 = vadd.f32 %v2596, %v2912
        %v2983 = vadd.f32 %v2597, %v2917
        %v2984 = vadd.f32 %v2598, %v2922
        %v2985 = vadd.f32 %v2599, %v2927
        %v2986 = vadd.f32 %v2600, %v2932
        %v2987 = vadd.f32 %v2601, %v2937
        %v2988 = vadd.f32 %v2602, %v2942
        %v2989 = vadd.f32 %v2603, %v2947
        %v2990 = vadd.f32 %v2604, %v2952
        %v2991 = vadd.f32 %v2605, %v2957
        %v2992 = vld [vmem:[%s2606 + $0x1] sm:$0xff]
        %v2993 = vld [vmem:[%s2606 + $0x9] sm:$0xff]
        %v2994 = vld [vmem:[%s2606 + $0x19] sm:$0xff]
        %v2995 = vld [vmem:[%s2606 + $0x21] sm:$0xff]
        %v2996 = vld [vmem:[%s2606 + $0x31] sm:$0xff]
        %v2997 = vld [vmem:[%s2606 + $0x39] sm:$0xff]
        %v2998 = vld [vmem:[%s2606 + $0x49] sm:$0xff]
        %v2999 = vld [vmem:[%s2606 + $0x51] sm:$0xff]
        %v3000 = vld [vmem:[%s2606 + $0x61] sm:$0xff]
        %v3001 = vld [vmem:[%s2606 + $0x69] sm:$0xff]
        %v3002 = vld [vmem:[%s2606 + $0x79] sm:$0xff]
        %v3003 = vld [vmem:[%s2606 + $0x81] sm:$0xff]
        %v3004 = vld [vmem:[%s2606 + $0x91] sm:$0xff]
        %v3005 = vld [vmem:[%s2606 + $0x99] sm:$0xff]
        %v3006 = vld [vmem:[%s2606 + $0xa9] sm:$0xff]
        %v3007 = vld [vmem:[%s2606 + $0xb1] sm:$0xff]
        %v3008 = vld [vmem:[%s2606 + $0xc1] sm:$0xff]
        %v3009 = vld [vmem:[%s2606 + $0xc9] sm:$0xff]
        %v3010 = vld [vmem:[%s2606 + $0xd9] sm:$0xff]
        %v3011 = vld [vmem:[%s2606 + $0xe1] sm:$0xff]
        %v3012 = vld [vmem:[%s2606 + $0xf1] sm:$0xff]
        %v3013 = vld [vmem:[%s2606 + $0xf9] sm:$0xff]
        %v3014 = vld [vmem:[%s2606 + $0x109] sm:$0xff]
        %v3015 = vld [vmem:[%s2606 + $0x111] sm:$0xff]
        %v3016 = vld [vmem:[%s2606 + $0x121] sm:$0xff]
        %v3017 = vld [vmem:[%s2606 + $0x129] sm:$0xff]
        %v3018 = vld [vmem:[%s2606 + $0x139] sm:$0xff]
        %v3019 = vld [vmem:[%s2606 + $0x141] sm:$0xff]
        %v3020 = vld [vmem:[%s2606 + $0x151] sm:$0xff]
        %v3021 = vld [vmem:[%s2606 + $0x159] sm:$0xff]
        %v3022 = vld [vmem:[%s2606 + $0x169] sm:$0xff]
        %v3023 = vld [vmem:[%s2606 + $0x171] sm:$0xff]
        %v3025 = vsel %vm422, %v2992, 0
        %v3028 = vsel %vm422, %v2993, 0
        %v3031 = vsel %vm422, %v2994, 0
        %v3034 = vsel %vm422, %v2995, 0
        %v3037 = vsel %vm422, %v2996, 0
        %v3040 = vsel %vm422, %v2997, 0
        %v3043 = vsel %vm422, %v2998, 0
        %v3046 = vsel %vm422, %v2999, 0
        %v3049 = vsel %vm422, %v3000, 0
        %v3052 = vsel %vm422, %v3001, 0
        %v3055 = vsel %vm422, %v3002, 0
        %v3058 = vsel %vm422, %v3003, 0
        %v3061 = vsel %vm422, %v3004, 0
        %v3064 = vsel %vm422, %v3005, 0
        %v3067 = vsel %vm422, %v3006, 0
        %v3070 = vsel %vm422, %v3007, 0
        %v3073 = vsel %vm422, %v3008, 0
        %v3076 = vsel %vm422, %v3009, 0
        %v3079 = vsel %vm422, %v3010, 0
        %v3082 = vsel %vm422, %v3011, 0
        %v3085 = vsel %vm422, %v3012, 0
        %v3088 = vsel %vm422, %v3013, 0
        %v3091 = vsel %vm422, %v3014, 0
        %v3094 = vsel %vm422, %v3015, 0
        %v3097 = vsel %vm422, %v3016, 0
        %v3100 = vsel %vm422, %v3017, 0
        %v3103 = vsel %vm422, %v3018, 0
        %v3106 = vsel %vm422, %v3019, 0
        %v3109 = vsel %vm422, %v3020, 0
        %v3112 = vsel %vm422, %v3021, 0
        %v3115 = vsel %vm422, %v3022, 0
        %v3118 = vsel %vm422, %v3023, 0
        %3120 = vmatprep.subr.mxu0 0.0
        %3121 = vmatpush1.msra.mxu0 %v354
        %3122 = vmatprep.subr.mxu0 0.0
        %3123 = vmatpush1.msra.mxu0 %v355
        %3124 = vmatprep.subr.mxu0 0.0
        %3125 = vmatpush1.msra.mxu0 0.0
        %3126 = vmatprep.subr.mxu0 0.0
        %3127 = vmatpush1.msra.mxu0 0.0
        %3128 = vmatprep.subr.mxu0 0.0
        %3129 = vmatpush1.msra.mxu0 0.0
        %3130 = vmatprep.subr.mxu0 0.0
        %3131 = vmatpush1.msra.mxu0 0.0
        %3132 = vmatprep.subr.mxu0 0.0
        %3133 = vmatpush1.msra.mxu0 0.0
        %3134 = vmatprep.subr.mxu0 0.0
        %3135 = vmatpush1.msra.mxu0 0.0
        %3136 = vmatprep.subr.mxu0 0.0
        %3137 = vmatpush1.msra.mxu0 0.0
        %3138 = vmatprep.subr.mxu0 0.0
        %3139 = vmatpush1.msra.mxu0 0.0
        %3140 = vmatprep.subr.mxu0 0.0
        %3141 = vmatpush1.msra.mxu0 0.0
        %3142 = vmatprep.subr.mxu0 0.0
        %3143 = vmatpush1.msra.mxu0 0.0
        %3144 = vmatprep.subr.mxu0 0.0
        %3145 = vmatpush1.msra.mxu0 0.0
        %3146 = vmatprep.subr.mxu0 0.0
        %3147 = vmatpush1.msra.mxu0 0.0
        %3148 = vmatprep.subr.mxu0 0.0
        %3149 = vmatpush1.msra.mxu0 0.0
        %3150 = vmatprep.subr.mxu0 0.0
        %3151 = vmatpush1.msra.mxu0 0.0
        %3152 = vmatprep.subr.mxu0 0.0
        %3153 = vmatpush1.msra.mxu0 0.0
        %3154 = vmatprep.subr.mxu0 0.0
        %3155 = vmatpush1.msra.mxu0 0.0
        %3156 = vmatprep.subr.mxu0 0.0
        %3157 = vmatpush1.msra.mxu0 0.0
        %3158 = vmatprep.subr.mxu0 0.0
        %3159 = vmatpush1.msra.mxu0 0.0
        %3160 = vmatprep.subr.mxu0 0.0
        %3161 = vmatpush1.msra.mxu0 0.0
        %3162 = vmatprep.subr.mxu0 0.0
        %3163 = vmatpush1.msra.mxu0 0.0
        %3164 = vmatprep.subr.mxu0 0.0
        %3165 = vmatpush1.msra.mxu0 0.0
        %3166 = vmatprep.subr.mxu0 0.0
        %3167 = vmatpush1.msra.mxu0 0.0
        %3168 = vmatprep.subr.mxu0 0.0
        %3169 = vmatpush1.msra.mxu0 0.0
        %3170 = vmatprep.subr.mxu0 0.0
        %3171 = vmatpush1.msra.mxu0 0.0
        %3172 = vmatprep.subr.mxu0 0.0
        %3173 = vmatpush1.msra.mxu0 0.0
        %3174 = vmatprep.subr.mxu0 0.0
        %3175 = vmatpush1.msra.mxu0 0.0
        %3176 = vmatprep.subr.mxu0 0.0
        %3177 = vmatpush1.msra.mxu0 0.0
        %3178 = vmatprep.subr.mxu0 0.0
        %3179 = vmatpush1.msra.mxu0 0.0
        %3180 = vmatprep.subr.mxu0 0.0
        %3181 = vmatpush1.msra.mxu0 0.0
        %3182 = vmatprep.subr.mxu0 0.0
        %3183 = vmatpush1.msra.mxu0 0.0
        %3184 = vmatprep.mubr.f32.mxu0 0.0
        %3185 = vmatmul.mubr.f32.gmra.mrb[0].mxu0 %v3025
        %v3186 = vpop.f32.mrb[0].mxu0
        %v3187 = vadd.f32 0.0, %v3186
        %v3188 = vpop.f32.mrb[0].mxu0
        %3189 = vmatprep.mubr.f32.mxu0 0.0
        %3190 = vmatmul.mubr.f32.gmra.mrb[0].mxu0 %v3028
        %v3191 = vpop.f32.mrb[0].mxu0
        %v3192 = vadd.f32 0.0, %v3191
        %v3193 = vpop.f32.mrb[0].mxu0
        %3194 = vmatprep.mubr.f32.mxu0 0.0
        %3195 = vmatmul.mubr.f32.gmra.mrb[0].mxu0 %v3031
        %v3196 = vpop.f32.mrb[0].mxu0
        %v3197 = vadd.f32 0.0, %v3196
        %v3198 = vpop.f32.mrb[0].mxu0
        %3199 = vmatprep.mubr.f32.mxu0 0.0
        %3200 = vmatmul.mubr.f32.gmra.mrb[0].mxu0 %v3034
        %v3201 = vpop.f32.mrb[0].mxu0
        %v3202 = vadd.f32 0.0, %v3201
        %v3203 = vpop.f32.mrb[0].mxu0
        %3204 = vmatprep.mubr.f32.mxu0 0.0
        %3205 = vmatmul.mubr.f32.gmra.mrb[0].mxu0 %v3037
        %v3206 = vpop.f32.mrb[0].mxu0
        %v3207 = vadd.f32 0.0, %v3206
        %v3208 = vpop.f32.mrb[0].mxu0
        %3209 = vmatprep.mubr.f32.mxu0 0.0
        %3210 = vmatmul.mubr.f32.gmra.mrb[0].mxu0 %v3040
        %v3211 = vpop.f32.mrb[0].mxu0
        %v3212 = vadd.f32 0.0, %v3211
        %v3213 = vpop.f32.mrb[0].mxu0
        %3214 = vmatprep.mubr.f32.mxu0 0.0
        %3215 = vmatmul.mubr.f32.gmra.mrb[0].mxu0 %v3043
        %v3216 = vpop.f32.mrb[0].mxu0
        %v3217 = vadd.f32 0.0, %v3216
        %v3218 = vpop.f32.mrb[0].mxu0
        %3219 = vmatprep.mubr.f32.mxu0 0.0
        %3220 = vmatmul.mubr.f32.gmra.mrb[0].mxu0 %v3046
        %v3221 = vpop.f32.mrb[0].mxu0
        %v3222 = vadd.f32 0.0, %v3221
        %v3223 = vpop.f32.mrb[0].mxu0
        %3224 = vmatprep.mubr.f32.mxu0 0.0
        %3225 = vmatmul.mubr.f32.gmra.mrb[0].mxu0 %v3049
        %v3226 = vpop.f32.mrb[0].mxu0
        %v3227 = vadd.f32 0.0, %v3226
        %v3228 = vpop.f32.mrb[0].mxu0
        %3229 = vmatprep.mubr.f32.mxu0 0.0
        %3230 = vmatmul.mubr.f32.gmra.mrb[0].mxu0 %v3052
        %v3231 = vpop.f32.mrb[0].mxu0
        %v3232 = vadd.f32 0.0, %v3231
        %v3233 = vpop.f32.mrb[0].mxu0
        %3234 = vmatprep.mubr.f32.mxu0 0.0
        %3235 = vmatmul.mubr.f32.gmra.mrb[0].mxu0 %v3055
        %v3236 = vpop.f32.mrb[0].mxu0
        %v3237 = vadd.f32 0.0, %v3236
        %v3238 = vpop.f32.mrb[0].mxu0
        %3239 = vmatprep.mubr.f32.mxu0 0.0
        %3240 = vmatmul.mubr.f32.gmra.mrb[0].mxu0 %v3058
        %v3241 = vpop.f32.mrb[0].mxu0
        %v3242 = vadd.f32 0.0, %v3241
        %v3243 = vpop.f32.mrb[0].mxu0
        %3244 = vmatprep.mubr.f32.mxu0 0.0
        %3245 = vmatmul.mubr.f32.gmra.mrb[0].mxu0 %v3061
        %v3246 = vpop.f32.mrb[0].mxu0
        %v3247 = vadd.f32 0.0, %v3246
        %v3248 = vpop.f32.mrb[0].mxu0
        %3249 = vmatprep.mubr.f32.mxu0 0.0
        %3250 = vmatmul.mubr.f32.gmra.mrb[0].mxu0 %v3064
        %v3251 = vpop.f32.mrb[0].mxu0
        %v3252 = vadd.f32 0.0, %v3251
        %v3253 = vpop.f32.mrb[0].mxu0
        %3254 = vmatprep.mubr.f32.mxu0 0.0
        %3255 = vmatmul.mubr.f32.gmra.mrb[0].mxu0 %v3067
        %v3256 = vpop.f32.mrb[0].mxu0
        %v3257 = vadd.f32 0.0, %v3256
        %v3258 = vpop.f32.mrb[0].mxu0
        %3259 = vmatprep.mubr.f32.mxu0 0.0
        %3260 = vmatmul.mubr.f32.gmra.mrb[0].mxu0 %v3070
        %v3261 = vpop.f32.mrb[0].mxu0
        %v3262 = vadd.f32 0.0, %v3261
        %v3263 = vpop.f32.mrb[0].mxu0
        %3264 = vmatprep.mubr.f32.mxu0 0.0
        %3265 = vmatmul.mubr.f32.gmra.mrb[0].mxu0 %v3073
        %v3266 = vpop.f32.mrb[0].mxu0
        %v3267 = vadd.f32 0.0, %v3266
        %v3268 = vpop.f32.mrb[0].mxu0
        %3269 = vmatprep.mubr.f32.mxu0 0.0
        %3270 = vmatmul.mubr.f32.gmra.mrb[0].mxu0 %v3076
        %v3271 = vpop.f32.mrb[0].mxu0
        %v3272 = vadd.f32 0.0, %v3271
        %v3273 = vpop.f32.mrb[0].mxu0
        %3274 = vmatprep.mubr.f32.mxu0 0.0
        %3275 = vmatmul.mubr.f32.gmra.mrb[0].mxu0 %v3079
        %v3276 = vpop.f32.mrb[0].mxu0
        %v3277 = vadd.f32 0.0, %v3276
        %v3278 = vpop.f32.mrb[0].mxu0
        %3279 = vmatprep.mubr.f32.mxu0 0.0
        %3280 = vmatmul.mubr.f32.gmra.mrb[0].mxu0 %v3082
        %v3281 = vpop.f32.mrb[0].mxu0
        %v3282 = vadd.f32 0.0, %v3281
        %v3283 = vpop.f32.mrb[0].mxu0
        %3284 = vmatprep.mubr.f32.mxu0 0.0
        %3285 = vmatmul.mubr.f32.gmra.mrb[0].mxu0 %v3085
        %v3286 = vpop.f32.mrb[0].mxu0
        %v3287 = vadd.f32 0.0, %v3286
        %v3288 = vpop.f32.mrb[0].mxu0
        %3289 = vmatprep.mubr.f32.mxu0 0.0
        %3290 = vmatmul.mubr.f32.gmra.mrb[0].mxu0 %v3088
        %v3291 = vpop.f32.mrb[0].mxu0
        %v3292 = vadd.f32 0.0, %v3291
        %v3293 = vpop.f32.mrb[0].mxu0
        %3294 = vmatprep.mubr.f32.mxu0 0.0
        %3295 = vmatmul.mubr.f32.gmra.mrb[0].mxu0 %v3091
        %v3296 = vpop.f32.mrb[0].mxu0
        %v3297 = vadd.f32 0.0, %v3296
        %v3298 = vpop.f32.mrb[0].mxu0
        %3299 = vmatprep.mubr.f32.mxu0 0.0
        %3300 = vmatmul.mubr.f32.gmra.mrb[0].mxu0 %v3094
        %v3301 = vpop.f32.mrb[0].mxu0
        %v3302 = vadd.f32 0.0, %v3301
        %v3303 = vpop.f32.mrb[0].mxu0
        %3304 = vmatprep.mubr.f32.mxu0 0.0
        %3305 = vmatmul.mubr.f32.gmra.mrb[0].mxu0 %v3097
        %v3306 = vpop.f32.mrb[0].mxu0
        %v3307 = vadd.f32 0.0, %v3306
        %v3308 = vpop.f32.mrb[0].mxu0
        %3309 = vmatprep.mubr.f32.mxu0 0.0
        %3310 = vmatmul.mubr.f32.gmra.mrb[0].mxu0 %v3100
        %v3311 = vpop.f32.mrb[0].mxu0
        %v3312 = vadd.f32 0.0, %v3311
        %v3313 = vpop.f32.mrb[0].mxu0
        %3314 = vmatprep.mubr.f32.mxu0 0.0
        %3315 = vmatmul.mubr.f32.gmra.mrb[0].mxu0 %v3103
        %v3316 = vpop.f32.mrb[0].mxu0
        %v3317 = vadd.f32 0.0, %v3316
        %v3318 = vpop.f32.mrb[0].mxu0
        %3319 = vmatprep.mubr.f32.mxu0 0.0
        %3320 = vmatmul.mubr.f32.gmra.mrb[0].mxu0 %v3106
        %v3321 = vpop.f32.mrb[0].mxu0
        %v3322 = vadd.f32 0.0, %v3321
        %v3323 = vpop.f32.mrb[0].mxu0
        %3324 = vmatprep.mubr.f32.mxu0 0.0
        %3325 = vmatmul.mubr.f32.gmra.mrb[0].mxu0 %v3109
        %v3326 = vpop.f32.mrb[0].mxu0
        %v3327 = vadd.f32 0.0, %v3326
        %v3328 = vpop.f32.mrb[0].mxu0
        %3329 = vmatprep.mubr.f32.mxu0 0.0
        %3330 = vmatmul.mubr.f32.gmra.mrb[0].mxu0 %v3112
        %v3331 = vpop.f32.mrb[0].mxu0
        %v3332 = vadd.f32 0.0, %v3331
        %v3333 = vpop.f32.mrb[0].mxu0
        %3334 = vmatprep.mubr.f32.mxu0 0.0
        %3335 = vmatmul.mubr.f32.gmra.mrb[0].mxu0 %v3115
        %v3336 = vpop.f32.mrb[0].mxu0
        %v3337 = vadd.f32 0.0, %v3336
        %v3338 = vpop.f32.mrb[0].mxu0
        %3339 = vmatprep.mubr.f32.mxu0 0.0
        %3340 = vmatmul.mubr.f32.gmra.mrb[0].mxu0 %v3118
        %v3341 = vpop.f32.mrb[0].mxu0
        %v3342 = vadd.f32 0.0, %v3341
        %v3343 = vpop.f32.mrb[0].mxu0
        %3344 = vdwg.mxu0
        %v3345 = vadd.f32 %v2960, %v3187
        %v3346 = vadd.f32 %v2961, %v3192
        %v3347 = vadd.f32 %v2962, %v3197
        %v3348 = vadd.f32 %v2963, %v3202
        %v3349 = vadd.f32 %v2964, %v3207
        %v3350 = vadd.f32 %v2965, %v3212
        %v3351 = vadd.f32 %v2966, %v3217
        %v3352 = vadd.f32 %v2967, %v3222
        %v3353 = vadd.f32 %v2968, %v3227
        %v3354 = vadd.f32 %v2969, %v3232
        %v3355 = vadd.f32 %v2970, %v3237
        %v3356 = vadd.f32 %v2971, %v3242
        %v3357 = vadd.f32 %v2972, %v3247
        %v3358 = vadd.f32 %v2973, %v3252
        %v3359 = vadd.f32 %v2974, %v3257
        %v3360 = vadd.f32 %v2975, %v3262
        %v3361 = vadd.f32 %v2976, %v3267
        %v3362 = vadd.f32 %v2977, %v3272
        %v3363 = vadd.f32 %v2978, %v3277
        %v3364 = vadd.f32 %v2979, %v3282
        %v3365 = vadd.f32 %v2980, %v3287
        %v3366 = vadd.f32 %v2981, %v3292
        %v3367 = vadd.f32 %v2982, %v3297
        %v3368 = vadd.f32 %v2983, %v3302
        %v3369 = vadd.f32 %v2984, %v3307
        %v3370 = vadd.f32 %v2985, %v3312
        %v3371 = vadd.f32 %v2986, %v3317
        %v3372 = vadd.f32 %v2987, %v3322
        %v3373 = vadd.f32 %v2988, %v3327
        %v3374 = vadd.f32 %v2989, %v3332
        %v3375 = vadd.f32 %v2990, %v3337
        %v3376 = vadd.f32 %v2991, %v3342
        %v3377 = vld [vmem:[%s2606 + $0x2] sm:$0xff]
        %v3378 = vld [vmem:[%s2606 + $0xa] sm:$0xff]
        %v3379 = vld [vmem:[%s2606 + $0x1a] sm:$0xff]
        %v3380 = vld [vmem:[%s2606 + $0x22] sm:$0xff]
        %v3381 = vld [vmem:[%s2606 + $0x32] sm:$0xff]
        %v3382 = vld [vmem:[%s2606 + $0x3a] sm:$0xff]
        %v3383 = vld [vmem:[%s2606 + $0x4a] sm:$0xff]
        %v3384 = vld [vmem:[%s2606 + $0x52] sm:$0xff]
        %v3385 = vld [vmem:[%s2606 + $0x62] sm:$0xff]
        %v3386 = vld [vmem:[%s2606 + $0x6a] sm:$0xff]
        %v3387 = vld [vmem:[%s2606 + $0x7a] sm:$0xff]
        %v3388 = vld [vmem:[%s2606 + $0x82] sm:$0xff]
        %v3389 = vld [vmem:[%s2606 + $0x92] sm:$0xff]
        %v3390 = vld [vmem:[%s2606 + $0x9a] sm:$0xff]
        %v3391 = vld [vmem:[%s2606 + $0xaa] sm:$0xff]
        %v3392 = vld [vmem:[%s2606 + $0xb2] sm:$0xff]
        %v3393 = vld [vmem:[%s2606 + $0xc2] sm:$0xff]
        %v3394 = vld [vmem:[%s2606 + $0xca] sm:$0xff]
        %v3395 = vld [vmem:[%s2606 + $0xda] sm:$0xff]
        %v3396 = vld [vmem:[%s2606 + $0xe2] sm:$0xff]
        %v3397 = vld [vmem:[%s2606 + $0xf2] sm:$0xff]
        %v3398 = vld [vmem:[%s2606 + $0xfa] sm:$0xff]
        %v3399 = vld [vmem:[%s2606 + $0x10a] sm:$0xff]
        %v3400 = vld [vmem:[%s2606 + $0x112] sm:$0xff]
        %v3401 = vld [vmem:[%s2606 + $0x122] sm:$0xff]
        %v3402 = vld [vmem:[%s2606 + $0x12a] sm:$0xff]
        %v3403 = vld [vmem:[%s2606 + $0x13a] sm:$0xff]
        %v3404 = vld [vmem:[%s2606 + $0x142] sm:$0xff]
        %v3405 = vld [vmem:[%s2606 + $0x152] sm:$0xff]
        %v3406 = vld [vmem:[%s2606 + $0x15a] sm:$0xff]
        %v3407 = vld [vmem:[%s2606 + $0x16a] sm:$0xff]
        %v3408 = vld [vmem:[%s2606 + $0x172] sm:$0xff]
        %v3410 = vsel %vm422, %v3377, 0
        %v3413 = vsel %vm422, %v3378, 0
        %v3416 = vsel %vm422, %v3379, 0
        %v3419 = vsel %vm422, %v3380, 0
        %v3422 = vsel %vm422, %v3381, 0
        %v3425 = vsel %vm422, %v3382, 0
        %v3428 = vsel %vm422, %v3383, 0
        %v3431 = vsel %vm422, %v3384, 0
        %v3434 = vsel %vm422, %v3385, 0
        %v3437 = vsel %vm422, %v3386, 0
        %v3440 = vsel %vm422, %v3387, 0
        %v3443 = vsel %vm422, %v3388, 0
        %v3446 = vsel %vm422, %v3389, 0
        %v3449 = vsel %vm422, %v3390, 0
        %v3452 = vsel %vm422, %v3391, 0
        %v3455 = vsel %vm422, %v3392, 0
        %v3458 = vsel %vm422, %v3393, 0
        %v3461 = vsel %vm422, %v3394, 0
        %v3464 = vsel %vm422, %v3395, 0
        %v3467 = vsel %vm422, %v3396, 0
        %v3470 = vsel %vm422, %v3397, 0
        %v3473 = vsel %vm422, %v3398, 0
        %v3476 = vsel %vm422, %v3399, 0
        %v3479 = vsel %vm422, %v3400, 0
        %v3482 = vsel %vm422, %v3401, 0
        %v3485 = vsel %vm422, %v3402, 0
        %v3488 = vsel %vm422, %v3403, 0
        %v3491 = vsel %vm422, %v3404, 0
        %v3494 = vsel %vm422, %v3405, 0
        %v3497 = vsel %vm422, %v3406, 0
        %v3500 = vsel %vm422, %v3407, 0
        %v3503 = vsel %vm422, %v3408, 0
        %3505 = vmatprep.subr.mxu0 0.0
        %3506 = vmatpush1.msra.mxu0 %v356
        %3507 = vmatprep.subr.mxu0 0.0
        %3508 = vmatpush1.msra.mxu0 %v357
        %3509 = vmatprep.subr.mxu0 0.0
        %3510 = vmatpush1.msra.mxu0 0.0
        %3511 = vmatprep.subr.mxu0 0.0
        %3512 = vmatpush1.msra.mxu0 0.0
        %3513 = vmatprep.subr.mxu0 0.0
        %3514 = vmatpush1.msra.mxu0 0.0
        %3515 = vmatprep.subr.mxu0 0.0
        %3516 = vmatpush1.msra.mxu0 0.0
        %3517 = vmatprep.subr.mxu0 0.0
        %3518 = vmatpush1.msra.mxu0 0.0
        %3519 = vmatprep.subr.mxu0 0.0
        %3520 = vmatpush1.msra.mxu0 0.0
        %3521 = vmatprep.subr.mxu0 0.0
        %3522 = vmatpush1.msra.mxu0 0.0
        %3523 = vmatprep.subr.mxu0 0.0
        %3524 = vmatpush1.msra.mxu0 0.0
        %3525 = vmatprep.subr.mxu0 0.0
        %3526 = vmatpush1.msra.mxu0 0.0
        %3527 = vmatprep.subr.mxu0 0.0
        %3528 = vmatpush1.msra.mxu0 0.0
        %3529 = vmatprep.subr.mxu0 0.0
        %3530 = vmatpush1.msra.mxu0 0.0
        %3531 = vmatprep.subr.mxu0 0.0
        %3532 = vmatpush1.msra.mxu0 0.0
        %3533 = vmatprep.subr.mxu0 0.0
        %3534 = vmatpush1.msra.mxu0 0.0
        %3535 = vmatprep.subr.mxu0 0.0
        %3536 = vmatpush1.msra.mxu0 0.0
        %3537 = vmatprep.subr.mxu0 0.0
        %3538 = vmatpush1.msra.mxu0 0.0
        %3539 = vmatprep.subr.mxu0 0.0
        %3540 = vmatpush1.msra.mxu0 0.0
        %3541 = vmatprep.subr.mxu0 0.0
        %3542 = vmatpush1.msra.mxu0 0.0
        %3543 = vmatprep.subr.mxu0 0.0
        %3544 = vmatpush1.msra.mxu0 0.0
        %3545 = vmatprep.subr.mxu0 0.0
        %3546 = vmatpush1.msra.mxu0 0.0
        %3547 = vmatprep.subr.mxu0 0.0
        %3548 = vmatpush1.msra.mxu0 0.0
        %3549 = vmatprep.subr.mxu0 0.0
        %3550 = vmatpush1.msra.mxu0 0.0
        %3551 = vmatprep.subr.mxu0 0.0
        %3552 = vmatpush1.msra.mxu0 0.0
        %3553 = vmatprep.subr.mxu0 0.0
        %3554 = vmatpush1.msra.mxu0 0.0
        %3555 = vmatprep.subr.mxu0 0.0
        %3556 = vmatpush1.msra.mxu0 0.0
        %3557 = vmatprep.subr.mxu0 0.0
        %3558 = vmatpush1.msra.mxu0 0.0
        %3559 = vmatprep.subr.mxu0 0.0
        %3560 = vmatpush1.msra.mxu0 0.0
        %3561 = vmatprep.subr.mxu0 0.0
        %3562 = vmatpush1.msra.mxu0 0.0
        %3563 = vmatprep.subr.mxu0 0.0
        %3564 = vmatpush1.msra.mxu0 0.0
        %3565 = vmatprep.subr.mxu0 0.0
        %3566 = vmatpush1.msra.mxu0 0.0
        %3567 = vmatprep.subr.mxu0 0.0
        %3568 = vmatpush1.msra.mxu0 0.0
        %3569 = vmatprep.mubr.f32.mxu0 0.0
        %3570 = vmatmul.mubr.f32.gmra.mrb[0].mxu0 %v3410
        %v3571 = vpop.f32.mrb[0].mxu0
        %v3572 = vadd.f32 0.0, %v3571
        %v3573 = vpop.f32.mrb[0].mxu0
        %3574 = vmatprep.mubr.f32.mxu0 0.0
        %3575 = vmatmul.mubr.f32.gmra.mrb[0].mxu0 %v3413
        %v3576 = vpop.f32.mrb[0].mxu0
        %v3577 = vadd.f32 0.0, %v3576
        %v3578 = vpop.f32.mrb[0].mxu0
        %3579 = vmatprep.mubr.f32.mxu0 0.0
        %3580 = vmatmul.mubr.f32.gmra.mrb[0].mxu0 %v3416
        %v3581 = vpop.f32.mrb[0].mxu0
        %v3582 = vadd.f32 0.0, %v3581
        %v3583 = vpop.f32.mrb[0].mxu0
        %3584 = vmatprep.mubr.f32.mxu0 0.0
        %3585 = vmatmul.mubr.f32.gmra.mrb[0].mxu0 %v3419
        %v3586 = vpop.f32.mrb[0].mxu0
        %v3587 = vadd.f32 0.0, %v3586
        %v3588 = vpop.f32.mrb[0].mxu0
        %3589 = vmatprep.mubr.f32.mxu0 0.0
        %3590 = vmatmul.mubr.f32.gmra.mrb[0].mxu0 %v3422
        %v3591 = vpop.f32.mrb[0].mxu0
        %v3592 = vadd.f32 0.0, %v3591
        %v3593 = vpop.f32.mrb[0].mxu0
        %3594 = vmatprep.mubr.f32.mxu0 0.0
        %3595 = vmatmul.mubr.f32.gmra.mrb[0].mxu0 %v3425
        %v3596 = vpop.f32.mrb[0].mxu0
        %v3597 = vadd.f32 0.0, %v3596
        %v3598 = vpop.f32.mrb[0].mxu0
        %3599 = vmatprep.mubr.f32.mxu0 0.0
        %3600 = vmatmul.mubr.f32.gmra.mrb[0].mxu0 %v3428
        %v3601 = vpop.f32.mrb[0].mxu0
        %v3602 = vadd.f32 0.0, %v3601
        %v3603 = vpop.f32.mrb[0].mxu0
        %3604 = vmatprep.mubr.f32.mxu0 0.0
        %3605 = vmatmul.mubr.f32.gmra.mrb[0].mxu0 %v3431
        %v3606 = vpop.f32.mrb[0].mxu0
        %v3607 = vadd.f32 0.0, %v3606
        %v3608 = vpop.f32.mrb[0].mxu0
        %3609 = vmatprep.mubr.f32.mxu0 0.0
        %3610 = vmatmul.mubr.f32.gmra.mrb[0].mxu0 %v3434
        %v3611 = vpop.f32.mrb[0].mxu0
        %v3612 = vadd.f32 0.0, %v3611
        %v3613 = vpop.f32.mrb[0].mxu0
        %3614 = vmatprep.mubr.f32.mxu0 0.0
        %3615 = vmatmul.mubr.f32.gmra.mrb[0].mxu0 %v3437
        %v3616 = vpop.f32.mrb[0].mxu0
        %v3617 = vadd.f32 0.0, %v3616
        %v3618 = vpop.f32.mrb[0].mxu0
        %3619 = vmatprep.mubr.f32.mxu0 0.0
        %3620 = vmatmul.mubr.f32.gmra.mrb[0].mxu0 %v3440
        %v3621 = vpop.f32.mrb[0].mxu0
        %v3622 = vadd.f32 0.0, %v3621
        %v3623 = vpop.f32.mrb[0].mxu0
        %3624 = vmatprep.mubr.f32.mxu0 0.0
        %3625 = vmatmul.mubr.f32.gmra.mrb[0].mxu0 %v3443
        %v3626 = vpop.f32.mrb[0].mxu0
        %v3627 = vadd.f32 0.0, %v3626
        %v3628 = vpop.f32.mrb[0].mxu0
        %3629 = vmatprep.mubr.f32.mxu0 0.0
        %3630 = vmatmul.mubr.f32.gmra.mrb[0].mxu0 %v3446
        %v3631 = vpop.f32.mrb[0].mxu0
        %v3632 = vadd.f32 0.0, %v3631
        %v3633 = vpop.f32.mrb[0].mxu0
        %3634 = vmatprep.mubr.f32.mxu0 0.0
        %3635 = vmatmul.mubr.f32.gmra.mrb[0].mxu0 %v3449
        %v3636 = vpop.f32.mrb[0].mxu0
        %v3637 = vadd.f32 0.0, %v3636
        %v3638 = vpop.f32.mrb[0].mxu0
        %3639 = vmatprep.mubr.f32.mxu0 0.0
        %3640 = vmatmul.mubr.f32.gmra.mrb[0].mxu0 %v3452
        %v3641 = vpop.f32.mrb[0].mxu0
        %v3642 = vadd.f32 0.0, %v3641
        %v3643 = vpop.f32.mrb[0].mxu0
        %3644 = vmatprep.mubr.f32.mxu0 0.0
        %3645 = vmatmul.mubr.f32.gmra.mrb[0].mxu0 %v3455
        %v3646 = vpop.f32.mrb[0].mxu0
        %v3647 = vadd.f32 0.0, %v3646
        %v3648 = vpop.f32.mrb[0].mxu0
        %3649 = vmatprep.mubr.f32.mxu0 0.0
        %3650 = vmatmul.mubr.f32.gmra.mrb[0].mxu0 %v3458
        %v3651 = vpop.f32.mrb[0].mxu0
        %v3652 = vadd.f32 0.0, %v3651
        %v3653 = vpop.f32.mrb[0].mxu0
        %3654 = vmatprep.mubr.f32.mxu0 0.0
        %3655 = vmatmul.mubr.f32.gmra.mrb[0].mxu0 %v3461
        %v3656 = vpop.f32.mrb[0].mxu0
        %v3657 = vadd.f32 0.0, %v3656
        %v3658 = vpop.f32.mrb[0].mxu0
        %3659 = vmatprep.mubr.f32.mxu0 0.0
        %3660 = vmatmul.mubr.f32.gmra.mrb[0].mxu0 %v3464
        %v3661 = vpop.f32.mrb[0].mxu0
        %v3662 = vadd.f32 0.0, %v3661
        %v3663 = vpop.f32.mrb[0].mxu0
        %3664 = vmatprep.mubr.f32.mxu0 0.0
        %3665 = vmatmul.mubr.f32.gmra.mrb[0].mxu0 %v3467
        %v3666 = vpop.f32.mrb[0].mxu0
        %v3667 = vadd.f32 0.0, %v3666
        %v3668 = vpop.f32.mrb[0].mxu0
        %3669 = vmatprep.mubr.f32.mxu0 0.0
        %3670 = vmatmul.mubr.f32.gmra.mrb[0].mxu0 %v3470
        %v3671 = vpop.f32.mrb[0].mxu0
        %v3672 = vadd.f32 0.0, %v3671
        %v3673 = vpop.f32.mrb[0].mxu0
        %3674 = vmatprep.mubr.f32.mxu0 0.0
        %3675 = vmatmul.mubr.f32.gmra.mrb[0].mxu0 %v3473
        %v3676 = vpop.f32.mrb[0].mxu0
        %v3677 = vadd.f32 0.0, %v3676
        %v3678 = vpop.f32.mrb[0].mxu0
        %3679 = vmatprep.mubr.f32.mxu0 0.0
        %3680 = vmatmul.mubr.f32.gmra.mrb[0].mxu0 %v3476
        %v3681 = vpop.f32.mrb[0].mxu0
        %v3682 = vadd.f32 0.0, %v3681
        %v3683 = vpop.f32.mrb[0].mxu0
        %3684 = vmatprep.mubr.f32.mxu0 0.0
        %3685 = vmatmul.mubr.f32.gmra.mrb[0].mxu0 %v3479
        %v3686 = vpop.f32.mrb[0].mxu0
        %v3687 = vadd.f32 0.0, %v3686
        %v3688 = vpop.f32.mrb[0].mxu0
        %3689 = vmatprep.mubr.f32.mxu0 0.0
        %3690 = vmatmul.mubr.f32.gmra.mrb[0].mxu0 %v3482
        %v3691 = vpop.f32.mrb[0].mxu0
        %v3692 = vadd.f32 0.0, %v3691
        %v3693 = vpop.f32.mrb[0].mxu0
        %3694 = vmatprep.mubr.f32.mxu0 0.0
        %3695 = vmatmul.mubr.f32.gmra.mrb[0].mxu0 %v3485
        %v3696 = vpop.f32.mrb[0].mxu0
        %v3697 = vadd.f32 0.0, %v3696
        %v3698 = vpop.f32.mrb[0].mxu0
        %3699 = vmatprep.mubr.f32.mxu0 0.0
        %3700 = vmatmul.mubr.f32.gmra.mrb[0].mxu0 %v3488
        %v3701 = vpop.f32.mrb[0].mxu0
        %v3702 = vadd.f32 0.0, %v3701
        %v3703 = vpop.f32.mrb[0].mxu0
        %3704 = vmatprep.mubr.f32.mxu0 0.0
        %3705 = vmatmul.mubr.f32.gmra.mrb[0].mxu0 %v3491
        %v3706 = vpop.f32.mrb[0].mxu0
        %v3707 = vadd.f32 0.0, %v3706
        %v3708 = vpop.f32.mrb[0].mxu0
        %3709 = vmatprep.mubr.f32.mxu0 0.0
        %3710 = vmatmul.mubr.f32.gmra.mrb[0].mxu0 %v3494
        %v3711 = vpop.f32.mrb[0].mxu0
        %v3712 = vadd.f32 0.0, %v3711
        %v3713 = vpop.f32.mrb[0].mxu0
        %3714 = vmatprep.mubr.f32.mxu0 0.0
        %3715 = vmatmul.mubr.f32.gmra.mrb[0].mxu0 %v3497
        %v3716 = vpop.f32.mrb[0].mxu0
        %v3717 = vadd.f32 0.0, %v3716
        %v3718 = vpop.f32.mrb[0].mxu0
        %3719 = vmatprep.mubr.f32.mxu0 0.0
        %3720 = vmatmul.mubr.f32.gmra.mrb[0].mxu0 %v3500
        %v3721 = vpop.f32.mrb[0].mxu0
        %v3722 = vadd.f32 0.0, %v3721
        %v3723 = vpop.f32.mrb[0].mxu0
        %3724 = vmatprep.mubr.f32.mxu0 0.0
        %3725 = vmatmul.mubr.f32.gmra.mrb[0].mxu0 %v3503
        %v3726 = vpop.f32.mrb[0].mxu0
        %v3727 = vadd.f32 0.0, %v3726
        %v3728 = vpop.f32.mrb[0].mxu0
        %3729 = vdwg.mxu0
        %v3730 = vadd.f32 %v3345, %v3572
        %v3731 = vadd.f32 %v3346, %v3577
        %v3732 = vadd.f32 %v3347, %v3582
        %v3733 = vadd.f32 %v3348, %v3587
        %v3734 = vadd.f32 %v3349, %v3592
        %v3735 = vadd.f32 %v3350, %v3597
        %v3736 = vadd.f32 %v3351, %v3602
        %v3737 = vadd.f32 %v3352, %v3607
        %v3738 = vadd.f32 %v3353, %v3612
        %v3739 = vadd.f32 %v3354, %v3617
        %v3740 = vadd.f32 %v3355, %v3622
        %v3741 = vadd.f32 %v3356, %v3627
        %v3742 = vadd.f32 %v3357, %v3632
        %v3743 = vadd.f32 %v3358, %v3637
        %v3744 = vadd.f32 %v3359, %v3642
        %v3745 = vadd.f32 %v3360, %v3647
        %v3746 = vadd.f32 %v3361, %v3652
        %v3747 = vadd.f32 %v3362, %v3657
        %v3748 = vadd.f32 %v3363, %v3662
        %v3749 = vadd.f32 %v3364, %v3667
        %v3750 = vadd.f32 %v3365, %v3672
        %v3751 = vadd.f32 %v3366, %v3677
        %v3752 = vadd.f32 %v3367, %v3682
        %v3753 = vadd.f32 %v3368, %v3687
        %v3754 = vadd.f32 %v3369, %v3692
        %v3755 = vadd.f32 %v3370, %v3697
        %v3756 = vadd.f32 %v3371, %v3702
        %v3757 = vadd.f32 %v3372, %v3707
        %v3758 = vadd.f32 %v3373, %v3712
        %v3759 = vadd.f32 %v3374, %v3717
        %v3760 = vadd.f32 %v3375, %v3722
        %v3761 = vadd.f32 %v3376, %v3727
        %v3762 = vld [vmem:[%s214] sm:$0x1]
        %v3764 = vlaneseq
        %v3765 = vshrl.u32 %v3764, 7
        %v3766 = vsub.s32 0, %v3765
        %v3767 = vrot.slane %v3762, %v3766
        %v3769 = vadd.f32 %v3730, %v3767
        %v3770 = vadd.f32 %v3731, %v3767
        %v3771 = vadd.f32 %v3732, %v3767
        %v3772 = vadd.f32 %v3733, %v3767
        %v3773 = vadd.f32 %v3734, %v3767
        %v3774 = vadd.f32 %v3735, %v3767
        %v3775 = vadd.f32 %v3736, %v3767
        %v3776 = vadd.f32 %v3737, %v3767
        %v3777 = vadd.f32 %v3738, %v3767
        %v3778 = vadd.f32 %v3739, %v3767
        %v3779 = vadd.f32 %v3740, %v3767
        %v3780 = vadd.f32 %v3741, %v3767
        %v3781 = vadd.f32 %v3742, %v3767
        %v3782 = vadd.f32 %v3743, %v3767
        %v3783 = vadd.f32 %v3744, %v3767
        %v3784 = vadd.f32 %v3745, %v3767
        %v3785 = vadd.f32 %v3746, %v3767
        %v3786 = vadd.f32 %v3747, %v3767
        %v3787 = vadd.f32 %v3748, %v3767
        %v3788 = vadd.f32 %v3749, %v3767
        %v3789 = vadd.f32 %v3750, %v3767
        %v3790 = vadd.f32 %v3751, %v3767
        %v3791 = vadd.f32 %v3752, %v3767
        %v3792 = vadd.f32 %v3753, %v3767
        %v3793 = vadd.f32 %v3754, %v3767
        %v3794 = vadd.f32 %v3755, %v3767
        %v3795 = vadd.f32 %v3756, %v3767
        %v3796 = vadd.f32 %v3757, %v3767
        %v3797 = vadd.f32 %v3758, %v3767
        %v3798 = vadd.f32 %v3759, %v3767
        %v3799 = vadd.f32 %v3760, %v3767
        %v3800 = vadd.f32 %v3761, %v3767
        %p3801 = scmp.lt.s32.totalorder %s22, 4
        // Predicated region
        $region37: #{tpu_custom_call.1} parent=31 // pred_check
          %p3802 = pneg %p3801
        $region38: #{tpu_custom_call.1} parent=31 // pred_check_branch
          %3804 = sbr.rel (%p3802) target = $region40
        $region39: #{tpu_custom_call.1} parent=31 // pred_region
          %v3805 = vmax.f32 %v3769, 0.0
          %v3806 = vmax.f32 %v3770, 0.0
          %v3807 = vmax.f32 %v3771, 0.0
          %v3808 = vmax.f32 %v3772, 0.0
          %v3809 = vmax.f32 %v3773, 0.0
          %v3810 = vmax.f32 %v3774, 0.0
          %v3811 = vmax.f32 %v3775, 0.0
          %v3812 = vmax.f32 %v3776, 0.0
          %v3813 = vmax.f32 %v3777, 0.0
          %v3814 = vmax.f32 %v3778, 0.0
          %v3815 = vmax.f32 %v3779, 0.0
          %v3816 = vmax.f32 %v3780, 0.0
          %v3817 = vmax.f32 %v3781, 0.0
          %v3818 = vmax.f32 %v3782, 0.0
          %v3819 = vmax.f32 %v3783, 0.0
          %v3820 = vmax.f32 %v3784, 0.0
          %v3821 = vmax.f32 %v3785, 0.0
          %v3822 = vmax.f32 %v3786, 0.0
          %v3823 = vmax.f32 %v3787, 0.0
          %v3824 = vmax.f32 %v3788, 0.0
          %v3825 = vmax.f32 %v3789, 0.0
          %v3826 = vmax.f32 %v3790, 0.0
          %v3827 = vmax.f32 %v3791, 0.0
          %v3828 = vmax.f32 %v3792, 0.0
          %v3829 = vmax.f32 %v3793, 0.0
          %v3830 = vmax.f32 %v3794, 0.0
          %v3831 = vmax.f32 %v3795, 0.0
          %v3832 = vmax.f32 %v3796, 0.0
          %v3833 = vmax.f32 %v3797, 0.0
          %v3834 = vmax.f32 %v3798, 0.0
          %v3835 = vmax.f32 %v3799, 0.0
          %v3836 = vmax.f32 %v3800, 0.0
          %3837 = vst.msk [vmem:[%s1450 + $0x1] sm:$0xff] %vm422, %v3805
          %3838 = vst.msk [vmem:[%s1450 + $0x9] sm:$0xff] %vm422, %v3806
          %3839 = vst.msk [vmem:[%s1450 + $0x19] sm:$0xff] %vm422, %v3807
          %3840 = vst.msk [vmem:[%s1450 + $0x21] sm:$0xff] %vm422, %v3808
          %3841 = vst.msk [vmem:[%s1450 + $0x31] sm:$0xff] %vm422, %v3809
          %3842 = vst.msk [vmem:[%s1450 + $0x39] sm:$0xff] %vm422, %v3810
          %3843 = vst.msk [vmem:[%s1450 + $0x49] sm:$0xff] %vm422, %v3811
          %3844 = vst.msk [vmem:[%s1450 + $0x51] sm:$0xff] %vm422, %v3812
          %3845 = vst.msk [vmem:[%s1450 + $0x61] sm:$0xff] %vm422, %v3813
          %3846 = vst.msk [vmem:[%s1450 + $0x69] sm:$0xff] %vm422, %v3814
          %3847 = vst.msk [vmem:[%s1450 + $0x79] sm:$0xff] %vm422, %v3815
          %3848 = vst.msk [vmem:[%s1450 + $0x81] sm:$0xff] %vm422, %v3816
          %3849 = vst.msk [vmem:[%s1450 + $0x91] sm:$0xff] %vm422, %v3817
          %3850 = vst.msk [vmem:[%s1450 + $0x99] sm:$0xff] %vm422, %v3818
          %3851 = vst.msk [vmem:[%s1450 + $0xa9] sm:$0xff] %vm422, %v3819
          %3852 = vst.msk [vmem:[%s1450 + $0xb1] sm:$0xff] %vm422, %v3820
          %3853 = vst.msk [vmem:[%s1450 + $0xc1] sm:$0xff] %vm422, %v3821
          %3854 = vst.msk [vmem:[%s1450 + $0xc9] sm:$0xff] %vm422, %v3822
          %3855 = vst.msk [vmem:[%s1450 + $0xd9] sm:$0xff] %vm422, %v3823
          %3856 = vst.msk [vmem:[%s1450 + $0xe1] sm:$0xff] %vm422, %v3824
          %3857 = vst.msk [vmem:[%s1450 + $0xf1] sm:$0xff] %vm422, %v3825
          %3858 = vst.msk [vmem:[%s1450 + $0xf9] sm:$0xff] %vm422, %v3826
          %3859 = vst.msk [vmem:[%s1450 + $0x109] sm:$0xff] %vm422, %v3827
          %3860 = vst.msk [vmem:[%s1450 + $0x111] sm:$0xff] %vm422, %v3828
          %3861 = vst.msk [vmem:[%s1450 + $0x121] sm:$0xff] %vm422, %v3829
          %3862 = vst.msk [vmem:[%s1450 + $0x129] sm:$0xff] %vm422, %v3830
          %3863 = vst.msk [vmem:[%s1450 + $0x139] sm:$0xff] %vm422, %v3831
          %3864 = vst.msk [vmem:[%s1450 + $0x141] sm:$0xff] %vm422, %v3832
          %3865 = vst.msk [vmem:[%s1450 + $0x151] sm:$0xff] %vm422, %v3833
          %3866 = vst.msk [vmem:[%s1450 + $0x159] sm:$0xff] %vm422, %v3834
          %3867 = vst.msk [vmem:[%s1450 + $0x169] sm:$0xff] %vm422, %v3835
          %3868 = vst.msk [vmem:[%s1450 + $0x171] sm:$0xff] %vm422, %v3836
        $region40: #{tpu_custom_call.1} parent=31 // pred_fallthru
          _
        %p3869 = scmp.eq.s32.totalorder %s22, 4
        // Predicated region
        $region41: #{tpu_custom_call.1} parent=31 // pred_check
          %p3870 = pneg %p3869
        $region42: #{tpu_custom_call.1} parent=31 // pred_check_branch
          %3872 = sbr.rel (%p3870) target = $region44
        $region43: #{tpu_custom_call.1} parent=31 // pred_region
          %v3873 = vld [vmem:[%s206] sm:$0xff]
          %v3874 = vld [vmem:[%s206 + $0x8] sm:$0xff]
          %v3875 = vld [vmem:[%s206 + $0x10] sm:$0xff]
          %v3876 = vld [vmem:[%s206 + $0x18] sm:$0xff]
          %v3877 = vld [vmem:[%s206 + $0x20] sm:$0xff]
          %v3878 = vld [vmem:[%s206 + $0x28] sm:$0xff]
          %v3879 = vld [vmem:[%s206 + $0x30] sm:$0xff]
          %v3880 = vld [vmem:[%s206 + $0x38] sm:$0xff]
          %v3881 = vld [vmem:[%s206 + $0x40] sm:$0xff]
          %v3882 = vld [vmem:[%s206 + $0x48] sm:$0xff]
          %v3883 = vld [vmem:[%s206 + $0x50] sm:$0xff]
          %v3884 = vld [vmem:[%s206 + $0x58] sm:$0xff]
          %v3885 = vld [vmem:[%s206 + $0x60] sm:$0xff]
          %v3886 = vld [vmem:[%s206 + $0x68] sm:$0xff]
          %v3887 = vld [vmem:[%s206 + $0x70] sm:$0xff]
          %v3888 = vld [vmem:[%s206 + $0x78] sm:$0xff]
          %v3889 = vld [vmem:[%s206 + $0x80] sm:$0xff]
          %v3890 = vld [vmem:[%s206 + $0x88] sm:$0xff]
          %v3891 = vld [vmem:[%s206 + $0x90] sm:$0xff]
          %v3892 = vld [vmem:[%s206 + $0x98] sm:$0xff]
          %v3893 = vld [vmem:[%s206 + $0xa0] sm:$0xff]
          %v3894 = vld [vmem:[%s206 + $0xa8] sm:$0xff]
          %v3895 = vld [vmem:[%s206 + $0xb0] sm:$0xff]
          %v3896 = vld [vmem:[%s206 + $0xb8] sm:$0xff]
          %v3897 = vld [vmem:[%s206 + $0xc0] sm:$0xff]
          %v3898 = vld [vmem:[%s206 + $0xc8] sm:$0xff]
          %v3899 = vld [vmem:[%s206 + $0xd0] sm:$0xff]
          %v3900 = vld [vmem:[%s206 + $0xd8] sm:$0xff]
          %v3901 = vld [vmem:[%s206 + $0xe0] sm:$0xff]
          %v3902 = vld [vmem:[%s206 + $0xe8] sm:$0xff]
          %v3903 = vld [vmem:[%s206 + $0xf0] sm:$0xff]
          %v3904 = vld [vmem:[%s206 + $0xf8] sm:$0xff]
          %v3905 = vsub.f32 %v3873, %v3769
          %v3906 = vsub.f32 %v3874, %v3770
          %v3907 = vsub.f32 %v3875, %v3771
          %v3908 = vsub.f32 %v3876, %v3772
          %v3909 = vsub.f32 %v3877, %v3773
          %v3910 = vsub.f32 %v3878, %v3774
          %v3911 = vsub.f32 %v3879, %v3775
          %v3912 = vsub.f32 %v3880, %v3776
          %v3913 = vsub.f32 %v3881, %v3777
          %v3914 = vsub.f32 %v3882, %v3778
          %v3915 = vsub.f32 %v3883, %v3779
          %v3916 = vsub.f32 %v3884, %v3780
          %v3917 = vsub.f32 %v3885, %v3781
          %v3918 = vsub.f32 %v3886, %v3782
          %v3919 = vsub.f32 %v3887, %v3783
          %v3920 = vsub.f32 %v3888, %v3784
          %v3921 = vsub.f32 %v3889, %v3785
          %v3922 = vsub.f32 %v3890, %v3786
          %v3923 = vsub.f32 %v3891, %v3787
          %v3924 = vsub.f32 %v3892, %v3788
          %v3925 = vsub.f32 %v3893, %v3789
          %v3926 = vsub.f32 %v3894, %v3790
          %v3927 = vsub.f32 %v3895, %v3791
          %v3928 = vsub.f32 %v3896, %v3792
          %v3929 = vsub.f32 %v3897, %v3793
          %v3930 = vsub.f32 %v3898, %v3794
          %v3931 = vsub.f32 %v3899, %v3795
          %v3932 = vsub.f32 %v3900, %v3796
          %v3933 = vsub.f32 %v3901, %v3797
          %v3934 = vsub.f32 %v3902, %v3798
          %v3935 = vsub.f32 %v3903, %v3799
          %v3936 = vsub.f32 %v3904, %v3800
          %3937 = vst.msk [vmem:[%s201] sm:$0xff] %vm422, %v3905
          %3938 = vst.msk [vmem:[%s201 + $0x8] sm:$0xff] %vm422, %v3906
          %3939 = vst.msk [vmem:[%s201 + $0x10] sm:$0xff] %vm422, %v3907
          %3940 = vst.msk [vmem:[%s201 + $0x18] sm:$0xff] %vm422, %v3908
          %3941 = vst.msk [vmem:[%s201 + $0x20] sm:$0xff] %vm422, %v3909
          %3942 = vst.msk [vmem:[%s201 + $0x28] sm:$0xff] %vm422, %v3910
          %3943 = vst.msk [vmem:[%s201 + $0x30] sm:$0xff] %vm422, %v3911
          %3944 = vst.msk [vmem:[%s201 + $0x38] sm:$0xff] %vm422, %v3912
          %3945 = vst.msk [vmem:[%s201 + $0x40] sm:$0xff] %vm422, %v3913
          %3946 = vst.msk [vmem:[%s201 + $0x48] sm:$0xff] %vm422, %v3914
          %3947 = vst.msk [vmem:[%s201 + $0x50] sm:$0xff] %vm422, %v3915
          %3948 = vst.msk [vmem:[%s201 + $0x58] sm:$0xff] %vm422, %v3916
          %3949 = vst.msk [vmem:[%s201 + $0x60] sm:$0xff] %vm422, %v3917
          %3950 = vst.msk [vmem:[%s201 + $0x68] sm:$0xff] %vm422, %v3918
          %3951 = vst.msk [vmem:[%s201 + $0x70] sm:$0xff] %vm422, %v3919
          %3952 = vst.msk [vmem:[%s201 + $0x78] sm:$0xff] %vm422, %v3920
          %3953 = vst.msk [vmem:[%s201 + $0x80] sm:$0xff] %vm422, %v3921
          %3954 = vst.msk [vmem:[%s201 + $0x88] sm:$0xff] %vm422, %v3922
          %3955 = vst.msk [vmem:[%s201 + $0x90] sm:$0xff] %vm422, %v3923
          %3956 = vst.msk [vmem:[%s201 + $0x98] sm:$0xff] %vm422, %v3924
          %3957 = vst.msk [vmem:[%s201 + $0xa0] sm:$0xff] %vm422, %v3925
          %3958 = vst.msk [vmem:[%s201 + $0xa8] sm:$0xff] %vm422, %v3926
          %3959 = vst.msk [vmem:[%s201 + $0xb0] sm:$0xff] %vm422, %v3927
          %3960 = vst.msk [vmem:[%s201 + $0xb8] sm:$0xff] %vm422, %v3928
          %3961 = vst.msk [vmem:[%s201 + $0xc0] sm:$0xff] %vm422, %v3929
          %3962 = vst.msk [vmem:[%s201 + $0xc8] sm:$0xff] %vm422, %v3930
          %3963 = vst.msk [vmem:[%s201 + $0xd0] sm:$0xff] %vm422, %v3931
          %3964 = vst.msk [vmem:[%s201 + $0xd8] sm:$0xff] %vm422, %v3932
          %3965 = vst.msk [vmem:[%s201 + $0xe0] sm:$0xff] %vm422, %v3933
          %3966 = vst.msk [vmem:[%s201 + $0xe8] sm:$0xff] %vm422, %v3934
          %3967 = vst.msk [vmem:[%s201 + $0xf0] sm:$0xff] %vm422, %v3935
          %3968 = vst.msk [vmem:[%s201 + $0xf8] sm:$0xff] %vm422, %v3936
        $region44: #{tpu_custom_call.1} parent=31 // pred_fallthru
          _
        %s3969 = sand.u32 %s115, 1
        %s3970 = scalar_lea.sflag [#allocation4], %s3969
        %s3971 = sand.u32 %s115, 1
        %s3972 = smul.addr %s3971, 256
        %s3973 = scalar_lea.vmem [#allocation3], %s3972
        // Predicated region
        $region45: #{tpu_custom_call.1} parent=31 // pred_check
          %p3974 = pneg %p125
        $region46: #{tpu_custom_call.1} parent=31 // pred_check_branch
          %3976 = sbr.rel (%p3974) target = $region48
        $region47: #{tpu_custom_call.1} parent=31 // pred_region
          %s3978 = ssub.s32 4096, 4096
          %3979 = vsyncadd %s3970, %s3978
          %s3980 = smul.addr %s21, 32
          %s3981 = smul.addr %s3980, 128
          %s3982 = scalar_lea.hbm %s3, %s3981
          %s3983 = sshll.u32 %s3973, 4
          %s3984 = int_to_ptr.vmem [resolvable:$true] %s3983
          %3989 = dma.vmem_to_hbm [thread:$0]  %s3984, 4096, %s3982, %s3970, 128, 128, 8
        $region48: #{tpu_custom_call.1} parent=31 // pred_fallthru
          _
      $region32: #{tpu_custom_call.1} parent=5 // pred_fallthru
        _
      %p3990 = scmp.le.s32.totalorder 2, %s12
      // Predicated region
      $region49: #{tpu_custom_call.1} parent=5 // pred_check
        %p3991 = pneg %p3990
      $region50: #{tpu_custom_call.1} parent=5 // pred_check_branch
        %3993 = sbr.rel (%p3991) target = $region52
      $region51: #{tpu_custom_call.1} parent=5 // pred_region
        %s3994 = ssub.s32 %s12, 2
        // Predicated region
        $region53: #{tpu_custom_call.1} parent=51 // pred_check
          %p3995 = pneg %p131
        $region54: #{tpu_custom_call.1} parent=51 // pred_check_branch
          %3997 = sbr.rel (%p3995) target = $region56
        $region55: #{tpu_custom_call.1} parent=51 // pred_region
          %s3998 = sand.u32 %s116, 1
          %s3999 = scalar_lea.sflag [#allocation4], %s3998
          %s4000 = sand.u32 %s116, 1
          %s4001 = smul.addr %s4000, 256
          %s4002 = scalar_lea.vmem [#allocation3], %s4001
          %4003 = dma.done %s3999, 4096
        $region56: #{tpu_custom_call.1} parent=51 // pred_fallthru
          _
      $region52: #{tpu_custom_call.1} parent=5 // pred_fallthru
        _
    $region6: #{tpu_custom_call.1} parent=1 // loop_footer
      %s16 = sadd.s32 1, %s12
    $region7: #{tpu_custom_call.1} parent=1 // loop_footer_branch
      %11 = sbr.rel target = $region3
    $region8: #{tpu_custom_call.1} parent=1 // loop_exit
      _
    %4004 = vsyncpa [#allocation4], 1
    %s4005 = scalar_lea.sflag [#allocation4], 1
    %4006 = vsyncpa %s4005, 1

</llo_original>
